<compile_context>
chip_gen: v5e
topology: v5e:2x2
jax: 0.10.0
libtpu: 0.0.40
codegen_flags: <defaults>
</compile_context>

<pallas_src>
import functools

import jax
import jax.numpy as jnp
from jax.experimental import pallas as pl
from jax.experimental.pallas import tpu as pltpu


# ----------------------------------------------------------------------------
# Fused forward kernel
# ----------------------------------------------------------------------------
def seq_transformer_kernel(
    seq_ref,                        # (block_b*n_pad, patch_dim)  f32 (padded token slab)
    we_ref, be_ref,                 # (patch_dim, dim) bf16, (1, dim) f32
    ct_ref,                         # (1, dim)                     f32
    g1_ref, b1_ref,                 # (depth, 1, dim)              f32
    wqkv_ref,                       # (depth, dim, 3*dim) bf16  (scale folded into Q cols)
    wo_ref, bo_ref,                 # (depth, dim, dim) bf16, (depth, 1, dim) f32
    g2_ref, b2_ref,                 # (depth, 1, dim)              f32
    w1_ref, bb1_ref,                # (depth, dim, mlp) bf16, (depth, 1, mlp) f32
    w2_ref, bb2_ref,                # (depth, mlp, dim) bf16, (depth, 1, dim) f32
    out_ref,                        # (block_b, dim)               f32
    *, heads, depth, n1, n_pad,
):
    f32, bf16 = jnp.float32, jnp.bfloat16
    dim = we_ref.shape[1]
    dh = dim // heads
    rows = seq_ref.shape[0]
    block_b = rows // n_pad
    eps = 1e-5

    def layernorm(v, g, b):  # f32 in / f32 out (v5e has no bf16 VPU/EUP)
        mu = jnp.mean(v, axis=-1, keepdims=True)
        var = jnp.mean(jnp.square(v - mu), axis=-1, keepdims=True)
        return (v - mu) * jax.lax.rsqrt(var + eps) * g + b

    def mm(a_bf16, w_bf16):  # bf16 MXU operands, f32 accumulation
        return jnp.dot(a_bf16, w_bf16, preferred_element_type=f32)

    # ---- patch_to_embedding (padded rows just get the bias; masked later) --
    emb = mm(seq_ref[...].astype(bf16), we_ref[...]) + be_ref[...]   # (rows, dim)

    # ---- class token at row 0 of every n_pad-row example block -------------
    row = jax.lax.broadcasted_iota(jnp.int32, (1, n_pad, 1), 1)
    x = jnp.where(row == 0, ct_ref[...],
                  emb.reshape(block_b, n_pad, dim)).reshape(rows, dim)

    # key-validity mask: positions >= n1 inside an example block are padding
    col = jax.lax.broadcasted_iota(jnp.int32, (1, 1, n_pad), 2)
    key_valid = col < n1

    # ---- transformer layers (statically unrolled; depth is small) ----------
    for l in range(depth):
        # Residual(PreNorm(Attention)); Dropout = identity (eval mode)
        hb = layernorm(x, g1_ref[l], b1_ref[l]).astype(bf16)
        qkv = mm(hb, wqkv_ref[l]).astype(bf16)                 # (rows, 3*dim)
        qkv3 = qkv.reshape(block_b, n_pad, 3 * dim)            # tile-aligned split

        # stack every (head, example) attention problem on the leading axis
        q = jnp.concatenate(
            [qkv3[:, :, h * dh:(h + 1) * dh] for h in range(heads)], axis=0)
        k = jnp.concatenate(
            [qkv3[:, :, dim + h * dh:dim + (h + 1) * dh] for h in range(heads)],
            axis=0)
        v = jnp.concatenate(
            [qkv3[:, :, 2 * dim + h * dh:2 * dim + (h + 1) * dh]
             for h in range(heads)], axis=0)                   # (heads*block_b, n_pad, dh)

        # scores (scale already folded into the Q weight columns)
        s = jnp.einsum('xqd,xkd->xqk', q, k, preferred_element_type=f32)
        s = jnp.where(key_valid, s, -1e30)                     # mask padded keys
        s = s - jnp.max(s, axis=-1, keepdims=True)
        p = jnp.exp(s)
        p = p * pl.reciprocal(jnp.sum(p, axis=-1, keepdims=True), approx=True)
        o = jnp.einsum('xqk,xkd->xqd', p.astype(bf16), v,
                       preferred_element_type=f32).astype(bf16)  # (heads*block_b, n_pad, dh)

        # output projection accumulated per head (8-aligned Wo row slices)
        wo_l = wo_ref[l]
        att = None
        for h in range(heads):
            o_h = o[h * block_b:(h + 1) * block_b].reshape(rows, dh)
            c = mm(o_h, wo_l[h * dh:(h + 1) * dh, :])
            att = c if att is None else att + c
        x = x + att + bo_ref[l]

        # Residual(PreNorm(FeedForward)); Dropout = identity (eval mode)
        h2 = layernorm(x, g2_ref[l], b2_ref[l]).astype(bf16)
        f = jnp.maximum(mm(h2, w1_ref[l]) + bb1_ref[l], 0.0).astype(bf16)
        x = x + mm(f, w2_ref[l]) + bb2_ref[l]

    # ---- to_c_token = Identity; class-token row of each example (16-aligned)
    out_ref[...] = jnp.concatenate(
        [x[b * n_pad:b * n_pad + 1, :] for b in range(block_b)], axis=0)


# ----------------------------------------------------------------------------
# Wrapper
# ----------------------------------------------------------------------------
def seq_transformer_forward(forward_seq, params, heads):
    B, seq, patch_dim = forward_seq.shape
    dim = params["w_embed"].shape[1]
    depth = params["wqkv"].shape[0]
    mlp_dim = params["w1"].shape[2]
    n1 = seq + 1
    n_pad = ((n1 + 7) // 8) * 8           # 8-aligned per-example token block

    # Wrapper-side layout plumbing: tokens at rows 1..seq of an n_pad-row block
    # (row 0 reserved for the class token, rows n1..n_pad-1 are masked padding).
    seq_pad = jnp.pad(forward_seq, ((0, 0), (1, n_pad - n1), (0, 0)))

    # Batch blocking: up to 8 examples per grid step, larger batches go on a
    # "parallel" grid axis (megacore on v7x); B=2 -> a single grid step.
    block_b = B if B <= 8 else 8
    Bp = ((B + block_b - 1) // block_b) * block_b
    if Bp != B:
        seq_pad = jnp.pad(seq_pad, ((0, Bp - B), (0, 0), (0, 0)))
    seq2d = seq_pad.reshape(Bp * n_pad, patch_dim)
    grid = (Bp // block_b,)
    rows = block_b * n_pad

    in_specs = (
        [pl.BlockSpec((rows, patch_dim), lambda i: (i, 0))]
        + [pl.BlockSpec(memory_space=pltpu.MemorySpace.VMEM) for _ in range(14)]
    )
    out_specs = pl.BlockSpec((block_b, dim), lambda i: (i, 0))

    # Advisory cost estimate for the XLA scheduler.
    X = heads * block_b
    dh = dim // heads
    flops_layer = (2 * rows * dim * 3 * dim
                   + 2 * X * n_pad * n_pad * dh * 2
                   + 2 * rows * dim * dim
                   + 2 * rows * dim * mlp_dim * 2)
    flops = grid[0] * (2 * rows * patch_dim * dim + depth * flops_layer)
    transcendentals = grid[0] * depth * (X * n_pad * n_pad + 4 * rows)
    bytes_accessed = (seq2d.size * seq2d.dtype.itemsize + Bp * dim * 4
                      + sum(int(v.size) * v.dtype.itemsize for v in params.values()))
    cost = pl.CostEstimate(flops=int(flops),
                           transcendentals=int(transcendentals),
                           bytes_accessed=int(bytes_accessed))

    kernel = functools.partial(seq_transformer_kernel, heads=heads, depth=depth,
                               n1=n1, n_pad=n_pad)
    out = pl.pallas_call(
        kernel,
        grid=grid,
        in_specs=in_specs,
        out_specs=out_specs,
        out_shape=jax.ShapeDtypeStruct((Bp, dim), jnp.float32),
        compiler_params=pltpu.CompilerParams(
            dimension_semantics=("parallel",)),
        cost_estimate=cost,
    )(seq2d,
      params["w_embed"], params["b_embed"], params["c_token"],
      params["g1"], params["b1"],
      params["wqkv"], params["wo"], params["bo"],
      params["g2"], params["b2"],
      params["w1"], params["bb1"], params["w2"], params["bb2"])
    return out[:B]


# ----------------------------------------------------------------------------
# Deterministic parameter construction
# ----------------------------------------------------------------------------
def make_params(key, *, patch_dim, dim, depth, heads, mlp_dim):
    del heads  # head split is implicit in the column ordering of wqkv
    scale = dim ** (-0.5)   # reference Attention uses dim**-0.5 (not per-head)
    ks = jax.random.split(key, 2 + depth)

    def init(k, shape):
        return 0.02 * jax.random.normal(k, shape, jnp.float32)

    wqkv, wo, w1, w2 = [], [], [], []
    for l in range(depth):
        k = ks[2 + l]
        wq = init(jax.random.fold_in(k, 0), (dim, dim)) * scale  # fold attn scale
        wk = init(jax.random.fold_in(k, 1), (dim, dim))
        wv = init(jax.random.fold_in(k, 2), (dim, dim))
        # column layout: [q | k | v]; within each, head h owns cols [h*dh,(h+1)*dh)
        wqkv.append(jnp.concatenate([wq, wk, wv], axis=1).astype(jnp.bfloat16))
        wo.append(init(jax.random.fold_in(k, 3), (dim, dim)).astype(jnp.bfloat16))
        w1.append(init(jax.random.fold_in(k, 4), (dim, mlp_dim)).astype(jnp.bfloat16))
        w2.append(init(jax.random.fold_in(k, 5), (mlp_dim, dim)).astype(jnp.bfloat16))

    return {
        "w_embed": init(jax.random.fold_in(ks[0], 0), (patch_dim, dim)).astype(jnp.bfloat16),
        "b_embed": jnp.zeros((1, dim), jnp.float32),
        "c_token": init(ks[1], (1, dim)),
        "g1": jnp.ones((depth, 1, dim), jnp.float32),
        "b1": jnp.zeros((depth, 1, dim), jnp.float32),
        "wqkv": jnp.stack(wqkv),
        "wo": jnp.stack(wo),
        "bo": jnp.zeros((depth, 1, dim), jnp.float32),
        "g2": jnp.ones((depth, 1, dim), jnp.float32),
        "b2": jnp.zeros((depth, 1, dim), jnp.float32),
        "w1": jnp.stack(w1),
        "bb1": jnp.zeros((depth, 1, mlp_dim), jnp.float32),
        "w2": jnp.stack(w2),
        "bb2": jnp.zeros((depth, 1, dim), jnp.float32),
    }


# ----------------------------------------------------------------------------
if __name__ == "__main__":
    # Seq_Transformer(patch_size=8, dim=32, depth=2, heads=4, mlp_dim=64,
    # channels=4): forward_seq is (batch, seq, channels*patch_size)
    B, SEQ = 2, 8
    CHANNELS, PATCH_SIZE = 4, 8
    DIM, DEPTH, HEADS, MLP_DIM = 32, 2, 4, 64
    PATCH_DIM = CHANNELS * PATCH_SIZE

    key = jax.random.PRNGKey(0)
    k_in, k_par = jax.random.split(key)
    forward_seq = jax.random.normal(k_in, (B, SEQ, PATCH_DIM), jnp.float32)
    params = make_params(
        k_par, patch_dim=PATCH_DIM, dim=DIM, depth=DEPTH, heads=HEADS,
        mlp_dim=MLP_DIM)

    # TODO(synk): nn.Dropout(p=0.1) is stochastic in train mode; implemented as
    # identity here (eval-mode semantics).
    fwd = jax.jit(functools.partial(seq_transformer_forward, heads=HEADS))
    c_t = jax.block_until_ready(fwd(forward_seq, params))
    assert c_t.shape == (B, DIM) and c_t.dtype == jnp.float32
    assert bool(jnp.all(jnp.isfinite(c_t)))
    print("KERNEL_OK")
</pallas_src>

<mosaic_0001>
module attributes {stable_mosaic.version = 11 : i64} {
  func.func @seq_transformer_kernel(%arg0: i32, %arg1: memref<32x32xf32, #tpu.memory_space<vmem>>, %arg2: memref<32x32xbf16, #tpu.memory_space<vmem>>, %arg3: memref<1x32xf32, #tpu.memory_space<vmem>>, %arg4: memref<1x32xf32, #tpu.memory_space<vmem>>, %arg5: memref<2x1x32xf32, #tpu.memory_space<vmem>>, %arg6: memref<2x1x32xf32, #tpu.memory_space<vmem>>, %arg7: memref<2x32x96xbf16, #tpu.memory_space<vmem>>, %arg8: memref<2x32x32xbf16, #tpu.memory_space<vmem>>, %arg9: memref<2x1x32xf32, #tpu.memory_space<vmem>>, %arg10: memref<2x1x32xf32, #tpu.memory_space<vmem>>, %arg11: memref<2x1x32xf32, #tpu.memory_space<vmem>>, %arg12: memref<2x32x64xbf16, #tpu.memory_space<vmem>>, %arg13: memref<2x1x64xf32, #tpu.memory_space<vmem>>, %arg14: memref<2x64x32xbf16, #tpu.memory_space<vmem>>, %arg15: memref<2x1x32xf32, #tpu.memory_space<vmem>>, %arg16: memref<2x32xf32, #tpu.memory_space<vmem>>) attributes {dimension_semantics = [#tpu.dimension_semantics<parallel>], iteration_bounds = array<i64: 1>, scalar_prefetch = 0 : i64, scratch_operands = 0 : i64, tpu.core_type = #tpu.core_type<tc>, window_params = [{transform_indices = @transform_0, window_bounds = array<i64: 32, 32>}, {pipeline_mode = #tpu.pipeline_mode<synchronous>, transform_indices = @transform_1, window_bounds = array<i64: 32, 32>}, {pipeline_mode = #tpu.pipeline_mode<synchronous>, transform_indices = @transform_2, window_bounds = array<i64: 1, 32>}, {pipeline_mode = #tpu.pipeline_mode<synchronous>, transform_indices = @transform_3, window_bounds = array<i64: 1, 32>}, {pipeline_mode = #tpu.pipeline_mode<synchronous>, transform_indices = @transform_4, window_bounds = array<i64: 2, 1, 32>}, {pipeline_mode = #tpu.pipeline_mode<synchronous>, transform_indices = @transform_5, window_bounds = array<i64: 2, 1, 32>}, {pipeline_mode = #tpu.pipeline_mode<synchronous>, transform_indices = @transform_6, window_bounds = array<i64: 2, 32, 96>}, {pipeline_mode = #tpu.pipeline_mode<synchronous>, transform_indices = @transform_7, window_bounds = array<i64: 2, 32, 32>}, {pipeline_mode = #tpu.pipeline_mode<synchronous>, transform_indices = @transform_8, window_bounds = array<i64: 2, 1, 32>}, {pipeline_mode = #tpu.pipeline_mode<synchronous>, transform_indices = @transform_9, window_bounds = array<i64: 2, 1, 32>}, {pipeline_mode = #tpu.pipeline_mode<synchronous>, transform_indices = @transform_10, window_bounds = array<i64: 2, 1, 32>}, {pipeline_mode = #tpu.pipeline_mode<synchronous>, transform_indices = @transform_11, window_bounds = array<i64: 2, 32, 64>}, {pipeline_mode = #tpu.pipeline_mode<synchronous>, transform_indices = @transform_12, window_bounds = array<i64: 2, 1, 64>}, {pipeline_mode = #tpu.pipeline_mode<synchronous>, transform_indices = @transform_13, window_bounds = array<i64: 2, 64, 32>}, {pipeline_mode = #tpu.pipeline_mode<synchronous>, transform_indices = @transform_14, window_bounds = array<i64: 2, 1, 32>}, {transform_indices = @transform_15, window_bounds = array<i64: 2, 32>}]} {
    %c0 = arith.constant 0 : index
    %c0_0 = arith.constant 0 : index
    %0 = vector.load %arg1[%c0, %c0_0] : memref<32x32xf32, #tpu.memory_space<vmem>>, vector<32x32xf32>
    %1 = arith.truncf %0 : vector<32x32xf32> to vector<32x32xbf16>
    %c0_1 = arith.constant 0 : index
    %c0_2 = arith.constant 0 : index
    %2 = vector.load %arg2[%c0_1, %c0_2] : memref<32x32xbf16, #tpu.memory_space<vmem>>, vector<32x32xbf16>
    %cst = arith.constant dense<0.000000e+00> : vector<32x32xf32>
    %3 = tpu.matmul %1, %2, %cst {dimension_numbers = #tpu.dot_dimension_numbers<[1], [0], [0], [1], [0, 0, 1, 1], [], []>} : vector<32x32xbf16>, vector<32x32xbf16>, vector<32x32xf32> -> vector<32x32xf32>
    %c0_3 = arith.constant 0 : index
    %c0_4 = arith.constant 0 : index
    %4 = vector.load %arg3[%c0_3, %c0_4] : memref<1x32xf32, #tpu.memory_space<vmem>>, vector<1x32xf32>
    %5 = vector.broadcast %4 : vector<1x32xf32> to vector<32x32xf32>
    %6 = arith.addf %3, %5 : vector<32x32xf32>
    %7 = tpu.iota {dimensions = array<i32: 1>} : vector<1x16x1xi32>
    %c0_i32 = arith.constant 0 : i32
    %8 = vector.broadcast %c0_i32 : i32 to vector<1x16x1xi32>
    %9 = arith.cmpi eq, %7, %8 : vector<1x16x1xi32>
    %c0_5 = arith.constant 0 : index
    %c0_6 = arith.constant 0 : index
    %10 = vector.load %arg4[%c0_5, %c0_6] : memref<1x32xf32, #tpu.memory_space<vmem>>, vector<1x32xf32>
    %11 = vector.shape_cast %6 : vector<32x32xf32> to vector<2x16x32xf32>
    %12 = vector.shape_cast %9 : vector<1x16x1xi1> to vector<1x16x1xi1>
    %13 = vector.broadcast %12 : vector<1x16x1xi1> to vector<2x16x32xi1>
    %14 = vector.shape_cast %10 : vector<1x32xf32> to vector<1x1x32xf32>
    %15 = vector.broadcast %14 : vector<1x1x32xf32> to vector<2x16x32xf32>
    %16 = arith.select %13, %15, %11 : vector<2x16x32xi1>, vector<2x16x32xf32>
    %17 = vector.shape_cast %16 : vector<2x16x32xf32> to vector<32x32xf32>
    %18 = tpu.iota {dimensions = array<i32: 2>} : vector<1x1x16xi32>
    %c9_i32 = arith.constant 9 : i32
    %19 = vector.broadcast %c9_i32 : i32 to vector<1x1x16xi32>
    %20 = arith.cmpi slt, %18, %19 : vector<1x1x16xi32>
    %c0_7 = arith.constant 0 : index
    %c0_8 = arith.constant 0 : index
    %c0_9 = arith.constant 0 : index
    %21 = vector.load %arg5[%c0_7, %c0_8, %c0_9] : memref<2x1x32xf32, #tpu.memory_space<vmem>>, vector<1x1x32xf32>
    %22 = vector.shape_cast %21 : vector<1x1x32xf32> to vector<1x32xf32>
    %c0_10 = arith.constant 0 : index
    %c0_11 = arith.constant 0 : index
    %c0_12 = arith.constant 0 : index
    %23 = vector.load %arg6[%c0_10, %c0_11, %c0_12] : memref<2x1x32xf32, #tpu.memory_space<vmem>>, vector<1x1x32xf32>
    %24 = vector.shape_cast %23 : vector<1x1x32xf32> to vector<1x32xf32>
    %cst_13 = arith.constant dense<0.000000e+00> : vector<32xf32>
    %25 = vector.multi_reduction <add>, %17, %cst_13 [1] : vector<32x32xf32> to vector<32xf32>
    %26 = vector.shape_cast %25 : vector<32xf32> to vector<32x1xf32>
    %cst_14 = arith.constant 3.200000e+01 : f32
    %27 = vector.broadcast %cst_14 : f32 to vector<32x1xf32>
    %28 = arith.divf %26, %27 : vector<32x1xf32>
    %29 = vector.broadcast %28 : vector<32x1xf32> to vector<32x32xf32>
    %30 = arith.subf %17, %29 : vector<32x32xf32>
    %31 = arith.mulf %30, %30 : vector<32x32xf32>
    %cst_15 = arith.constant dense<0.000000e+00> : vector<32xf32>
    %32 = vector.multi_reduction <add>, %31, %cst_15 [1] : vector<32x32xf32> to vector<32xf32>
    %33 = vector.shape_cast %32 : vector<32xf32> to vector<32x1xf32>
    %cst_16 = arith.constant 3.200000e+01 : f32
    %34 = vector.broadcast %cst_16 : f32 to vector<32x1xf32>
    %35 = arith.divf %33, %34 : vector<32x1xf32>
    %36 = vector.broadcast %28 : vector<32x1xf32> to vector<32x32xf32>
    %37 = arith.subf %17, %36 : vector<32x32xf32>
    %cst_17 = arith.constant 9.99999974E-6 : f32
    %38 = vector.broadcast %cst_17 : f32 to vector<32x1xf32>
    %39 = arith.addf %35, %38 : vector<32x1xf32>
    %40 = math.rsqrt %39 : vector<32x1xf32>
    %41 = vector.broadcast %40 : vector<32x1xf32> to vector<32x32xf32>
    %42 = arith.mulf %37, %41 : vector<32x32xf32>
    %43 = vector.broadcast %22 : vector<1x32xf32> to vector<32x32xf32>
    %44 = arith.mulf %42, %43 : vector<32x32xf32>
    %45 = vector.broadcast %24 : vector<1x32xf32> to vector<32x32xf32>
    %46 = arith.addf %44, %45 : vector<32x32xf32>
    %47 = arith.truncf %46 : vector<32x32xf32> to vector<32x32xbf16>
    %c0_18 = arith.constant 0 : index
    %c0_19 = arith.constant 0 : index
    %c0_20 = arith.constant 0 : index
    %48 = vector.load %arg7[%c0_18, %c0_19, %c0_20] : memref<2x32x96xbf16, #tpu.memory_space<vmem>>, vector<1x32x96xbf16>
    %49 = vector.shape_cast %48 : vector<1x32x96xbf16> to vector<32x96xbf16>
    %cst_21 = arith.constant dense<0.000000e+00> : vector<32x96xf32>
    %50 = tpu.matmul %47, %49, %cst_21 {dimension_numbers = #tpu.dot_dimension_numbers<[1], [0], [0], [1], [0, 0, 1, 1], [], []>} : vector<32x32xbf16>, vector<32x96xbf16>, vector<32x96xf32> -> vector<32x96xf32>
    %51 = arith.truncf %50 : vector<32x96xf32> to vector<32x96xbf16>
    %52 = vector.shape_cast %51 : vector<32x96xbf16> to vector<2x16x96xbf16>
    %53 = vector.extract_strided_slice %52 {offsets = [0, 0, 0], sizes = [2, 16, 8], strides = [1, 1, 1]} : vector<2x16x96xbf16> to vector<2x16x8xbf16>
    %54 = vector.extract_strided_slice %52 {offsets = [0, 0, 8], sizes = [2, 16, 8], strides = [1, 1, 1]} : vector<2x16x96xbf16> to vector<2x16x8xbf16>
    %55 = vector.extract_strided_slice %52 {offsets = [0, 0, 16], sizes = [2, 16, 8], strides = [1, 1, 1]} : vector<2x16x96xbf16> to vector<2x16x8xbf16>
    %56 = vector.extract_strided_slice %52 {offsets = [0, 0, 24], sizes = [2, 16, 8], strides = [1, 1, 1]} : vector<2x16x96xbf16> to vector<2x16x8xbf16>
    %57 = tpu.concatenate %53, %54, %55, %56 in 0 : vector<2x16x8xbf16>, vector<2x16x8xbf16>, vector<2x16x8xbf16>, vector<2x16x8xbf16> -> vector<8x16x8xbf16>
    %58 = vector.extract_strided_slice %52 {offsets = [0, 0, 32], sizes = [2, 16, 8], strides = [1, 1, 1]} : vector<2x16x96xbf16> to vector<2x16x8xbf16>
    %59 = vector.extract_strided_slice %52 {offsets = [0, 0, 40], sizes = [2, 16, 8], strides = [1, 1, 1]} : vector<2x16x96xbf16> to vector<2x16x8xbf16>
    %60 = vector.extract_strided_slice %52 {offsets = [0, 0, 48], sizes = [2, 16, 8], strides = [1, 1, 1]} : vector<2x16x96xbf16> to vector<2x16x8xbf16>
    %61 = vector.extract_strided_slice %52 {offsets = [0, 0, 56], sizes = [2, 16, 8], strides = [1, 1, 1]} : vector<2x16x96xbf16> to vector<2x16x8xbf16>
    %62 = tpu.concatenate %58, %59, %60, %61 in 0 : vector<2x16x8xbf16>, vector<2x16x8xbf16>, vector<2x16x8xbf16>, vector<2x16x8xbf16> -> vector<8x16x8xbf16>
    %63 = vector.extract_strided_slice %52 {offsets = [0, 0, 64], sizes = [2, 16, 8], strides = [1, 1, 1]} : vector<2x16x96xbf16> to vector<2x16x8xbf16>
    %64 = vector.extract_strided_slice %52 {offsets = [0, 0, 72], sizes = [2, 16, 8], strides = [1, 1, 1]} : vector<2x16x96xbf16> to vector<2x16x8xbf16>
    %65 = vector.extract_strided_slice %52 {offsets = [0, 0, 80], sizes = [2, 16, 8], strides = [1, 1, 1]} : vector<2x16x96xbf16> to vector<2x16x8xbf16>
    %66 = vector.extract_strided_slice %52 {offsets = [0, 0, 88], sizes = [2, 16, 8], strides = [1, 1, 1]} : vector<2x16x96xbf16> to vector<2x16x8xbf16>
    %67 = tpu.concatenate %63, %64, %65, %66 in 0 : vector<2x16x8xbf16>, vector<2x16x8xbf16>, vector<2x16x8xbf16>, vector<2x16x8xbf16> -> vector<8x16x8xbf16>
    "tpu.trace_start"() <{level = 10 : i32, message = "xqd,xkd->xqk"}> : () -> ()
    %cst_22 = arith.constant dense<0.000000e+00> : vector<8x16x16xf32>
    %68 = tpu.matmul %57, %62, %cst_22 {dimension_numbers = #tpu.dot_dimension_numbers<[2], [2], [1], [1], [0, 0, 0, 1, 1, 1], [0], [0]>} : vector<8x16x8xbf16>, vector<8x16x8xbf16>, vector<8x16x16xf32> -> vector<8x16x16xf32>
    %cst_23 = arith.constant -1.000000e+30 : f32
    "tpu.trace_stop"() : () -> ()
    %69 = vector.shape_cast %20 : vector<1x1x16xi1> to vector<1x1x16xi1>
    %70 = vector.broadcast %69 : vector<1x1x16xi1> to vector<8x16x16xi1>
    %71 = vector.broadcast %cst_23 : f32 to vector<8x16x16xf32>
    %72 = arith.select %70, %68, %71 : vector<8x16x16xi1>, vector<8x16x16xf32>
    %cst_24 = arith.constant dense<0xFF800000> : vector<8x16xf32>
    %73 = vector.multi_reduction <maximumf>, %72, %cst_24 [2] : vector<8x16x16xf32> to vector<8x16xf32>
    %74 = vector.shape_cast %73 : vector<8x16xf32> to vector<8x16x1xf32>
    %75 = vector.broadcast %74 : vector<8x16x1xf32> to vector<8x16x16xf32>
    %76 = arith.subf %72, %75 : vector<8x16x16xf32>
    %77 = math.exp %76 : vector<8x16x16xf32>
    %cst_25 = arith.constant dense<0.000000e+00> : vector<8x16xf32>
    %78 = vector.multi_reduction <add>, %77, %cst_25 [2] : vector<8x16x16xf32> to vector<8x16xf32>
    %79 = vector.shape_cast %78 : vector<8x16xf32> to vector<8x16x1xf32>
    %80 = tpu.reciprocal %79 {approx = true} : vector<8x16x1xf32> -> vector<8x16x1xf32>
    %81 = vector.broadcast %80 : vector<8x16x1xf32> to vector<8x16x16xf32>
    %82 = arith.mulf %77, %81 : vector<8x16x16xf32>
    %83 = arith.truncf %82 : vector<8x16x16xf32> to vector<8x16x16xbf16>
    "tpu.trace_start"() <{level = 10 : i32, message = "xqk,xkd->xqd"}> : () -> ()
    %cst_26 = arith.constant dense<0.000000e+00> : vector<8x16x8xf32>
    %84 = tpu.matmul %83, %67, %cst_26 {dimension_numbers = #tpu.dot_dimension_numbers<[2], [1], [1], [2], [0, 0, 0, 1, 1, 2], [0], [0]>} : vector<8x16x16xbf16>, vector<8x16x8xbf16>, vector<8x16x8xf32> -> vector<8x16x8xf32>
    "tpu.trace_stop"() : () -> ()
    %85 = arith.truncf %84 : vector<8x16x8xf32> to vector<8x16x8xbf16>
    %c0_27 = arith.constant 0 : index
    %c0_28 = arith.constant 0 : index
    %c0_29 = arith.constant 0 : index
    %86 = vector.load %arg8[%c0_27, %c0_28, %c0_29] : memref<2x32x32xbf16, #tpu.memory_space<vmem>>, vector<1x32x32xbf16>
    %87 = vector.shape_cast %86 : vector<1x32x32xbf16> to vector<32x32xbf16>
    %88 = vector.extract_strided_slice %85 {offsets = [0, 0, 0], sizes = [2, 16, 8], strides = [1, 1, 1]} : vector<8x16x8xbf16> to vector<2x16x8xbf16>
    %89 = vector.shape_cast %88 : vector<2x16x8xbf16> to vector<32x8xbf16>
    %90 = vector.extract_strided_slice %87 {offsets = [0, 0], sizes = [8, 32], strides = [1, 1]} : vector<32x32xbf16> to vector<8x32xbf16>
    %cst_30 = arith.constant dense<0.000000e+00> : vector<32x32xf32>
    %91 = tpu.matmul %89, %90, %cst_30 {dimension_numbers = #tpu.dot_dimension_numbers<[1], [0], [0], [1], [0, 0, 1, 1], [], []>} : vector<32x8xbf16>, vector<8x32xbf16>, vector<32x32xf32> -> vector<32x32xf32>
    %92 = vector.extract_strided_slice %85 {offsets = [2, 0, 0], sizes = [2, 16, 8], strides = [1, 1, 1]} : vector<8x16x8xbf16> to vector<2x16x8xbf16>
    %93 = vector.shape_cast %92 : vector<2x16x8xbf16> to vector<32x8xbf16>
    %94 = vector.extract_strided_slice %87 {offsets = [8, 0], sizes = [8, 32], strides = [1, 1]} : vector<32x32xbf16> to vector<8x32xbf16>
    %cst_31 = arith.constant dense<0.000000e+00> : vector<32x32xf32>
    %95 = tpu.matmul %93, %94, %cst_31 {dimension_numbers = #tpu.dot_dimension_numbers<[1], [0], [0], [1], [0, 0, 1, 1], [], []>} : vector<32x8xbf16>, vector<8x32xbf16>, vector<32x32xf32> -> vector<32x32xf32>
    %96 = arith.addf %91, %95 : vector<32x32xf32>
    %97 = vector.extract_strided_slice %85 {offsets = [4, 0, 0], sizes = [2, 16, 8], strides = [1, 1, 1]} : vector<8x16x8xbf16> to vector<2x16x8xbf16>
    %98 = vector.shape_cast %97 : vector<2x16x8xbf16> to vector<32x8xbf16>
    %99 = vector.extract_strided_slice %87 {offsets = [16, 0], sizes = [8, 32], strides = [1, 1]} : vector<32x32xbf16> to vector<8x32xbf16>
    %cst_32 = arith.constant dense<0.000000e+00> : vector<32x32xf32>
    %100 = tpu.matmul %98, %99, %cst_32 {dimension_numbers = #tpu.dot_dimension_numbers<[1], [0], [0], [1], [0, 0, 1, 1], [], []>} : vector<32x8xbf16>, vector<8x32xbf16>, vector<32x32xf32> -> vector<32x32xf32>
    %101 = arith.addf %96, %100 : vector<32x32xf32>
    %102 = vector.extract_strided_slice %85 {offsets = [6, 0, 0], sizes = [2, 16, 8], strides = [1, 1, 1]} : vector<8x16x8xbf16> to vector<2x16x8xbf16>
    %103 = vector.shape_cast %102 : vector<2x16x8xbf16> to vector<32x8xbf16>
    %104 = vector.extract_strided_slice %87 {offsets = [24, 0], sizes = [8, 32], strides = [1, 1]} : vector<32x32xbf16> to vector<8x32xbf16>
    %cst_33 = arith.constant dense<0.000000e+00> : vector<32x32xf32>
    %105 = tpu.matmul %103, %104, %cst_33 {dimension_numbers = #tpu.dot_dimension_numbers<[1], [0], [0], [1], [0, 0, 1, 1], [], []>} : vector<32x8xbf16>, vector<8x32xbf16>, vector<32x32xf32> -> vector<32x32xf32>
    %106 = arith.addf %101, %105 : vector<32x32xf32>
    %107 = arith.addf %17, %106 : vector<32x32xf32>
    %c0_34 = arith.constant 0 : index
    %c0_35 = arith.constant 0 : index
    %c0_36 = arith.constant 0 : index
    %108 = vector.load %arg9[%c0_34, %c0_35, %c0_36] : memref<2x1x32xf32, #tpu.memory_space<vmem>>, vector<1x1x32xf32>
    %109 = vector.shape_cast %108 : vector<1x1x32xf32> to vector<1x32xf32>
    %110 = vector.broadcast %109 : vector<1x32xf32> to vector<32x32xf32>
    %111 = arith.addf %107, %110 : vector<32x32xf32>
    %c0_37 = arith.constant 0 : index
    %c0_38 = arith.constant 0 : index
    %c0_39 = arith.constant 0 : index
    %112 = vector.load %arg10[%c0_37, %c0_38, %c0_39] : memref<2x1x32xf32, #tpu.memory_space<vmem>>, vector<1x1x32xf32>
    %113 = vector.shape_cast %112 : vector<1x1x32xf32> to vector<1x32xf32>
    %c0_40 = arith.constant 0 : index
    %c0_41 = arith.constant 0 : index
    %c0_42 = arith.constant 0 : index
    %114 = vector.load %arg11[%c0_40, %c0_41, %c0_42] : memref<2x1x32xf32, #tpu.memory_space<vmem>>, vector<1x1x32xf32>
    %115 = vector.shape_cast %114 : vector<1x1x32xf32> to vector<1x32xf32>
    %cst_43 = arith.constant dense<0.000000e+00> : vector<32xf32>
    %116 = vector.multi_reduction <add>, %111, %cst_43 [1] : vector<32x32xf32> to vector<32xf32>
    %117 = vector.shape_cast %116 : vector<32xf32> to vector<32x1xf32>
    %cst_44 = arith.constant 3.200000e+01 : f32
    %118 = vector.broadcast %cst_44 : f32 to vector<32x1xf32>
    %119 = arith.divf %117, %118 : vector<32x1xf32>
    %120 = vector.broadcast %119 : vector<32x1xf32> to vector<32x32xf32>
    %121 = arith.subf %111, %120 : vector<32x32xf32>
    %122 = arith.mulf %121, %121 : vector<32x32xf32>
    %cst_45 = arith.constant dense<0.000000e+00> : vector<32xf32>
    %123 = vector.multi_reduction <add>, %122, %cst_45 [1] : vector<32x32xf32> to vector<32xf32>
    %124 = vector.shape_cast %123 : vector<32xf32> to vector<32x1xf32>
    %cst_46 = arith.constant 3.200000e+01 : f32
    %125 = vector.broadcast %cst_46 : f32 to vector<32x1xf32>
    %126 = arith.divf %124, %125 : vector<32x1xf32>
    %127 = vector.broadcast %119 : vector<32x1xf32> to vector<32x32xf32>
    %128 = arith.subf %111, %127 : vector<32x32xf32>
    %cst_47 = arith.constant 9.99999974E-6 : f32
    %129 = vector.broadcast %cst_47 : f32 to vector<32x1xf32>
    %130 = arith.addf %126, %129 : vector<32x1xf32>
    %131 = math.rsqrt %130 : vector<32x1xf32>
    %132 = vector.broadcast %131 : vector<32x1xf32> to vector<32x32xf32>
    %133 = arith.mulf %128, %132 : vector<32x32xf32>
    %134 = vector.broadcast %113 : vector<1x32xf32> to vector<32x32xf32>
    %135 = arith.mulf %133, %134 : vector<32x32xf32>
    %136 = vector.broadcast %115 : vector<1x32xf32> to vector<32x32xf32>
    %137 = arith.addf %135, %136 : vector<32x32xf32>
    %138 = arith.truncf %137 : vector<32x32xf32> to vector<32x32xbf16>
    %c0_48 = arith.constant 0 : index
    %c0_49 = arith.constant 0 : index
    %c0_50 = arith.constant 0 : index
    %139 = vector.load %arg12[%c0_48, %c0_49, %c0_50] : memref<2x32x64xbf16, #tpu.memory_space<vmem>>, vector<1x32x64xbf16>
    %140 = vector.shape_cast %139 : vector<1x32x64xbf16> to vector<32x64xbf16>
    %cst_51 = arith.constant dense<0.000000e+00> : vector<32x64xf32>
    %141 = tpu.matmul %138, %140, %cst_51 {dimension_numbers = #tpu.dot_dimension_numbers<[1], [0], [0], [1], [0, 0, 1, 1], [], []>} : vector<32x32xbf16>, vector<32x64xbf16>, vector<32x64xf32> -> vector<32x64xf32>
    %c0_52 = arith.constant 0 : index
    %c0_53 = arith.constant 0 : index
    %c0_54 = arith.constant 0 : index
    %142 = vector.load %arg13[%c0_52, %c0_53, %c0_54] : memref<2x1x64xf32, #tpu.memory_space<vmem>>, vector<1x1x64xf32>
    %143 = vector.shape_cast %142 : vector<1x1x64xf32> to vector<1x64xf32>
    %144 = vector.broadcast %143 : vector<1x64xf32> to vector<32x64xf32>
    %145 = arith.addf %141, %144 : vector<32x64xf32>
    %cst_55 = arith.constant 0.000000e+00 : f32
    %146 = vector.broadcast %cst_55 : f32 to vector<32x64xf32>
    %147 = arith.maximumf %145, %146 : vector<32x64xf32>
    %148 = arith.truncf %147 : vector<32x64xf32> to vector<32x64xbf16>
    %c0_56 = arith.constant 0 : index
    %c0_57 = arith.constant 0 : index
    %c0_58 = arith.constant 0 : index
    %149 = vector.load %arg14[%c0_56, %c0_57, %c0_58] : memref<2x64x32xbf16, #tpu.memory_space<vmem>>, vector<1x64x32xbf16>
    %150 = vector.shape_cast %149 : vector<1x64x32xbf16> to vector<64x32xbf16>
    %cst_59 = arith.constant dense<0.000000e+00> : vector<32x32xf32>
    %151 = tpu.matmul %148, %150, %cst_59 {dimension_numbers = #tpu.dot_dimension_numbers<[1], [0], [0], [1], [0, 0, 1, 1], [], []>} : vector<32x64xbf16>, vector<64x32xbf16>, vector<32x32xf32> -> vector<32x32xf32>
    %152 = arith.addf %111, %151 : vector<32x32xf32>
    %c0_60 = arith.constant 0 : index
    %c0_61 = arith.constant 0 : index
    %c0_62 = arith.constant 0 : index
    %153 = vector.load %arg15[%c0_60, %c0_61, %c0_62] : memref<2x1x32xf32, #tpu.memory_space<vmem>>, vector<1x1x32xf32>
    %154 = vector.shape_cast %153 : vector<1x1x32xf32> to vector<1x32xf32>
    %155 = vector.broadcast %154 : vector<1x32xf32> to vector<32x32xf32>
    %156 = arith.addf %152, %155 : vector<32x32xf32>
    %c1 = arith.constant 1 : index
    %c0_63 = arith.constant 0 : index
    %c0_64 = arith.constant 0 : index
    %157 = vector.load %arg5[%c1, %c0_63, %c0_64] : memref<2x1x32xf32, #tpu.memory_space<vmem>>, vector<1x1x32xf32>
    %158 = vector.shape_cast %157 : vector<1x1x32xf32> to vector<1x32xf32>
    %c1_65 = arith.constant 1 : index
    %c0_66 = arith.constant 0 : index
    %c0_67 = arith.constant 0 : index
    %159 = vector.load %arg6[%c1_65, %c0_66, %c0_67] : memref<2x1x32xf32, #tpu.memory_space<vmem>>, vector<1x1x32xf32>
    %160 = vector.shape_cast %159 : vector<1x1x32xf32> to vector<1x32xf32>
    %cst_68 = arith.constant dense<0.000000e+00> : vector<32xf32>
    %161 = vector.multi_reduction <add>, %156, %cst_68 [1] : vector<32x32xf32> to vector<32xf32>
    %162 = vector.shape_cast %161 : vector<32xf32> to vector<32x1xf32>
    %cst_69 = arith.constant 3.200000e+01 : f32
    %163 = vector.broadcast %cst_69 : f32 to vector<32x1xf32>
    %164 = arith.divf %162, %163 : vector<32x1xf32>
    %165 = vector.broadcast %164 : vector<32x1xf32> to vector<32x32xf32>
    %166 = arith.subf %156, %165 : vector<32x32xf32>
    %167 = arith.mulf %166, %166 : vector<32x32xf32>
    %cst_70 = arith.constant dense<0.000000e+00> : vector<32xf32>
    %168 = vector.multi_reduction <add>, %167, %cst_70 [1] : vector<32x32xf32> to vector<32xf32>
    %169 = vector.shape_cast %168 : vector<32xf32> to vector<32x1xf32>
    %cst_71 = arith.constant 3.200000e+01 : f32
    %170 = vector.broadcast %cst_71 : f32 to vector<32x1xf32>
    %171 = arith.divf %169, %170 : vector<32x1xf32>
    %172 = vector.broadcast %164 : vector<32x1xf32> to vector<32x32xf32>
    %173 = arith.subf %156, %172 : vector<32x32xf32>
    %cst_72 = arith.constant 9.99999974E-6 : f32
    %174 = vector.broadcast %cst_72 : f32 to vector<32x1xf32>
    %175 = arith.addf %171, %174 : vector<32x1xf32>
    %176 = math.rsqrt %175 : vector<32x1xf32>
    %177 = vector.broadcast %176 : vector<32x1xf32> to vector<32x32xf32>
    %178 = arith.mulf %173, %177 : vector<32x32xf32>
    %179 = vector.broadcast %158 : vector<1x32xf32> to vector<32x32xf32>
    %180 = arith.mulf %178, %179 : vector<32x32xf32>
    %181 = vector.broadcast %160 : vector<1x32xf32> to vector<32x32xf32>
    %182 = arith.addf %180, %181 : vector<32x32xf32>
    %183 = arith.truncf %182 : vector<32x32xf32> to vector<32x32xbf16>
    %c1_73 = arith.constant 1 : index
    %c0_74 = arith.constant 0 : index
    %c0_75 = arith.constant 0 : index
    %184 = vector.load %arg7[%c1_73, %c0_74, %c0_75] : memref<2x32x96xbf16, #tpu.memory_space<vmem>>, vector<1x32x96xbf16>
    %185 = vector.shape_cast %184 : vector<1x32x96xbf16> to vector<32x96xbf16>
    %cst_76 = arith.constant dense<0.000000e+00> : vector<32x96xf32>
    %186 = tpu.matmul %183, %185, %cst_76 {dimension_numbers = #tpu.dot_dimension_numbers<[1], [0], [0], [1], [0, 0, 1, 1], [], []>} : vector<32x32xbf16>, vector<32x96xbf16>, vector<32x96xf32> -> vector<32x96xf32>
    %187 = arith.truncf %186 : vector<32x96xf32> to vector<32x96xbf16>
    %188 = vector.shape_cast %187 : vector<32x96xbf16> to vector<2x16x96xbf16>
    %189 = vector.extract_strided_slice %188 {offsets = [0, 0, 0], sizes = [2, 16, 8], strides = [1, 1, 1]} : vector<2x16x96xbf16> to vector<2x16x8xbf16>
    %190 = vector.extract_strided_slice %188 {offsets = [0, 0, 8], sizes = [2, 16, 8], strides = [1, 1, 1]} : vector<2x16x96xbf16> to vector<2x16x8xbf16>
    %191 = vector.extract_strided_slice %188 {offsets = [0, 0, 16], sizes = [2, 16, 8], strides = [1, 1, 1]} : vector<2x16x96xbf16> to vector<2x16x8xbf16>
    %192 = vector.extract_strided_slice %188 {offsets = [0, 0, 24], sizes = [2, 16, 8], strides = [1, 1, 1]} : vector<2x16x96xbf16> to vector<2x16x8xbf16>
    %193 = tpu.concatenate %189, %190, %191, %192 in 0 : vector<2x16x8xbf16>, vector<2x16x8xbf16>, vector<2x16x8xbf16>, vector<2x16x8xbf16> -> vector<8x16x8xbf16>
    %194 = vector.extract_strided_slice %188 {offsets = [0, 0, 32], sizes = [2, 16, 8], strides = [1, 1, 1]} : vector<2x16x96xbf16> to vector<2x16x8xbf16>
    %195 = vector.extract_strided_slice %188 {offsets = [0, 0, 40], sizes = [2, 16, 8], strides = [1, 1, 1]} : vector<2x16x96xbf16> to vector<2x16x8xbf16>
    %196 = vector.extract_strided_slice %188 {offsets = [0, 0, 48], sizes = [2, 16, 8], strides = [1, 1, 1]} : vector<2x16x96xbf16> to vector<2x16x8xbf16>
    %197 = vector.extract_strided_slice %188 {offsets = [0, 0, 56], sizes = [2, 16, 8], strides = [1, 1, 1]} : vector<2x16x96xbf16> to vector<2x16x8xbf16>
    %198 = tpu.concatenate %194, %195, %196, %197 in 0 : vector<2x16x8xbf16>, vector<2x16x8xbf16>, vector<2x16x8xbf16>, vector<2x16x8xbf16> -> vector<8x16x8xbf16>
    %199 = vector.extract_strided_slice %188 {offsets = [0, 0, 64], sizes = [2, 16, 8], strides = [1, 1, 1]} : vector<2x16x96xbf16> to vector<2x16x8xbf16>
    %200 = vector.extract_strided_slice %188 {offsets = [0, 0, 72], sizes = [2, 16, 8], strides = [1, 1, 1]} : vector<2x16x96xbf16> to vector<2x16x8xbf16>
    %201 = vector.extract_strided_slice %188 {offsets = [0, 0, 80], sizes = [2, 16, 8], strides = [1, 1, 1]} : vector<2x16x96xbf16> to vector<2x16x8xbf16>
    %202 = vector.extract_strided_slice %188 {offsets = [0, 0, 88], sizes = [2, 16, 8], strides = [1, 1, 1]} : vector<2x16x96xbf16> to vector<2x16x8xbf16>
    %203 = tpu.concatenate %199, %200, %201, %202 in 0 : vector<2x16x8xbf16>, vector<2x16x8xbf16>, vector<2x16x8xbf16>, vector<2x16x8xbf16> -> vector<8x16x8xbf16>
    "tpu.trace_start"() <{level = 10 : i32, message = "xqd,xkd->xqk"}> : () -> ()
    %cst_77 = arith.constant dense<0.000000e+00> : vector<8x16x16xf32>
    %204 = tpu.matmul %193, %198, %cst_77 {dimension_numbers = #tpu.dot_dimension_numbers<[2], [2], [1], [1], [0, 0, 0, 1, 1, 1], [0], [0]>} : vector<8x16x8xbf16>, vector<8x16x8xbf16>, vector<8x16x16xf32> -> vector<8x16x16xf32>
    %cst_78 = arith.constant -1.000000e+30 : f32
    "tpu.trace_stop"() : () -> ()
    %205 = vector.shape_cast %20 : vector<1x1x16xi1> to vector<1x1x16xi1>
    %206 = vector.broadcast %205 : vector<1x1x16xi1> to vector<8x16x16xi1>
    %207 = vector.broadcast %cst_78 : f32 to vector<8x16x16xf32>
    %208 = arith.select %206, %204, %207 : vector<8x16x16xi1>, vector<8x16x16xf32>
    %cst_79 = arith.constant dense<0xFF800000> : vector<8x16xf32>
    %209 = vector.multi_reduction <maximumf>, %208, %cst_79 [2] : vector<8x16x16xf32> to vector<8x16xf32>
    %210 = vector.shape_cast %209 : vector<8x16xf32> to vector<8x16x1xf32>
    %211 = vector.broadcast %210 : vector<8x16x1xf32> to vector<8x16x16xf32>
    %212 = arith.subf %208, %211 : vector<8x16x16xf32>
    %213 = math.exp %212 : vector<8x16x16xf32>
    %cst_80 = arith.constant dense<0.000000e+00> : vector<8x16xf32>
    %214 = vector.multi_reduction <add>, %213, %cst_80 [2] : vector<8x16x16xf32> to vector<8x16xf32>
    %215 = vector.shape_cast %214 : vector<8x16xf32> to vector<8x16x1xf32>
    %216 = tpu.reciprocal %215 {approx = true} : vector<8x16x1xf32> -> vector<8x16x1xf32>
    %217 = vector.broadcast %216 : vector<8x16x1xf32> to vector<8x16x16xf32>
    %218 = arith.mulf %213, %217 : vector<8x16x16xf32>
    %219 = arith.truncf %218 : vector<8x16x16xf32> to vector<8x16x16xbf16>
    "tpu.trace_start"() <{level = 10 : i32, message = "xqk,xkd->xqd"}> : () -> ()
    %cst_81 = arith.constant dense<0.000000e+00> : vector<8x16x8xf32>
    %220 = tpu.matmul %219, %203, %cst_81 {dimension_numbers = #tpu.dot_dimension_numbers<[2], [1], [1], [2], [0, 0, 0, 1, 1, 2], [0], [0]>} : vector<8x16x16xbf16>, vector<8x16x8xbf16>, vector<8x16x8xf32> -> vector<8x16x8xf32>
    "tpu.trace_stop"() : () -> ()
    %221 = arith.truncf %220 : vector<8x16x8xf32> to vector<8x16x8xbf16>
    %c1_82 = arith.constant 1 : index
    %c0_83 = arith.constant 0 : index
    %c0_84 = arith.constant 0 : index
    %222 = vector.load %arg8[%c1_82, %c0_83, %c0_84] : memref<2x32x32xbf16, #tpu.memory_space<vmem>>, vector<1x32x32xbf16>
    %223 = vector.shape_cast %222 : vector<1x32x32xbf16> to vector<32x32xbf16>
    %224 = vector.extract_strided_slice %221 {offsets = [0, 0, 0], sizes = [2, 16, 8], strides = [1, 1, 1]} : vector<8x16x8xbf16> to vector<2x16x8xbf16>
    %225 = vector.shape_cast %224 : vector<2x16x8xbf16> to vector<32x8xbf16>
    %226 = vector.extract_strided_slice %223 {offsets = [0, 0], sizes = [8, 32], strides = [1, 1]} : vector<32x32xbf16> to vector<8x32xbf16>
    %cst_85 = arith.constant dense<0.000000e+00> : vector<32x32xf32>
    %227 = tpu.matmul %225, %226, %cst_85 {dimension_numbers = #tpu.dot_dimension_numbers<[1], [0], [0], [1], [0, 0, 1, 1], [], []>} : vector<32x8xbf16>, vector<8x32xbf16>, vector<32x32xf32> -> vector<32x32xf32>
    %228 = vector.extract_strided_slice %221 {offsets = [2, 0, 0], sizes = [2, 16, 8], strides = [1, 1, 1]} : vector<8x16x8xbf16> to vector<2x16x8xbf16>
    %229 = vector.shape_cast %228 : vector<2x16x8xbf16> to vector<32x8xbf16>
    %230 = vector.extract_strided_slice %223 {offsets = [8, 0], sizes = [8, 32], strides = [1, 1]} : vector<32x32xbf16> to vector<8x32xbf16>
    %cst_86 = arith.constant dense<0.000000e+00> : vector<32x32xf32>
    %231 = tpu.matmul %229, %230, %cst_86 {dimension_numbers = #tpu.dot_dimension_numbers<[1], [0], [0], [1], [0, 0, 1, 1], [], []>} : vector<32x8xbf16>, vector<8x32xbf16>, vector<32x32xf32> -> vector<32x32xf32>
    %232 = arith.addf %227, %231 : vector<32x32xf32>
    %233 = vector.extract_strided_slice %221 {offsets = [4, 0, 0], sizes = [2, 16, 8], strides = [1, 1, 1]} : vector<8x16x8xbf16> to vector<2x16x8xbf16>
    %234 = vector.shape_cast %233 : vector<2x16x8xbf16> to vector<32x8xbf16>
    %235 = vector.extract_strided_slice %223 {offsets = [16, 0], sizes = [8, 32], strides = [1, 1]} : vector<32x32xbf16> to vector<8x32xbf16>
    %cst_87 = arith.constant dense<0.000000e+00> : vector<32x32xf32>
    %236 = tpu.matmul %234, %235, %cst_87 {dimension_numbers = #tpu.dot_dimension_numbers<[1], [0], [0], [1], [0, 0, 1, 1], [], []>} : vector<32x8xbf16>, vector<8x32xbf16>, vector<32x32xf32> -> vector<32x32xf32>
    %237 = arith.addf %232, %236 : vector<32x32xf32>
    %238 = vector.extract_strided_slice %221 {offsets = [6, 0, 0], sizes = [2, 16, 8], strides = [1, 1, 1]} : vector<8x16x8xbf16> to vector<2x16x8xbf16>
    %239 = vector.shape_cast %238 : vector<2x16x8xbf16> to vector<32x8xbf16>
    %240 = vector.extract_strided_slice %223 {offsets = [24, 0], sizes = [8, 32], strides = [1, 1]} : vector<32x32xbf16> to vector<8x32xbf16>
    %cst_88 = arith.constant dense<0.000000e+00> : vector<32x32xf32>
    %241 = tpu.matmul %239, %240, %cst_88 {dimension_numbers = #tpu.dot_dimension_numbers<[1], [0], [0], [1], [0, 0, 1, 1], [], []>} : vector<32x8xbf16>, vector<8x32xbf16>, vector<32x32xf32> -> vector<32x32xf32>
    %242 = arith.addf %237, %241 : vector<32x32xf32>
    %243 = arith.addf %156, %242 : vector<32x32xf32>
    %c1_89 = arith.constant 1 : index
    %c0_90 = arith.constant 0 : index
    %c0_91 = arith.constant 0 : index
    %244 = vector.load %arg9[%c1_89, %c0_90, %c0_91] : memref<2x1x32xf32, #tpu.memory_space<vmem>>, vector<1x1x32xf32>
    %245 = vector.shape_cast %244 : vector<1x1x32xf32> to vector<1x32xf32>
    %246 = vector.broadcast %245 : vector<1x32xf32> to vector<32x32xf32>
    %247 = arith.addf %243, %246 : vector<32x32xf32>
    %c1_92 = arith.constant 1 : index
    %c0_93 = arith.constant 0 : index
    %c0_94 = arith.constant 0 : index
    %248 = vector.load %arg10[%c1_92, %c0_93, %c0_94] : memref<2x1x32xf32, #tpu.memory_space<vmem>>, vector<1x1x32xf32>
    %249 = vector.shape_cast %248 : vector<1x1x32xf32> to vector<1x32xf32>
    %c1_95 = arith.constant 1 : index
    %c0_96 = arith.constant 0 : index
    %c0_97 = arith.constant 0 : index
    %250 = vector.load %arg11[%c1_95, %c0_96, %c0_97] : memref<2x1x32xf32, #tpu.memory_space<vmem>>, vector<1x1x32xf32>
    %251 = vector.shape_cast %250 : vector<1x1x32xf32> to vector<1x32xf32>
    %cst_98 = arith.constant dense<0.000000e+00> : vector<32xf32>
    %252 = vector.multi_reduction <add>, %247, %cst_98 [1] : vector<32x32xf32> to vector<32xf32>
    %253 = vector.shape_cast %252 : vector<32xf32> to vector<32x1xf32>
    %cst_99 = arith.constant 3.200000e+01 : f32
    %254 = vector.broadcast %cst_99 : f32 to vector<32x1xf32>
    %255 = arith.divf %253, %254 : vector<32x1xf32>
    %256 = vector.broadcast %255 : vector<32x1xf32> to vector<32x32xf32>
    %257 = arith.subf %247, %256 : vector<32x32xf32>
    %258 = arith.mulf %257, %257 : vector<32x32xf32>
    %cst_100 = arith.constant dense<0.000000e+00> : vector<32xf32>
    %259 = vector.multi_reduction <add>, %258, %cst_100 [1] : vector<32x32xf32> to vector<32xf32>
    %260 = vector.shape_cast %259 : vector<32xf32> to vector<32x1xf32>
    %cst_101 = arith.constant 3.200000e+01 : f32
    %261 = vector.broadcast %cst_101 : f32 to vector<32x1xf32>
    %262 = arith.divf %260, %261 : vector<32x1xf32>
    %263 = vector.broadcast %255 : vector<32x1xf32> to vector<32x32xf32>
    %264 = arith.subf %247, %263 : vector<32x32xf32>
    %cst_102 = arith.constant 9.99999974E-6 : f32
    %265 = vector.broadcast %cst_102 : f32 to vector<32x1xf32>
    %266 = arith.addf %262, %265 : vector<32x1xf32>
    %267 = math.rsqrt %266 : vector<32x1xf32>
    %268 = vector.broadcast %267 : vector<32x1xf32> to vector<32x32xf32>
    %269 = arith.mulf %264, %268 : vector<32x32xf32>
    %270 = vector.broadcast %249 : vector<1x32xf32> to vector<32x32xf32>
    %271 = arith.mulf %269, %270 : vector<32x32xf32>
    %272 = vector.broadcast %251 : vector<1x32xf32> to vector<32x32xf32>
    %273 = arith.addf %271, %272 : vector<32x32xf32>
    %274 = arith.truncf %273 : vector<32x32xf32> to vector<32x32xbf16>
    %c1_103 = arith.constant 1 : index
    %c0_104 = arith.constant 0 : index
    %c0_105 = arith.constant 0 : index
    %275 = vector.load %arg12[%c1_103, %c0_104, %c0_105] : memref<2x32x64xbf16, #tpu.memory_space<vmem>>, vector<1x32x64xbf16>
    %276 = vector.shape_cast %275 : vector<1x32x64xbf16> to vector<32x64xbf16>
    %cst_106 = arith.constant dense<0.000000e+00> : vector<32x64xf32>
    %277 = tpu.matmul %274, %276, %cst_106 {dimension_numbers = #tpu.dot_dimension_numbers<[1], [0], [0], [1], [0, 0, 1, 1], [], []>} : vector<32x32xbf16>, vector<32x64xbf16>, vector<32x64xf32> -> vector<32x64xf32>
    %c1_107 = arith.constant 1 : index
    %c0_108 = arith.constant 0 : index
    %c0_109 = arith.constant 0 : index
    %278 = vector.load %arg13[%c1_107, %c0_108, %c0_109] : memref<2x1x64xf32, #tpu.memory_space<vmem>>, vector<1x1x64xf32>
    %279 = vector.shape_cast %278 : vector<1x1x64xf32> to vector<1x64xf32>
    %280 = vector.broadcast %279 : vector<1x64xf32> to vector<32x64xf32>
    %281 = arith.addf %277, %280 : vector<32x64xf32>
    %cst_110 = arith.constant 0.000000e+00 : f32
    %282 = vector.broadcast %cst_110 : f32 to vector<32x64xf32>
    %283 = arith.maximumf %281, %282 : vector<32x64xf32>
    %284 = arith.truncf %283 : vector<32x64xf32> to vector<32x64xbf16>
    %c1_111 = arith.constant 1 : index
    %c0_112 = arith.constant 0 : index
    %c0_113 = arith.constant 0 : index
    %285 = vector.load %arg14[%c1_111, %c0_112, %c0_113] : memref<2x64x32xbf16, #tpu.memory_space<vmem>>, vector<1x64x32xbf16>
    %286 = vector.shape_cast %285 : vector<1x64x32xbf16> to vector<64x32xbf16>
    %cst_114 = arith.constant dense<0.000000e+00> : vector<32x32xf32>
    %287 = tpu.matmul %284, %286, %cst_114 {dimension_numbers = #tpu.dot_dimension_numbers<[1], [0], [0], [1], [0, 0, 1, 1], [], []>} : vector<32x64xbf16>, vector<64x32xbf16>, vector<32x32xf32> -> vector<32x32xf32>
    %288 = arith.addf %247, %287 : vector<32x32xf32>
    %c1_115 = arith.constant 1 : index
    %c0_116 = arith.constant 0 : index
    %c0_117 = arith.constant 0 : index
    %289 = vector.load %arg15[%c1_115, %c0_116, %c0_117] : memref<2x1x32xf32, #tpu.memory_space<vmem>>, vector<1x1x32xf32>
    %290 = vector.shape_cast %289 : vector<1x1x32xf32> to vector<1x32xf32>
    %291 = vector.broadcast %290 : vector<1x32xf32> to vector<32x32xf32>
    %292 = arith.addf %288, %291 : vector<32x32xf32>
    %293 = vector.extract_strided_slice %292 {offsets = [0, 0], sizes = [1, 32], strides = [1, 1]} : vector<32x32xf32> to vector<1x32xf32>
    %294 = vector.extract_strided_slice %292 {offsets = [16, 0], sizes = [1, 32], strides = [1, 1]} : vector<32x32xf32> to vector<1x32xf32>
    %295 = tpu.concatenate %293, %294 in 0 : vector<1x32xf32>, vector<1x32xf32> -> vector<2x32xf32>
    %c0_118 = arith.constant 0 : index
    %c0_119 = arith.constant 0 : index
    %296 = vector.load %arg16[%c0_118, %c0_119] : memref<2x32xf32, #tpu.memory_space<vmem>>, vector<2x32xf32>
    tpu.vector_store %arg16[%c0_118, %c0_119], %295 {strides = array<i32>} : memref<2x32xf32, #tpu.memory_space<vmem>>, vector<2x32xf32>,
    return
  }
  func.func @transform_0(%arg0: i32) -> (i32, i32) {
    %c0_i32 = arith.constant 0 : i32
    %c0_i32_0 = arith.constant 0 : i32
    return %arg0, %c0_i32 : i32, i32
  }
  func.func @transform_1(%arg0: i32) -> (i32, i32) {
    %c0_i32 = arith.constant 0 : i32
    %c0_i32_0 = arith.constant 0 : i32
    %c0_i32_1 = arith.constant 0 : i32
    return %c0_i32, %c0_i32_0 : i32, i32
  }
  func.func @transform_2(%arg0: i32) -> (i32, i32) {
    %c0_i32 = arith.constant 0 : i32
    %c0_i32_0 = arith.constant 0 : i32
    %c0_i32_1 = arith.constant 0 : i32
    return %c0_i32, %c0_i32_0 : i32, i32
  }
  func.func @transform_3(%arg0: i32) -> (i32, i32) {
    %c0_i32 = arith.constant 0 : i32
    %c0_i32_0 = arith.constant 0 : i32
    %c0_i32_1 = arith.constant 0 : i32
    return %c0_i32, %c0_i32_0 : i32, i32
  }
  func.func @transform_4(%arg0: i32) -> (i32, i32, i32) {
    %c0_i32 = arith.constant 0 : i32
    %c0_i32_0 = arith.constant 0 : i32
    %c0_i32_1 = arith.constant 0 : i32
    %c0_i32_2 = arith.constant 0 : i32
    return %c0_i32, %c0_i32_0, %c0_i32_1 : i32, i32, i32
  }
  func.func @transform_5(%arg0: i32) -> (i32, i32, i32) {
    %c0_i32 = arith.constant 0 : i32
    %c0_i32_0 = arith.constant 0 : i32
    %c0_i32_1 = arith.constant 0 : i32
    %c0_i32_2 = arith.constant 0 : i32
    return %c0_i32, %c0_i32_0, %c0_i32_1 : i32, i32, i32
  }
  func.func @transform_6(%arg0: i32) -> (i32, i32, i32) {
    %c0_i32 = arith.constant 0 : i32
    %c0_i32_0 = arith.constant 0 : i32
    %c0_i32_1 = arith.constant 0 : i32
    %c0_i32_2 = arith.constant 0 : i32
    return %c0_i32, %c0_i32_0, %c0_i32_1 : i32, i32, i32
  }
  func.func @transform_7(%arg0: i32) -> (i32, i32, i32) {
    %c0_i32 = arith.constant 0 : i32
    %c0_i32_0 = arith.constant 0 : i32
    %c0_i32_1 = arith.constant 0 : i32
    %c0_i32_2 = arith.constant 0 : i32
    return %c0_i32, %c0_i32_0, %c0_i32_1 : i32, i32, i32
  }
  func.func @transform_8(%arg0: i32) -> (i32, i32, i32) {
    %c0_i32 = arith.constant 0 : i32
    %c0_i32_0 = arith.constant 0 : i32
    %c0_i32_1 = arith.constant 0 : i32
    %c0_i32_2 = arith.constant 0 : i32
    return %c0_i32, %c0_i32_0, %c0_i32_1 : i32, i32, i32
  }
  func.func @transform_9(%arg0: i32) -> (i32, i32, i32) {
    %c0_i32 = arith.constant 0 : i32
    %c0_i32_0 = arith.constant 0 : i32
    %c0_i32_1 = arith.constant 0 : i32
    %c0_i32_2 = arith.constant 0 : i32
    return %c0_i32, %c0_i32_0, %c0_i32_1 : i32, i32, i32
  }
  func.func @transform_10(%arg0: i32) -> (i32, i32, i32) {
    %c0_i32 = arith.constant 0 : i32
    %c0_i32_0 = arith.constant 0 : i32
    %c0_i32_1 = arith.constant 0 : i32
    %c0_i32_2 = arith.constant 0 : i32
    return %c0_i32, %c0_i32_0, %c0_i32_1 : i32, i32, i32
  }
  func.func @transform_11(%arg0: i32) -> (i32, i32, i32) {
    %c0_i32 = arith.constant 0 : i32
    %c0_i32_0 = arith.constant 0 : i32
    %c0_i32_1 = arith.constant 0 : i32
    %c0_i32_2 = arith.constant 0 : i32
    return %c0_i32, %c0_i32_0, %c0_i32_1 : i32, i32, i32
  }
  func.func @transform_12(%arg0: i32) -> (i32, i32, i32) {
    %c0_i32 = arith.constant 0 : i32
    %c0_i32_0 = arith.constant 0 : i32
    %c0_i32_1 = arith.constant 0 : i32
    %c0_i32_2 = arith.constant 0 : i32
    return %c0_i32, %c0_i32_0, %c0_i32_1 : i32, i32, i32
  }
  func.func @transform_13(%arg0: i32) -> (i32, i32, i32) {
    %c0_i32 = arith.constant 0 : i32
    %c0_i32_0 = arith.constant 0 : i32
    %c0_i32_1 = arith.constant 0 : i32
    %c0_i32_2 = arith.constant 0 : i32
    return %c0_i32, %c0_i32_0, %c0_i32_1 : i32, i32, i32
  }
  func.func @transform_14(%arg0: i32) -> (i32, i32, i32) {
    %c0_i32 = arith.constant 0 : i32
    %c0_i32_0 = arith.constant 0 : i32
    %c0_i32_1 = arith.constant 0 : i32
    %c0_i32_2 = arith.constant 0 : i32
    return %c0_i32, %c0_i32_0, %c0_i32_1 : i32, i32, i32
  }
  func.func @transform_15(%arg0: i32) -> (i32, i32) {
    %c0_i32 = arith.constant 0 : i32
    %c0_i32_0 = arith.constant 0 : i32
    return %arg0, %c0_i32 : i32, i32
  }
}

</mosaic_0001>

<llo_original>
// kernel: seq_transformer_forward.1
$region0: #{seq_transformer_forward.1}
  #allocation0 [shape = 'u32[]', space=smem, size = 0x4, offset = 0x4, fixed_abs, tag = 'smem constant byte address 0x4 - core index']
  #allocation1 [shape = 'u32[72,128]{1,0:T(1,128)}', space=vmem, size = 0x9000, scoped, tag = 'internal scratch']
  %s0 = inlined_call_operand.vmem [shape: f32[32,32], index: 0, kind: input, shape index: {}]
  %s1 = inlined_call_operand.vmem [shape: bf16[32,32], index: 1, kind: input, shape index: {}]
  %s2 = inlined_call_operand.hbm [shape: f32[1,32], index: 2, kind: input, shape index: {}]
  %s3 = inlined_call_operand.hbm [shape: f32[1,32], index: 3, kind: input, shape index: {}]
  %s4 = inlined_call_operand.vmem [shape: f32[2,1,32], index: 4, kind: input, shape index: {}]
  %s5 = inlined_call_operand.vmem [shape: f32[2,1,32], index: 5, kind: input, shape index: {}]
  %s6 = inlined_call_operand.vmem [shape: bf16[2,32,96], index: 6, kind: input, shape index: {}]
  %s7 = inlined_call_operand.vmem [shape: bf16[2,32,32], index: 7, kind: input, shape index: {}]
  %s8 = inlined_call_operand.vmem [shape: f32[2,1,32], index: 8, kind: input, shape index: {}]
  %s9 = inlined_call_operand.vmem [shape: f32[2,1,32], index: 9, kind: input, shape index: {}]
  %s10 = inlined_call_operand.vmem [shape: f32[2,1,32], index: 10, kind: input, shape index: {}]
  %s11 = inlined_call_operand.vmem [shape: bf16[2,32,64], index: 11, kind: input, shape index: {}]
  %s12 = inlined_call_operand.vmem [shape: f32[2,1,64], index: 12, kind: input, shape index: {}]
  %s13 = inlined_call_operand.vmem [shape: bf16[2,64,32], index: 13, kind: input, shape index: {}]
  %s14 = inlined_call_operand.hbm [shape: f32[2,1,32], index: 14, kind: input, shape index: {}]
  %s15 = inlined_call_operand.hbm [shape: f32[2,32], index: 15, kind: output, shape index: {}]
  %s16 = sld [smem:[#allocation0]]
  $region82: #{seq_transformer_forward.1} parent=0
    _
  %s18 = ssub.s32 1, %s16
  %s19 = scalar_select 0, %s18, %s16
  $region1: #{seq_transformer_forward.1} parent=0
    #allocation2 [shape = 'u8[512]{0}', space=vmem, size = 0x400, scoped, tag = 'input window, operand 2, single buffered']
    #allocation3 [shape = 's32[1]{0}', space=sflag, size = 0x4, scoped, tag = 'scoped memory for seq_transformer_forward.1']
    #allocation4 [shape = 's32[1]{0}', space=sflag, size = 0x4, scoped, tag = 'scoped memory for seq_transformer_forward.1']
    #allocation5 [shape = 'u8[512]{0}', space=vmem, size = 0x400, scoped, tag = 'input window, operand 3, single buffered']
    #allocation6 [shape = 's32[1]{0}', space=sflag, size = 0x4, scoped, tag = 'scoped memory for seq_transformer_forward.1']
    #allocation7 [shape = 'u8[1024]{0}', space=vmem, size = 0x400, scoped, tag = 'input window, operand 14, single buffered']
    #allocation8 [shape = 'u8[1024]{0}', space=vmem, size = 0x400, scoped, tag = 'output window, operand 0, single buffered']
    %20 = vsyncpa [#allocation3], 0
    %21 = vsyncpa [#allocation6], 0
    %22 = vsyncpa [#allocation4], 0
    // Predicated region
    $region2: #{seq_transformer_forward.1} parent=1 // pred_check
      _
    $region3: #{seq_transformer_forward.1} parent=1 // pred_check_branch
      %24 = sbr.rel (0) target = $region5
    $region4: #{seq_transformer_forward.1} parent=1 // pred_region
      _
    $region5: #{seq_transformer_forward.1} parent=1 // pred_fallthru
      _
    // Predicated region
    $region6: #{seq_transformer_forward.1} parent=1 // pred_check
      _
    $region7: #{seq_transformer_forward.1} parent=1 // pred_check_branch
      %26 = sbr.rel (0) target = $region9
    $region8: #{seq_transformer_forward.1} parent=1 // pred_region
      _
    $region9: #{seq_transformer_forward.1} parent=1 // pred_fallthru
      _
    // Predicated region
    $region10: #{seq_transformer_forward.1} parent=1 // pred_check
      _
    $region11: #{seq_transformer_forward.1} parent=1 // pred_check_branch
      %28 = sbr.rel (0) target = $region13
    $region12: #{seq_transformer_forward.1} parent=1 // pred_region
      %30 = vsyncadd [#allocation3], 0
      %s32 = sshll.u32 %s2, 4
      %s33 = int_to_ptr.hbm [resolvable:$true] %s32
      %s34 = sshll.u32 [#allocation2], 4
      %s35 = int_to_ptr.vmem [resolvable:$true] %s34
      %37 = dma.hbm_to_vmem [thread:$0]  %s33, 16, %s35, [#allocation3]
    $region13: #{seq_transformer_forward.1} parent=1 // pred_fallthru
      _
    // Predicated region
    $region14: #{seq_transformer_forward.1} parent=1 // pred_check
      _
    $region15: #{seq_transformer_forward.1} parent=1 // pred_check_branch
      %39 = sbr.rel (0) target = $region17
    $region16: #{seq_transformer_forward.1} parent=1 // pred_region
      %41 = vsyncadd [#allocation6], 0
      %s43 = sshll.u32 %s3, 4
      %s44 = int_to_ptr.hbm [resolvable:$true] %s43
      %s45 = sshll.u32 [#allocation5], 4
      %s46 = int_to_ptr.vmem [resolvable:$true] %s45
      %48 = dma.hbm_to_vmem [thread:$0]  %s44, 16, %s46, [#allocation6]
    $region17: #{seq_transformer_forward.1} parent=1 // pred_fallthru
      _
    // Predicated region
    $region18: #{seq_transformer_forward.1} parent=1 // pred_check
      _
    $region19: #{seq_transformer_forward.1} parent=1 // pred_check_branch
      %50 = sbr.rel (0) target = $region21
    $region20: #{seq_transformer_forward.1} parent=1 // pred_region
      _
    $region21: #{seq_transformer_forward.1} parent=1 // pred_fallthru
      _
    // Predicated region
    $region22: #{seq_transformer_forward.1} parent=1 // pred_check
      _
    $region23: #{seq_transformer_forward.1} parent=1 // pred_check_branch
      %52 = sbr.rel (0) target = $region25
    $region24: #{seq_transformer_forward.1} parent=1 // pred_region
      _
    $region25: #{seq_transformer_forward.1} parent=1 // pred_fallthru
      _
    // Predicated region
    $region26: #{seq_transformer_forward.1} parent=1 // pred_check
      _
    $region27: #{seq_transformer_forward.1} parent=1 // pred_check_branch
      %54 = sbr.rel (0) target = $region29
    $region28: #{seq_transformer_forward.1} parent=1 // pred_region
      _
    $region29: #{seq_transformer_forward.1} parent=1 // pred_fallthru
      _
    // Predicated region
    $region30: #{seq_transformer_forward.1} parent=1 // pred_check
      _
    $region31: #{seq_transformer_forward.1} parent=1 // pred_check_branch
      %56 = sbr.rel (0) target = $region33
    $region32: #{seq_transformer_forward.1} parent=1 // pred_region
      _
    $region33: #{seq_transformer_forward.1} parent=1 // pred_fallthru
      _
    // Predicated region
    $region34: #{seq_transformer_forward.1} parent=1 // pred_check
      _
    $region35: #{seq_transformer_forward.1} parent=1 // pred_check_branch
      %58 = sbr.rel (0) target = $region37
    $region36: #{seq_transformer_forward.1} parent=1 // pred_region
      _
    $region37: #{seq_transformer_forward.1} parent=1 // pred_fallthru
      _
    // Predicated region
    $region38: #{seq_transformer_forward.1} parent=1 // pred_check
      _
    $region39: #{seq_transformer_forward.1} parent=1 // pred_check_branch
      %60 = sbr.rel (0) target = $region41
    $region40: #{seq_transformer_forward.1} parent=1 // pred_region
      _
    $region41: #{seq_transformer_forward.1} parent=1 // pred_fallthru
      _
    // Predicated region
    $region42: #{seq_transformer_forward.1} parent=1 // pred_check
      _
    $region43: #{seq_transformer_forward.1} parent=1 // pred_check_branch
      %62 = sbr.rel (0) target = $region45
    $region44: #{seq_transformer_forward.1} parent=1 // pred_region
      _
    $region45: #{seq_transformer_forward.1} parent=1 // pred_fallthru
      _
    // Predicated region
    $region46: #{seq_transformer_forward.1} parent=1 // pred_check
      _
    $region47: #{seq_transformer_forward.1} parent=1 // pred_check_branch
      %64 = sbr.rel (0) target = $region49
    $region48: #{seq_transformer_forward.1} parent=1 // pred_region
      _
    $region49: #{seq_transformer_forward.1} parent=1 // pred_fallthru
      _
    // Predicated region
    $region50: #{seq_transformer_forward.1} parent=1 // pred_check
      _
    $region51: #{seq_transformer_forward.1} parent=1 // pred_check_branch
      %66 = sbr.rel (0) target = $region53
    $region52: #{seq_transformer_forward.1} parent=1 // pred_region
      _
    $region53: #{seq_transformer_forward.1} parent=1 // pred_fallthru
      _
    // Predicated region
    $region54: #{seq_transformer_forward.1} parent=1 // pred_check
      _
    $region55: #{seq_transformer_forward.1} parent=1 // pred_check_branch
      %68 = sbr.rel (0) target = $region57
    $region56: #{seq_transformer_forward.1} parent=1 // pred_region
      _
    $region57: #{seq_transformer_forward.1} parent=1 // pred_fallthru
      _
    // Predicated region
    $region58: #{seq_transformer_forward.1} parent=1 // pred_check
      _
    $region59: #{seq_transformer_forward.1} parent=1 // pred_check_branch
      %70 = sbr.rel (0) target = $region61
    $region60: #{seq_transformer_forward.1} parent=1 // pred_region
      %72 = vsyncadd [#allocation6], 0
      %s73 = sshll.u32 %s14, 4
      %s74 = int_to_ptr.hbm [resolvable:$true] %s73
      %s75 = sshll.u32 [#allocation7], 4
      %s76 = int_to_ptr.vmem [resolvable:$true] %s75
      %81 = dma.hbm_to_vmem [thread:$0]  %s74, 32, %s76, [#allocation6], 16, 16, 1
    $region61: #{seq_transformer_forward.1} parent=1 // pred_fallthru
      _
    // Predicated region
    $region62: #{seq_transformer_forward.1} parent=1 // pred_check
      _
    $region63: #{seq_transformer_forward.1} parent=1 // pred_check_branch
      %83 = sbr.rel (0) target = $region65
    $region64: #{seq_transformer_forward.1} parent=1 // pred_region
      %85 = dma.done [#allocation3], 16
    $region65: #{seq_transformer_forward.1} parent=1 // pred_fallthru
      _
    // Predicated region
    $region66: #{seq_transformer_forward.1} parent=1 // pred_check
      _
    $region67: #{seq_transformer_forward.1} parent=1 // pred_check_branch
      %87 = sbr.rel (0) target = $region69
    $region68: #{seq_transformer_forward.1} parent=1 // pred_region
      %89 = dma.done [#allocation6], 16
    $region69: #{seq_transformer_forward.1} parent=1 // pred_fallthru
      _
    // Predicated region
    $region70: #{seq_transformer_forward.1} parent=1 // pred_check
      _
    $region71: #{seq_transformer_forward.1} parent=1 // pred_check_branch
      %91 = sbr.rel (0) target = $region73
    $region72: #{seq_transformer_forward.1} parent=1 // pred_region
      %93 = dma.done [#allocation6], 32
    $region73: #{seq_transformer_forward.1} parent=1 // pred_fallthru
      _
    %v95 = vld [vmem:[%s0] sm:$0xff]
    %v96 = vld [vmem:[%s0 + $0x8] sm:$0xff]
    %v97 = vld [vmem:[%s0 + $0x10] sm:$0xff]
    %v98 = vld [vmem:[%s0 + $0x18] sm:$0xff]
    %v99 = vpack.c.bf16 %v96, %v95
    %v100 = vpack.c.bf16 %v98, %v97
    %v101 = vld [vmem:[%s1] sm:$0xf]
    %v102 = vld [vmem:[%s1 + $0x4] sm:$0xf]
    %v103 = vld [vmem:[%s1 + $0x8] sm:$0xf]
    %v104 = vld [vmem:[%s1 + $0xc] sm:$0xf]
    %v105 = vld [vmem:[#allocation2] sm:$0x1]
    %v107 = vperm.slane %v105, 0
    %v113 = vunpack.c.l.b16 %v101
    %v114 = vunpack.c.l.b16 %v102
    %v115 = vunpack.c.l.b16 %v103
    %v116 = vunpack.c.l.b16 %v104
    %v117 = vpack.c.b16 %v114, %v113
    %v118 = vpack.c.b16 %v116, %v115
    %vm121 = vcmask 261120
    %v123 = vsel %vm121, %v99, 0
    %v126 = vsel %vm121, %v100, 0
    %128 = vmatpush.bf16.msra.mxu0 0
    %129 = vmatpush.bf16.msra.mxu0 0
    %130 = vmatpush.bf16.msra.mxu0 0
    %131 = vmatpush.bf16.msra.mxu0 0
    %132 = vmatpush.bf16.msra.mxu0 0
    %133 = vmatpush.bf16.msra.mxu0 0
    %134 = vmatpush.bf16.msra.mxu0 %v118
    %135 = vmatpush.bf16.msra.mxu0 %v117
    %136 = vmatmul.bf16.gmra.mxu0 %v123
    %v137 = vpop.f32.mrf.mxu0
    %v138 = vadd.f32 %v107, %v137
    %v139 = vpop.f32.mrf.mxu0
    %v140 = vadd.f32 %v107, %v139
    %141 = vmatmul.bf16.gmra.mxu0 %v126
    %v142 = vpop.f32.mrf.mxu0
    %v143 = vadd.f32 %v107, %v142
    %v144 = vpop.f32.mrf.mxu0
    %v145 = vadd.f32 %v107, %v144
    %146 = vdwg.mxu0
    %v147 = vlaneseq
    %v148 = vshrl.u32 %v147, 7
    %v149 = vadd.s32 %v148, 8
    %vm150 = vcmp.eq.s32.totalorder %v148, 0
    %vm151 = vcmp.eq.s32.totalorder %v149, 0
    %v152 = vld [vmem:[#allocation5] sm:$0x1]
    %v153 = vsel %vm150, 1, 0
    %v154 = vsel %vm151, 1, 0
    %vm155 = vcmp.eq.s32.totalorder %v153, 1
    %vm156 = vcmp.eq.s32.totalorder %v154, 1
    %v158 = vperm.slane %v152, 0
    %v160 = vsel %vm155, %v158, %v138
    %v161 = vsel %vm156, %v158, %v140
    %v162 = vsel %vm155, %v158, %v143
    %v163 = vsel %vm156, %v158, %v145
    %v164 = vlaneseq
    %v165 = vand.u32 %v164, 127
    %vm166 = vcmp.lt.s32.totalorder %v165, 9
    %v167 = vld [vmem:[%s4] sm:$0x1]
    %v168 = vld [vmem:[%s5] sm:$0x1]
    %v169 = vsel %vm121, %v160, 0.0
    %170 = vadd.xlane.f32.xlu0 %v169
    %v171 = vpop.xlane.xlu0 %170
    %v172 = vsel %vm121, %v161, 0.0
    %173 = vadd.xlane.f32.xlu0 %v172
    %v174 = vpop.xlane.xlu0 %173
    %v175 = vsel %vm121, %v162, 0.0
    %176 = vadd.xlane.f32.xlu0 %v175
    %v177 = vpop.xlane.xlu0 %176
    %v178 = vsel %vm121, %v163, 0.0
    %179 = vadd.xlane.f32.xlu0 %v178
    %v180 = vpop.xlane.xlu0 %179
    %v181 = vrcp.pop 32.0
    %v182 = vmul.f32 32.0, %v181
    %v183 = vsub.f32 1.0, %v182
    %v184 = vmul.f32 %v181, %v183
    %v185 = vadd.f32 %v181, %v184
    %vm186 = vweird.f32 %v181
    %v187 = vsel %vm186, %v181, %v185
    %v188 = vmul.f32 %v171, %v187
    %v189 = vmul.f32 %v174, %v187
    %v190 = vmul.f32 %v177, %v187
    %v191 = vmul.f32 %v180, %v187
    %v192 = vsub.f32 %v160, %v188
    %v193 = vsub.f32 %v161, %v189
    %v194 = vsub.f32 %v162, %v190
    %v195 = vsub.f32 %v163, %v191
    %v196 = vmul.f32 %v192, %v192
    %v197 = vmul.f32 %v193, %v193
    %v198 = vmul.f32 %v194, %v194
    %v199 = vmul.f32 %v195, %v195
    %v200 = vsel %vm121, %v196, 0.0
    %201 = vadd.xlane.f32.xlu0 %v200
    %v202 = vpop.xlane.xlu0 %201
    %v203 = vsel %vm121, %v197, 0.0
    %204 = vadd.xlane.f32.xlu0 %v203
    %v205 = vpop.xlane.xlu0 %204
    %v206 = vsel %vm121, %v198, 0.0
    %207 = vadd.xlane.f32.xlu0 %v206
    %v208 = vpop.xlane.xlu0 %207
    %v209 = vsel %vm121, %v199, 0.0
    %210 = vadd.xlane.f32.xlu0 %v209
    %v211 = vpop.xlane.xlu0 %210
    %v212 = vmul.f32 %v202, %v187
    %v213 = vmul.f32 %v205, %v187
    %v214 = vmul.f32 %v208, %v187
    %v215 = vmul.f32 %v211, %v187
    %v216 = vadd.f32 %v212, 1e-05
    %v217 = vadd.f32 %v213, 1e-05
    %v218 = vadd.f32 %v214, 1e-05
    %v219 = vadd.f32 %v215, 1e-05
    %v220 = vrsqrt.pop %v216
    %v221 = vmul.f32 %v220, %v216
    %v222 = vmul.f32 %v221, %v220
    %v223 = vmul.f32 0.5, %v222
    %v224 = vsub.f32 1.5, %v223
    %v225 = vmul.f32 %v220, %v224
    %vm226 = vweird.f32 %v216
    %vm227 = vweird.f32 %v220
    %vm228 = vmor %vm226, %vm227
    %v229 = vsel %vm228, %v220, %v225
    %v230 = vrsqrt.pop %v217
    %v231 = vmul.f32 %v230, %v217
    %v232 = vmul.f32 %v231, %v230
    %v233 = vmul.f32 0.5, %v232
    %v234 = vsub.f32 1.5, %v233
    %v235 = vmul.f32 %v230, %v234
    %vm236 = vweird.f32 %v217
    %vm237 = vweird.f32 %v230
    %vm238 = vmor %vm236, %vm237
    %v239 = vsel %vm238, %v230, %v235
    %v240 = vrsqrt.pop %v218
    %v241 = vmul.f32 %v240, %v218
    %v242 = vmul.f32 %v241, %v240
    %v243 = vmul.f32 0.5, %v242
    %v244 = vsub.f32 1.5, %v243
    %v245 = vmul.f32 %v240, %v244
    %vm246 = vweird.f32 %v218
    %vm247 = vweird.f32 %v240
    %vm248 = vmor %vm246, %vm247
    %v249 = vsel %vm248, %v240, %v245
    %v250 = vrsqrt.pop %v219
    %v251 = vmul.f32 %v250, %v219
    %v252 = vmul.f32 %v251, %v250
    %v253 = vmul.f32 0.5, %v252
    %v254 = vsub.f32 1.5, %v253
    %v255 = vmul.f32 %v250, %v254
    %vm256 = vweird.f32 %v219
    %vm257 = vweird.f32 %v250
    %vm258 = vmor %vm256, %vm257
    %v259 = vsel %vm258, %v250, %v255
    %v260 = vmul.f32 %v192, %v229
    %v261 = vmul.f32 %v193, %v239
    %v262 = vmul.f32 %v194, %v249
    %v263 = vmul.f32 %v195, %v259
    %v265 = vperm.slane %v167, 0
    %v267 = vmul.f32 %v260, %v265
    %v268 = vmul.f32 %v261, %v265
    %v269 = vmul.f32 %v262, %v265
    %v270 = vmul.f32 %v263, %v265
    %v272 = vperm.slane %v168, 0
    %v274 = vadd.f32 %v267, %v272
    %v275 = vadd.f32 %v268, %v272
    %v276 = vadd.f32 %v269, %v272
    %v277 = vadd.f32 %v270, %v272
    %v278 = vpack.c.bf16 %v275, %v274
    %v279 = vpack.c.bf16 %v277, %v276
    %v280 = vld [vmem:[%s6] sm:$0xf]
    %v281 = vld [vmem:[%s6 + $0x4] sm:$0xf]
    %v282 = vld [vmem:[%s6 + $0x8] sm:$0xf]
    %v283 = vld [vmem:[%s6 + $0xc] sm:$0xf]
    %v288 = vunpack.c.l.b16 %v280
    %v289 = vunpack.c.l.b16 %v281
    %v290 = vunpack.c.l.b16 %v282
    %v291 = vunpack.c.l.b16 %v283
    %v292 = vpack.c.b16 %v289, %v288
    %v293 = vpack.c.b16 %v291, %v290
    %v297 = vsel %vm121, %v278, 0
    %v300 = vsel %vm121, %v279, 0
    %302 = vmatpush.bf16.msra.mxu0 0
    %303 = vmatpush.bf16.msra.mxu0 0
    %304 = vmatpush.bf16.msra.mxu0 0
    %305 = vmatpush.bf16.msra.mxu0 0
    %306 = vmatpush.bf16.msra.mxu0 0
    %307 = vmatpush.bf16.msra.mxu0 0
    %308 = vmatpush.bf16.msra.mxu0 %v293
    %309 = vmatpush.bf16.msra.mxu0 %v292
    %310 = vmatmul.bf16.gmra.mxu0 %v297
    %v311 = vpop.f32.mrf.mxu0
    %v312 = vadd.f32 0.0, %v311
    %v313 = vpop.f32.mrf.mxu0
    %v314 = vadd.f32 0.0, %v313
    %315 = vmatmul.bf16.gmra.mxu0 %v300
    %v316 = vpop.f32.mrf.mxu0
    %v317 = vadd.f32 0.0, %v316
    %v318 = vpop.f32.mrf.mxu0
    %v319 = vadd.f32 0.0, %v318
    %320 = vdwg.mxu0
    %v321 = vpack.c.bf16 %v312, %v312
    %v322 = vpack.c.bf16 %v314, %v314
    %v323 = vpack.c.bf16 %v317, %v317
    %v324 = vpack.c.bf16 %v319, %v319
    %329 = vrot.lane.b32.xlu0 %v321, 120
    %v330 = vpop.permute.xlu0 %329
    %331 = vrot.lane.b32.xlu0 %v322, 120
    %v332 = vpop.permute.xlu0 %331
    %333 = vrot.lane.b32.xlu0 %v323, 120
    %v334 = vpop.permute.xlu0 %333
    %335 = vrot.lane.b32.xlu0 %v324, 120
    %v336 = vpop.permute.xlu0 %335
    %337 = vrot.lane.b32.xlu0 %v321, 112
    %v338 = vpop.permute.xlu0 %337
    %339 = vrot.lane.b32.xlu0 %v322, 112
    %v340 = vpop.permute.xlu0 %339
    %341 = vrot.lane.b32.xlu0 %v323, 112
    %v342 = vpop.permute.xlu0 %341
    %343 = vrot.lane.b32.xlu0 %v324, 112
    %v344 = vpop.permute.xlu0 %343
    %345 = vrot.lane.b32.xlu0 %v321, 104
    %v346 = vpop.permute.xlu0 %345
    %347 = vrot.lane.b32.xlu0 %v322, 104
    %v348 = vpop.permute.xlu0 %347
    %349 = vrot.lane.b32.xlu0 %v323, 104
    %v350 = vpop.permute.xlu0 %349
    %351 = vrot.lane.b32.xlu0 %v324, 104
    %v352 = vpop.permute.xlu0 %351
    %v353 = vunpack.c.l.b16 %v321
    %v354 = vunpack.c.l.b16 %v322
    %v355 = vpack.c.b16 %v354, %v353
    %356 = vrot.lane.b32.xlu0 %v355, 96
    %v357 = vpop.permute.xlu0 %356
    %vm358 = vcmask 64512
    %v360 = vsel %vm358, %v355, 0
    %v363 = vsel %vm358, %v357, 0
    %365 = vmatpush.bf16.xpose.msra.mxu0 0
    %366 = vmatpush.bf16.xpose.msra.mxu0 0
    %367 = vmatpush.bf16.xpose.msra.mxu0 0
    %368 = vmatpush.bf16.xpose.msra.mxu0 0
    %369 = vmatpush.bf16.xpose.msra.mxu0 0
    %370 = vmatpush.bf16.xpose.msra.mxu0 0
    %371 = vmatpush.bf16.xpose.msra.mxu0 0
    %372 = vmatpush.bf16.xpose.msra.mxu0 %v363
    %373 = vmatmul.bf16.gmra.mxu0 %v360
    %v374 = vpop.f32.mrf.mxu0
    %v375 = vadd.f32 0.0, %v374
    %v376 = vpop.f32.mrf.mxu0
    %v377 = vadd.f32 0.0, %v376
    %378 = vdwg.mxu0
    %v379 = vunpack.c.l.b16 %v323
    %v380 = vunpack.c.l.b16 %v324
    %v381 = vpack.c.b16 %v380, %v379
    %382 = vrot.lane.b32.xlu0 %v381, 96
    %v383 = vpop.permute.xlu0 %382
    %v385 = vsel %vm358, %v381, 0
    %v388 = vsel %vm358, %v383, 0
    %390 = vmatpush.bf16.xpose.msra.mxu0 0
    %391 = vmatpush.bf16.xpose.msra.mxu0 0
    %392 = vmatpush.bf16.xpose.msra.mxu0 0
    %393 = vmatpush.bf16.xpose.msra.mxu0 0
    %394 = vmatpush.bf16.xpose.msra.mxu0 0
    %395 = vmatpush.bf16.xpose.msra.mxu0 0
    %396 = vmatpush.bf16.xpose.msra.mxu0 0
    %397 = vmatpush.bf16.xpose.msra.mxu0 %v388
    %398 = vmatmul.bf16.gmra.mxu0 %v385
    %v399 = vpop.f32.mrf.mxu0
    %v400 = vadd.f32 0.0, %v399
    %v401 = vpop.f32.mrf.mxu0
    %v402 = vadd.f32 0.0, %v401
    %403 = vdwg.mxu0
    %v404 = vunpack.c.l.b16 %v330
    %v405 = vunpack.c.l.b16 %v332
    %v406 = vpack.c.b16 %v405, %v404
    %407 = vrot.lane.b32.xlu0 %v406, 96
    %v408 = vpop.permute.xlu0 %407
    %v410 = vsel %vm358, %v406, 0
    %v413 = vsel %vm358, %v408, 0
    %415 = vmatpush.bf16.xpose.msra.mxu0 0
    %416 = vmatpush.bf16.xpose.msra.mxu0 0
    %417 = vmatpush.bf16.xpose.msra.mxu0 0
    %418 = vmatpush.bf16.xpose.msra.mxu0 0
    %419 = vmatpush.bf16.xpose.msra.mxu0 0
    %420 = vmatpush.bf16.xpose.msra.mxu0 0
    %421 = vmatpush.bf16.xpose.msra.mxu0 0
    %422 = vmatpush.bf16.xpose.msra.mxu0 %v413
    %423 = vmatmul.bf16.gmra.mxu0 %v410
    %v424 = vpop.f32.mrf.mxu0
    %v425 = vadd.f32 0.0, %v424
    %v426 = vpop.f32.mrf.mxu0
    %v427 = vadd.f32 0.0, %v426
    %428 = vdwg.mxu0
    %v429 = vunpack.c.l.b16 %v334
    %v430 = vunpack.c.l.b16 %v336
    %v431 = vpack.c.b16 %v430, %v429
    %432 = vrot.lane.b32.xlu0 %v431, 96
    %v433 = vpop.permute.xlu0 %432
    %v435 = vsel %vm358, %v431, 0
    %v438 = vsel %vm358, %v433, 0
    %440 = vmatpush.bf16.xpose.msra.mxu0 0
    %441 = vmatpush.bf16.xpose.msra.mxu0 0
    %442 = vmatpush.bf16.xpose.msra.mxu0 0
    %443 = vmatpush.bf16.xpose.msra.mxu0 0
    %444 = vmatpush.bf16.xpose.msra.mxu0 0
    %445 = vmatpush.bf16.xpose.msra.mxu0 0
    %446 = vmatpush.bf16.xpose.msra.mxu0 0
    %447 = vmatpush.bf16.xpose.msra.mxu0 %v438
    %448 = vmatmul.bf16.gmra.mxu0 %v435
    %v449 = vpop.f32.mrf.mxu0
    %v450 = vadd.f32 0.0, %v449
    %v451 = vpop.f32.mrf.mxu0
    %v452 = vadd.f32 0.0, %v451
    %453 = vdwg.mxu0
    %v454 = vunpack.c.l.b16 %v338
    %v455 = vunpack.c.l.b16 %v340
    %v456 = vpack.c.b16 %v455, %v454
    %457 = vrot.lane.b32.xlu0 %v456, 96
    %v458 = vpop.permute.xlu0 %457
    %v460 = vsel %vm358, %v456, 0
    %v463 = vsel %vm358, %v458, 0
    %465 = vmatpush.bf16.xpose.msra.mxu0 0
    %466 = vmatpush.bf16.xpose.msra.mxu0 0
    %467 = vmatpush.bf16.xpose.msra.mxu0 0
    %468 = vmatpush.bf16.xpose.msra.mxu0 0
    %469 = vmatpush.bf16.xpose.msra.mxu0 0
    %470 = vmatpush.bf16.xpose.msra.mxu0 0
    %471 = vmatpush.bf16.xpose.msra.mxu0 0
    %472 = vmatpush.bf16.xpose.msra.mxu0 %v463
    %473 = vmatmul.bf16.gmra.mxu0 %v460
    %v474 = vpop.f32.mrf.mxu0
    %v475 = vadd.f32 0.0, %v474
    %v476 = vpop.f32.mrf.mxu0
    %v477 = vadd.f32 0.0, %v476
    %478 = vdwg.mxu0
    %v479 = vunpack.c.l.b16 %v342
    %v480 = vunpack.c.l.b16 %v344
    %v481 = vpack.c.b16 %v480, %v479
    %482 = vrot.lane.b32.xlu0 %v481, 96
    %v483 = vpop.permute.xlu0 %482
    %v485 = vsel %vm358, %v481, 0
    %v488 = vsel %vm358, %v483, 0
    %490 = vmatpush.bf16.xpose.msra.mxu0 0
    %491 = vmatpush.bf16.xpose.msra.mxu0 0
    %492 = vmatpush.bf16.xpose.msra.mxu0 0
    %493 = vmatpush.bf16.xpose.msra.mxu0 0
    %494 = vmatpush.bf16.xpose.msra.mxu0 0
    %495 = vmatpush.bf16.xpose.msra.mxu0 0
    %496 = vmatpush.bf16.xpose.msra.mxu0 0
    %497 = vmatpush.bf16.xpose.msra.mxu0 %v488
    %498 = vmatmul.bf16.gmra.mxu0 %v485
    %v499 = vpop.f32.mrf.mxu0
    %v500 = vadd.f32 0.0, %v499
    %v501 = vpop.f32.mrf.mxu0
    %v502 = vadd.f32 0.0, %v501
    %503 = vdwg.mxu0
    %v504 = vunpack.c.l.b16 %v346
    %v505 = vunpack.c.l.b16 %v348
    %v506 = vpack.c.b16 %v505, %v504
    %507 = vrot.lane.b32.xlu0 %v506, 96
    %v508 = vpop.permute.xlu0 %507
    %v510 = vsel %vm358, %v506, 0
    %v513 = vsel %vm358, %v508, 0
    %515 = vmatpush.bf16.xpose.msra.mxu0 0
    %516 = vmatpush.bf16.xpose.msra.mxu0 0
    %517 = vmatpush.bf16.xpose.msra.mxu0 0
    %518 = vmatpush.bf16.xpose.msra.mxu0 0
    %519 = vmatpush.bf16.xpose.msra.mxu0 0
    %520 = vmatpush.bf16.xpose.msra.mxu0 0
    %521 = vmatpush.bf16.xpose.msra.mxu0 0
    %522 = vmatpush.bf16.xpose.msra.mxu0 %v513
    %523 = vmatmul.bf16.gmra.mxu0 %v510
    %v524 = vpop.f32.mrf.mxu0
    %v525 = vadd.f32 0.0, %v524
    %v526 = vpop.f32.mrf.mxu0
    %v527 = vadd.f32 0.0, %v526
    %528 = vdwg.mxu0
    %v529 = vunpack.c.l.b16 %v350
    %v530 = vunpack.c.l.b16 %v352
    %v531 = vpack.c.b16 %v530, %v529
    %532 = vrot.lane.b32.xlu0 %v531, 96
    %v533 = vpop.permute.xlu0 %532
    %v535 = vsel %vm358, %v531, 0
    %v538 = vsel %vm358, %v533, 0
    %540 = vmatpush.bf16.xpose.msra.mxu0 0
    %541 = vmatpush.bf16.xpose.msra.mxu0 0
    %542 = vmatpush.bf16.xpose.msra.mxu0 0
    %543 = vmatpush.bf16.xpose.msra.mxu0 0
    %544 = vmatpush.bf16.xpose.msra.mxu0 0
    %545 = vmatpush.bf16.xpose.msra.mxu0 0
    %546 = vmatpush.bf16.xpose.msra.mxu0 0
    %547 = vmatpush.bf16.xpose.msra.mxu0 %v538
    %548 = vmatmul.bf16.gmra.mxu0 %v535
    %v549 = vpop.f32.mrf.mxu0
    %v550 = vadd.f32 0.0, %v549
    %v551 = vpop.f32.mrf.mxu0
    %v552 = vadd.f32 0.0, %v551
    %553 = vdwg.mxu0
    %v554 = vsel %vm166, 1, 0
    %vm555 = vcmp.eq.s32.totalorder %v554, 1
    %v556 = vsel %vm555, %v375, -1e+30
    %v557 = vsel %vm555, %v377, -1e+30
    %v558 = vsel %vm555, %v400, -1e+30
    %v559 = vsel %vm555, %v402, -1e+30
    %v560 = vsel %vm555, %v425, -1e+30
    %v561 = vsel %vm555, %v427, -1e+30
    %v562 = vsel %vm555, %v450, -1e+30
    %v563 = vsel %vm555, %v452, -1e+30
    %v564 = vsel %vm555, %v475, -1e+30
    %v565 = vsel %vm555, %v477, -1e+30
    %v566 = vsel %vm555, %v500, -1e+30
    %v567 = vsel %vm555, %v502, -1e+30
    %v568 = vsel %vm555, %v525, -1e+30
    %v569 = vsel %vm555, %v527, -1e+30
    %v570 = vsel %vm555, %v550, -1e+30
    %v571 = vsel %vm555, %v552, -1e+30
    %vm572 = vcmask 130048
    %v573 = vsel %vm572, %v556, -inf
    %574 = vmax.xlane.f32.xlu0 %v573
    %v575 = vpop.xlane.xlu0 %574
    %v576 = vsel %vm572, %v557, -inf
    %577 = vmax.xlane.f32.xlu0 %v576
    %v578 = vpop.xlane.xlu0 %577
    %v579 = vsel %vm572, %v558, -inf
    %580 = vmax.xlane.f32.xlu0 %v579
    %v581 = vpop.xlane.xlu0 %580
    %v582 = vsel %vm572, %v559, -inf
    %583 = vmax.xlane.f32.xlu0 %v582
    %v584 = vpop.xlane.xlu0 %583
    %v585 = vsel %vm572, %v560, -inf
    %586 = vmax.xlane.f32.xlu0 %v585
    %v587 = vpop.xlane.xlu0 %586
    %v588 = vsel %vm572, %v561, -inf
    %589 = vmax.xlane.f32.xlu0 %v588
    %v590 = vpop.xlane.xlu0 %589
    %v591 = vsel %vm572, %v562, -inf
    %592 = vmax.xlane.f32.xlu0 %v591
    %v593 = vpop.xlane.xlu0 %592
    %v594 = vsel %vm572, %v563, -inf
    %595 = vmax.xlane.f32.xlu0 %v594
    %v596 = vpop.xlane.xlu0 %595
    %v597 = vsel %vm572, %v564, -inf
    %598 = vmax.xlane.f32.xlu0 %v597
    %v599 = vpop.xlane.xlu0 %598
    %v600 = vsel %vm572, %v565, -inf
    %601 = vmax.xlane.f32.xlu0 %v600
    %v602 = vpop.xlane.xlu0 %601
    %v603 = vsel %vm572, %v566, -inf
    %604 = vmax.xlane.f32.xlu0 %v603
    %v605 = vpop.xlane.xlu0 %604
    %v606 = vsel %vm572, %v567, -inf
    %607 = vmax.xlane.f32.xlu0 %v606
    %v608 = vpop.xlane.xlu0 %607
    %v609 = vsel %vm572, %v568, -inf
    %610 = vmax.xlane.f32.xlu0 %v609
    %v611 = vpop.xlane.xlu0 %610
    %v612 = vsel %vm572, %v569, -inf
    %613 = vmax.xlane.f32.xlu0 %v612
    %v614 = vpop.xlane.xlu0 %613
    %v615 = vsel %vm572, %v570, -inf
    %616 = vmax.xlane.f32.xlu0 %v615
    %v617 = vpop.xlane.xlu0 %616
    %v618 = vsel %vm572, %v571, -inf
    %619 = vmax.xlane.f32.xlu0 %v618
    %v620 = vpop.xlane.xlu0 %619
    %v621 = vsub.f32 %v556, %v575
    %v622 = vsub.f32 %v557, %v578
    %v623 = vsub.f32 %v558, %v581
    %v624 = vsub.f32 %v559, %v584
    %v625 = vsub.f32 %v560, %v587
    %v626 = vsub.f32 %v561, %v590
    %v627 = vsub.f32 %v562, %v593
    %v628 = vsub.f32 %v563, %v596
    %v629 = vsub.f32 %v564, %v599
    %v630 = vsub.f32 %v565, %v602
    %v631 = vsub.f32 %v566, %v605
    %v632 = vsub.f32 %v567, %v608
    %v633 = vsub.f32 %v568, %v611
    %v634 = vsub.f32 %v569, %v614
    %v635 = vsub.f32 %v570, %v617
    %v636 = vsub.f32 %v571, %v620
    %v637 = vmul.f32 %v621, 1.442695
    %v638 = vpow.pop %v637
    %v639 = vmul.f32 %v622, 1.442695
    %v640 = vpow.pop %v639
    %v641 = vmul.f32 %v623, 1.442695
    %v642 = vpow.pop %v641
    %v643 = vmul.f32 %v624, 1.442695
    %v644 = vpow.pop %v643
    %v645 = vmul.f32 %v625, 1.442695
    %v646 = vpow.pop %v645
    %v647 = vmul.f32 %v626, 1.442695
    %v648 = vpow.pop %v647
    %v649 = vmul.f32 %v627, 1.442695
    %v650 = vpow.pop %v649
    %v651 = vmul.f32 %v628, 1.442695
    %v652 = vpow.pop %v651
    %v653 = vmul.f32 %v629, 1.442695
    %v654 = vpow.pop %v653
    %v655 = vmul.f32 %v630, 1.442695
    %v656 = vpow.pop %v655
    %v657 = vmul.f32 %v631, 1.442695
    %v658 = vpow.pop %v657
    %v659 = vmul.f32 %v632, 1.442695
    %v660 = vpow.pop %v659
    %v661 = vmul.f32 %v633, 1.442695
    %v662 = vpow.pop %v661
    %v663 = vmul.f32 %v634, 1.442695
    %v664 = vpow.pop %v663
    %v665 = vmul.f32 %v635, 1.442695
    %v666 = vpow.pop %v665
    %v667 = vmul.f32 %v636, 1.442695
    %v668 = vpow.pop %v667
    %v669 = vsel %vm572, %v638, 0.0
    %670 = vadd.xlane.f32.xlu0 %v669
    %v671 = vpop.xlane.xlu0 %670
    %v672 = vsel %vm572, %v640, 0.0
    %673 = vadd.xlane.f32.xlu0 %v672
    %v674 = vpop.xlane.xlu0 %673
    %v675 = vsel %vm572, %v642, 0.0
    %676 = vadd.xlane.f32.xlu0 %v675
    %v677 = vpop.xlane.xlu0 %676
    %v678 = vsel %vm572, %v644, 0.0
    %679 = vadd.xlane.f32.xlu0 %v678
    %v680 = vpop.xlane.xlu0 %679
    %v681 = vsel %vm572, %v646, 0.0
    %682 = vadd.xlane.f32.xlu0 %v681
    %v683 = vpop.xlane.xlu0 %682
    %v684 = vsel %vm572, %v648, 0.0
    %685 = vadd.xlane.f32.xlu0 %v684
    %v686 = vpop.xlane.xlu0 %685
    %v687 = vsel %vm572, %v650, 0.0
    %688 = vadd.xlane.f32.xlu0 %v687
    %v689 = vpop.xlane.xlu0 %688
    %v690 = vsel %vm572, %v652, 0.0
    %691 = vadd.xlane.f32.xlu0 %v690
    %v692 = vpop.xlane.xlu0 %691
    %v693 = vsel %vm572, %v654, 0.0
    %694 = vadd.xlane.f32.xlu0 %v693
    %v695 = vpop.xlane.xlu0 %694
    %v696 = vsel %vm572, %v656, 0.0
    %697 = vadd.xlane.f32.xlu0 %v696
    %v698 = vpop.xlane.xlu0 %697
    %v699 = vsel %vm572, %v658, 0.0
    %700 = vadd.xlane.f32.xlu0 %v699
    %v701 = vpop.xlane.xlu0 %700
    %v702 = vsel %vm572, %v660, 0.0
    %703 = vadd.xlane.f32.xlu0 %v702
    %v704 = vpop.xlane.xlu0 %703
    %v705 = vsel %vm572, %v662, 0.0
    %706 = vadd.xlane.f32.xlu0 %v705
    %v707 = vpop.xlane.xlu0 %706
    %v708 = vsel %vm572, %v664, 0.0
    %709 = vadd.xlane.f32.xlu0 %v708
    %v710 = vpop.xlane.xlu0 %709
    %v711 = vsel %vm572, %v666, 0.0
    %712 = vadd.xlane.f32.xlu0 %v711
    %v713 = vpop.xlane.xlu0 %712
    %v714 = vsel %vm572, %v668, 0.0
    %715 = vadd.xlane.f32.xlu0 %v714
    %v716 = vpop.xlane.xlu0 %715
    %v717 = vrcp.pop %v671
    %v718 = vrcp.pop %v674
    %v719 = vrcp.pop %v677
    %v720 = vrcp.pop %v680
    %v721 = vrcp.pop %v683
    %v722 = vrcp.pop %v686
    %v723 = vrcp.pop %v689
    %v724 = vrcp.pop %v692
    %v725 = vrcp.pop %v695
    %v726 = vrcp.pop %v698
    %v727 = vrcp.pop %v701
    %v728 = vrcp.pop %v704
    %v729 = vrcp.pop %v707
    %v730 = vrcp.pop %v710
    %v731 = vrcp.pop %v713
    %v732 = vrcp.pop %v716
    %v733 = vmul.f32 %v638, %v717
    %v734 = vmul.f32 %v640, %v718
    %v735 = vmul.f32 %v642, %v719
    %v736 = vmul.f32 %v644, %v720
    %v737 = vmul.f32 %v646, %v721
    %v738 = vmul.f32 %v648, %v722
    %v739 = vmul.f32 %v650, %v723
    %v740 = vmul.f32 %v652, %v724
    %v741 = vmul.f32 %v654, %v725
    %v742 = vmul.f32 %v656, %v726
    %v743 = vmul.f32 %v658, %v727
    %v744 = vmul.f32 %v660, %v728
    %v745 = vmul.f32 %v662, %v729
    %v746 = vmul.f32 %v664, %v730
    %v747 = vmul.f32 %v666, %v731
    %v748 = vmul.f32 %v668, %v732
    %v749 = vpack.c.bf16 %v733, %v733
    %v750 = vpack.c.bf16 %v734, %v734
    %v751 = vpack.c.bf16 %v735, %v735
    %v752 = vpack.c.bf16 %v736, %v736
    %v753 = vpack.c.bf16 %v737, %v737
    %v754 = vpack.c.bf16 %v738, %v738
    %v755 = vpack.c.bf16 %v739, %v739
    %v756 = vpack.c.bf16 %v740, %v740
    %v757 = vpack.c.bf16 %v741, %v741
    %v758 = vpack.c.bf16 %v742, %v742
    %v759 = vpack.c.bf16 %v743, %v743
    %v760 = vpack.c.bf16 %v744, %v744
    %v761 = vpack.c.bf16 %v745, %v745
    %v762 = vpack.c.bf16 %v746, %v746
    %v763 = vpack.c.bf16 %v747, %v747
    %v764 = vpack.c.bf16 %v748, %v748
    %v767 = vunpack.c.l.b16 %v749
    %v768 = vunpack.c.l.b16 %v750
    %v769 = vpack.c.b16 %v768, %v767
    %770 = vrot.lane.b32.xlu0 %v355, 64
    %v771 = vpop.permute.xlu0 %770
    %v774 = vsel %vm572, %v769, 0
    %776 = vmatpush.bf16.msra.mxu0 0
    %777 = vmatpush.bf16.msra.mxu0 0
    %778 = vmatpush.bf16.msra.mxu0 0
    %779 = vmatpush.bf16.msra.mxu0 0
    %780 = vmatpush.bf16.msra.mxu0 0
    %781 = vmatpush.bf16.msra.mxu0 0
    %782 = vmatpush.bf16.msra.mxu0 0
    %783 = vmatpush.bf16.msra.mxu0 %v771
    %784 = vmatmul.bf16.gmra.mxu0 %v774
    %v785 = vpop.f32.mrf.mxu0
    %v786 = vadd.f32 0.0, %v785
    %v787 = vpop.f32.mrf.mxu0
    %v788 = vadd.f32 0.0, %v787
    %789 = vdwg.mxu0
    %v792 = vunpack.c.l.b16 %v751
    %v793 = vunpack.c.l.b16 %v752
    %v794 = vpack.c.b16 %v793, %v792
    %795 = vrot.lane.b32.xlu0 %v381, 64
    %v796 = vpop.permute.xlu0 %795
    %v799 = vsel %vm572, %v794, 0
    %801 = vmatpush.bf16.msra.mxu0 0
    %802 = vmatpush.bf16.msra.mxu0 0
    %803 = vmatpush.bf16.msra.mxu0 0
    %804 = vmatpush.bf16.msra.mxu0 0
    %805 = vmatpush.bf16.msra.mxu0 0
    %806 = vmatpush.bf16.msra.mxu0 0
    %807 = vmatpush.bf16.msra.mxu0 0
    %808 = vmatpush.bf16.msra.mxu0 %v796
    %809 = vmatmul.bf16.gmra.mxu0 %v799
    %v810 = vpop.f32.mrf.mxu0
    %v811 = vadd.f32 0.0, %v810
    %v812 = vpop.f32.mrf.mxu0
    %v813 = vadd.f32 0.0, %v812
    %814 = vdwg.mxu0
    %v817 = vunpack.c.l.b16 %v753
    %v818 = vunpack.c.l.b16 %v754
    %v819 = vpack.c.b16 %v818, %v817
    %820 = vrot.lane.b32.xlu0 %v406, 64
    %v821 = vpop.permute.xlu0 %820
    %v824 = vsel %vm572, %v819, 0
    %826 = vmatpush.bf16.msra.mxu0 0
    %827 = vmatpush.bf16.msra.mxu0 0
    %828 = vmatpush.bf16.msra.mxu0 0
    %829 = vmatpush.bf16.msra.mxu0 0
    %830 = vmatpush.bf16.msra.mxu0 0
    %831 = vmatpush.bf16.msra.mxu0 0
    %832 = vmatpush.bf16.msra.mxu0 0
    %833 = vmatpush.bf16.msra.mxu0 %v821
    %834 = vmatmul.bf16.gmra.mxu0 %v824
    %v835 = vpop.f32.mrf.mxu0
    %v836 = vadd.f32 0.0, %v835
    %v837 = vpop.f32.mrf.mxu0
    %v838 = vadd.f32 0.0, %v837
    %839 = vdwg.mxu0
    %v842 = vunpack.c.l.b16 %v755
    %v843 = vunpack.c.l.b16 %v756
    %v844 = vpack.c.b16 %v843, %v842
    %845 = vrot.lane.b32.xlu0 %v431, 64
    %v846 = vpop.permute.xlu0 %845
    %v849 = vsel %vm572, %v844, 0
    %851 = vmatpush.bf16.msra.mxu0 0
    %852 = vmatpush.bf16.msra.mxu0 0
    %853 = vmatpush.bf16.msra.mxu0 0
    %854 = vmatpush.bf16.msra.mxu0 0
    %855 = vmatpush.bf16.msra.mxu0 0
    %856 = vmatpush.bf16.msra.mxu0 0
    %857 = vmatpush.bf16.msra.mxu0 0
    %858 = vmatpush.bf16.msra.mxu0 %v846
    %859 = vmatmul.bf16.gmra.mxu0 %v849
    %v860 = vpop.f32.mrf.mxu0
    %v861 = vadd.f32 0.0, %v860
    %v862 = vpop.f32.mrf.mxu0
    %v863 = vadd.f32 0.0, %v862
    %864 = vdwg.mxu0
    %v867 = vunpack.c.l.b16 %v757
    %v868 = vunpack.c.l.b16 %v758
    %v869 = vpack.c.b16 %v868, %v867
    %870 = vrot.lane.b32.xlu0 %v456, 64
    %v871 = vpop.permute.xlu0 %870
    %v874 = vsel %vm572, %v869, 0
    %876 = vmatpush.bf16.msra.mxu0 0
    %877 = vmatpush.bf16.msra.mxu0 0
    %878 = vmatpush.bf16.msra.mxu0 0
    %879 = vmatpush.bf16.msra.mxu0 0
    %880 = vmatpush.bf16.msra.mxu0 0
    %881 = vmatpush.bf16.msra.mxu0 0
    %882 = vmatpush.bf16.msra.mxu0 0
    %883 = vmatpush.bf16.msra.mxu0 %v871
    %884 = vmatmul.bf16.gmra.mxu0 %v874
    %v885 = vpop.f32.mrf.mxu0
    %v886 = vadd.f32 0.0, %v885
    %v887 = vpop.f32.mrf.mxu0
    %v888 = vadd.f32 0.0, %v887
    %889 = vdwg.mxu0
    %v892 = vunpack.c.l.b16 %v759
    %v893 = vunpack.c.l.b16 %v760
    %v894 = vpack.c.b16 %v893, %v892
    %895 = vrot.lane.b32.xlu0 %v481, 64
    %v896 = vpop.permute.xlu0 %895
    %v899 = vsel %vm572, %v894, 0
    %901 = vmatpush.bf16.msra.mxu0 0
    %902 = vmatpush.bf16.msra.mxu0 0
    %903 = vmatpush.bf16.msra.mxu0 0
    %904 = vmatpush.bf16.msra.mxu0 0
    %905 = vmatpush.bf16.msra.mxu0 0
    %906 = vmatpush.bf16.msra.mxu0 0
    %907 = vmatpush.bf16.msra.mxu0 0
    %908 = vmatpush.bf16.msra.mxu0 %v896
    %909 = vmatmul.bf16.gmra.mxu0 %v899
    %v910 = vpop.f32.mrf.mxu0
    %v911 = vadd.f32 0.0, %v910
    %v912 = vpop.f32.mrf.mxu0
    %v913 = vadd.f32 0.0, %v912
    %914 = vdwg.mxu0
    %v917 = vunpack.c.l.b16 %v761
    %v918 = vunpack.c.l.b16 %v762
    %v919 = vpack.c.b16 %v918, %v917
    %920 = vrot.lane.b32.xlu0 %v506, 64
    %v921 = vpop.permute.xlu0 %920
    %v924 = vsel %vm572, %v919, 0
    %926 = vmatpush.bf16.msra.mxu0 0
    %927 = vmatpush.bf16.msra.mxu0 0
    %928 = vmatpush.bf16.msra.mxu0 0
    %929 = vmatpush.bf16.msra.mxu0 0
    %930 = vmatpush.bf16.msra.mxu0 0
    %931 = vmatpush.bf16.msra.mxu0 0
    %932 = vmatpush.bf16.msra.mxu0 0
    %933 = vmatpush.bf16.msra.mxu0 %v921
    %934 = vmatmul.bf16.gmra.mxu0 %v924
    %v935 = vpop.f32.mrf.mxu0
    %v936 = vadd.f32 0.0, %v935
    %v937 = vpop.f32.mrf.mxu0
    %v938 = vadd.f32 0.0, %v937
    %939 = vdwg.mxu0
    %v942 = vunpack.c.l.b16 %v763
    %v943 = vunpack.c.l.b16 %v764
    %v944 = vpack.c.b16 %v943, %v942
    %945 = vrot.lane.b32.xlu0 %v531, 64
    %v946 = vpop.permute.xlu0 %945
    %v949 = vsel %vm572, %v944, 0
    %951 = vmatpush.bf16.msra.mxu0 0
    %952 = vmatpush.bf16.msra.mxu0 0
    %953 = vmatpush.bf16.msra.mxu0 0
    %954 = vmatpush.bf16.msra.mxu0 0
    %955 = vmatpush.bf16.msra.mxu0 0
    %956 = vmatpush.bf16.msra.mxu0 0
    %957 = vmatpush.bf16.msra.mxu0 0
    %958 = vmatpush.bf16.msra.mxu0 %v946
    %959 = vmatmul.bf16.gmra.mxu0 %v949
    %v960 = vpop.f32.mrf.mxu0
    %v961 = vadd.f32 0.0, %v960
    %v962 = vpop.f32.mrf.mxu0
    %v963 = vadd.f32 0.0, %v962
    %964 = vdwg.mxu0
    %v965 = vpack.c.bf16 %v786, %v786
    %v966 = vpack.c.bf16 %v788, %v788
    %v967 = vpack.c.bf16 %v811, %v811
    %v968 = vpack.c.bf16 %v813, %v813
    %v969 = vpack.c.bf16 %v836, %v836
    %v970 = vpack.c.bf16 %v838, %v838
    %v971 = vpack.c.bf16 %v861, %v861
    %v972 = vpack.c.bf16 %v863, %v863
    %v973 = vpack.c.bf16 %v886, %v886
    %v974 = vpack.c.bf16 %v888, %v888
    %v975 = vpack.c.bf16 %v911, %v911
    %v976 = vpack.c.bf16 %v913, %v913
    %v977 = vpack.c.bf16 %v936, %v936
    %v978 = vpack.c.bf16 %v938, %v938
    %v979 = vpack.c.bf16 %v961, %v961
    %v980 = vpack.c.bf16 %v963, %v963
    %v981 = vld [vmem:[%s7] sm:$0xf]
    %v982 = vld [vmem:[%s7 + $0x4] sm:$0xf]
    %v983 = vld [vmem:[%s7 + $0x8] sm:$0xf]
    %v984 = vld [vmem:[%s7 + $0xc] sm:$0xf]
    %v989 = vunpack.c.l.b16 %v969
    %v990 = vunpack.c.l.b16 %v970
    %v991 = vunpack.c.l.b16 %v971
    %v992 = vunpack.c.l.b16 %v972
    %v993 = vpack.c.b16 %v990, %v989
    %v994 = vpack.c.b16 %v992, %v991
    %v996 = vsel %vm358, %v993, 0
    %v999 = vsel %vm358, %v994, 0
    %vm1001 = vcmask 1043456
    %v1003 = vsel %vm1001, %v982, 0
    %1005 = vmatpush.bf16.msra.mxu0 0
    %1006 = vmatpush.bf16.msra.mxu0 0
    %1007 = vmatpush.bf16.msra.mxu0 0
    %1008 = vmatpush.bf16.msra.mxu0 0
    %1009 = vmatpush.bf16.msra.mxu0 0
    %1010 = vmatpush.bf16.msra.mxu0 0
    %1011 = vmatpush.bf16.msra.mxu0 0
    %1012 = vmatpush.bf16.msra.mxu0 %v1003
    %1013 = vmatmul.bf16.gmra.mxu0 %v996
    %v1014 = vpop.f32.mrf.mxu0
    %v1015 = vadd.f32 0.0, %v1014
    %v1016 = vpop.f32.mrf.mxu0
    %v1017 = vadd.f32 0.0, %v1016
    %1018 = vmatmul.bf16.gmra.mxu0 %v999
    %v1019 = vpop.f32.mrf.mxu0
    %v1020 = vadd.f32 0.0, %v1019
    %v1021 = vpop.f32.mrf.mxu0
    %v1022 = vadd.f32 0.0, %v1021
    %1023 = vdwg.mxu0
    %v1028 = vunpack.c.l.b16 %v965
    %v1029 = vunpack.c.l.b16 %v966
    %v1030 = vunpack.c.l.b16 %v967
    %v1031 = vunpack.c.l.b16 %v968
    %v1032 = vpack.c.b16 %v1029, %v1028
    %v1033 = vpack.c.b16 %v1031, %v1030
    %v1035 = vsel %vm358, %v1032, 0
    %v1038 = vsel %vm358, %v1033, 0
    %v1041 = vsel %vm1001, %v981, 0
    %1043 = vmatpush.bf16.msra.mxu0 0
    %1044 = vmatpush.bf16.msra.mxu0 0
    %1045 = vmatpush.bf16.msra.mxu0 0
    %1046 = vmatpush.bf16.msra.mxu0 0
    %1047 = vmatpush.bf16.msra.mxu0 0
    %1048 = vmatpush.bf16.msra.mxu0 0
    %1049 = vmatpush.bf16.msra.mxu0 0
    %1050 = vmatpush.bf16.msra.mxu0 %v1041
    %1051 = vmatmul.bf16.gmra.mxu0 %v1035
    %v1052 = vpop.f32.mrf.mxu0
    %v1053 = vadd.f32 %v1015, %v1052
    %v1054 = vpop.f32.mrf.mxu0
    %v1055 = vadd.f32 %v1017, %v1054
    %1056 = vmatmul.bf16.gmra.mxu0 %v1038
    %v1057 = vpop.f32.mrf.mxu0
    %v1058 = vadd.f32 %v1020, %v1057
    %v1059 = vpop.f32.mrf.mxu0
    %v1060 = vadd.f32 %v1022, %v1059
    %1061 = vdwg.mxu0
    %v1066 = vunpack.c.l.b16 %v973
    %v1067 = vunpack.c.l.b16 %v974
    %v1068 = vunpack.c.l.b16 %v975
    %v1069 = vunpack.c.l.b16 %v976
    %v1070 = vpack.c.b16 %v1067, %v1066
    %v1071 = vpack.c.b16 %v1069, %v1068
    %v1073 = vsel %vm358, %v1070, 0
    %v1076 = vsel %vm358, %v1071, 0
    %v1079 = vsel %vm1001, %v983, 0
    %1081 = vmatpush.bf16.msra.mxu0 0
    %1082 = vmatpush.bf16.msra.mxu0 0
    %1083 = vmatpush.bf16.msra.mxu0 0
    %1084 = vmatpush.bf16.msra.mxu0 0
    %1085 = vmatpush.bf16.msra.mxu0 0
    %1086 = vmatpush.bf16.msra.mxu0 0
    %1087 = vmatpush.bf16.msra.mxu0 0
    %1088 = vmatpush.bf16.msra.mxu0 %v1079
    %1089 = vmatmul.bf16.gmra.mxu0 %v1073
    %v1090 = vpop.f32.mrf.mxu0
    %v1091 = vadd.f32 0.0, %v1090
    %v1092 = vpop.f32.mrf.mxu0
    %v1093 = vadd.f32 0.0, %v1092
    %1094 = vmatmul.bf16.gmra.mxu0 %v1076
    %v1095 = vpop.f32.mrf.mxu0
    %v1096 = vadd.f32 0.0, %v1095
    %v1097 = vpop.f32.mrf.mxu0
    %v1098 = vadd.f32 0.0, %v1097
    %1099 = vdwg.mxu0
    %v1100 = vadd.f32 %v1053, %v1091
    %v1101 = vadd.f32 %v1055, %v1093
    %v1102 = vadd.f32 %v1058, %v1096
    %v1103 = vadd.f32 %v1060, %v1098
    %v1108 = vunpack.c.l.b16 %v977
    %v1109 = vunpack.c.l.b16 %v978
    %v1110 = vunpack.c.l.b16 %v979
    %v1111 = vunpack.c.l.b16 %v980
    %v1112 = vpack.c.b16 %v1109, %v1108
    %v1113 = vpack.c.b16 %v1111, %v1110
    %v1115 = vsel %vm358, %v1112, 0
    %v1118 = vsel %vm358, %v1113, 0
    %v1121 = vsel %vm1001, %v984, 0
    %1123 = vmatpush.bf16.msra.mxu0 0
    %1124 = vmatpush.bf16.msra.mxu0 0
    %1125 = vmatpush.bf16.msra.mxu0 0
    %1126 = vmatpush.bf16.msra.mxu0 0
    %1127 = vmatpush.bf16.msra.mxu0 0
    %1128 = vmatpush.bf16.msra.mxu0 0
    %1129 = vmatpush.bf16.msra.mxu0 0
    %1130 = vmatpush.bf16.msra.mxu0 %v1121
    %1131 = vmatmul.bf16.gmra.mxu0 %v1115
    %v1132 = vpop.f32.mrf.mxu0
    %v1133 = vadd.f32 0.0, %v1132
    %v1134 = vpop.f32.mrf.mxu0
    %v1135 = vadd.f32 0.0, %v1134
    %1136 = vmatmul.bf16.gmra.mxu0 %v1118
    %v1137 = vpop.f32.mrf.mxu0
    %v1138 = vadd.f32 0.0, %v1137
    %v1139 = vpop.f32.mrf.mxu0
    %v1140 = vadd.f32 0.0, %v1139
    %1141 = vdwg.mxu0
    %v1142 = vadd.f32 %v1100, %v1133
    %v1143 = vadd.f32 %v1101, %v1135
    %v1144 = vadd.f32 %v1102, %v1138
    %v1145 = vadd.f32 %v1103, %v1140
    %v1146 = vadd.f32 %v160, %v1142
    %v1147 = vadd.f32 %v161, %v1143
    %v1148 = vadd.f32 %v162, %v1144
    %v1149 = vadd.f32 %v163, %v1145
    %v1150 = vld [vmem:[%s8] sm:$0x1]
    %v1152 = vperm.slane %v1150, 0
    %v1154 = vadd.f32 %v1146, %v1152
    %v1155 = vadd.f32 %v1147, %v1152
    %v1156 = vadd.f32 %v1148, %v1152
    %v1157 = vadd.f32 %v1149, %v1152
    %v1158 = vld [vmem:[%s9] sm:$0x1]
    %v1159 = vld [vmem:[%s10] sm:$0x1]
    %v1160 = vsel %vm121, %v1154, 0.0
    %1161 = vadd.xlane.f32.xlu0 %v1160
    %v1162 = vpop.xlane.xlu0 %1161
    %v1163 = vsel %vm121, %v1155, 0.0
    %1164 = vadd.xlane.f32.xlu0 %v1163
    %v1165 = vpop.xlane.xlu0 %1164
    %v1166 = vsel %vm121, %v1156, 0.0
    %1167 = vadd.xlane.f32.xlu0 %v1166
    %v1168 = vpop.xlane.xlu0 %1167
    %v1169 = vsel %vm121, %v1157, 0.0
    %1170 = vadd.xlane.f32.xlu0 %v1169
    %v1171 = vpop.xlane.xlu0 %1170
    %v1172 = vmul.f32 %v1162, %v187
    %v1173 = vmul.f32 %v1165, %v187
    %v1174 = vmul.f32 %v1168, %v187
    %v1175 = vmul.f32 %v1171, %v187
    %v1176 = vsub.f32 %v1154, %v1172
    %v1177 = vsub.f32 %v1155, %v1173
    %v1178 = vsub.f32 %v1156, %v1174
    %v1179 = vsub.f32 %v1157, %v1175
    %v1180 = vmul.f32 %v1176, %v1176
    %v1181 = vmul.f32 %v1177, %v1177
    %v1182 = vmul.f32 %v1178, %v1178
    %v1183 = vmul.f32 %v1179, %v1179
    %v1184 = vsel %vm121, %v1180, 0.0
    %1185 = vadd.xlane.f32.xlu0 %v1184
    %v1186 = vpop.xlane.xlu0 %1185
    %v1187 = vsel %vm121, %v1181, 0.0
    %1188 = vadd.xlane.f32.xlu0 %v1187
    %v1189 = vpop.xlane.xlu0 %1188
    %v1190 = vsel %vm121, %v1182, 0.0
    %1191 = vadd.xlane.f32.xlu0 %v1190
    %v1192 = vpop.xlane.xlu0 %1191
    %v1193 = vsel %vm121, %v1183, 0.0
    %1194 = vadd.xlane.f32.xlu0 %v1193
    %v1195 = vpop.xlane.xlu0 %1194
    %v1196 = vmul.f32 %v1186, %v187
    %v1197 = vmul.f32 %v1189, %v187
    %v1198 = vmul.f32 %v1192, %v187
    %v1199 = vmul.f32 %v1195, %v187
    %v1200 = vadd.f32 %v1196, 1e-05
    %v1201 = vadd.f32 %v1197, 1e-05
    %v1202 = vadd.f32 %v1198, 1e-05
    %v1203 = vadd.f32 %v1199, 1e-05
    %v1204 = vrsqrt.pop %v1200
    %v1205 = vmul.f32 %v1204, %v1200
    %v1206 = vmul.f32 %v1205, %v1204
    %v1207 = vmul.f32 0.5, %v1206
    %v1208 = vsub.f32 1.5, %v1207
    %v1209 = vmul.f32 %v1204, %v1208
    %vm1210 = vweird.f32 %v1200
    %vm1211 = vweird.f32 %v1204
    %vm1212 = vmor %vm1210, %vm1211
    %v1213 = vsel %vm1212, %v1204, %v1209
    %v1214 = vrsqrt.pop %v1201
    %v1215 = vmul.f32 %v1214, %v1201
    %v1216 = vmul.f32 %v1215, %v1214
    %v1217 = vmul.f32 0.5, %v1216
    %v1218 = vsub.f32 1.5, %v1217
    %v1219 = vmul.f32 %v1214, %v1218
    %vm1220 = vweird.f32 %v1201
    %vm1221 = vweird.f32 %v1214
    %vm1222 = vmor %vm1220, %vm1221
    %v1223 = vsel %vm1222, %v1214, %v1219
    %v1224 = vrsqrt.pop %v1202
    %v1225 = vmul.f32 %v1224, %v1202
    %v1226 = vmul.f32 %v1225, %v1224
    %v1227 = vmul.f32 0.5, %v1226
    %v1228 = vsub.f32 1.5, %v1227
    %v1229 = vmul.f32 %v1224, %v1228
    %vm1230 = vweird.f32 %v1202
    %vm1231 = vweird.f32 %v1224
    %vm1232 = vmor %vm1230, %vm1231
    %v1233 = vsel %vm1232, %v1224, %v1229
    %v1234 = vrsqrt.pop %v1203
    %v1235 = vmul.f32 %v1234, %v1203
    %v1236 = vmul.f32 %v1235, %v1234
    %v1237 = vmul.f32 0.5, %v1236
    %v1238 = vsub.f32 1.5, %v1237
    %v1239 = vmul.f32 %v1234, %v1238
    %vm1240 = vweird.f32 %v1203
    %vm1241 = vweird.f32 %v1234
    %vm1242 = vmor %vm1240, %vm1241
    %v1243 = vsel %vm1242, %v1234, %v1239
    %v1244 = vmul.f32 %v1176, %v1213
    %v1245 = vmul.f32 %v1177, %v1223
    %v1246 = vmul.f32 %v1178, %v1233
    %v1247 = vmul.f32 %v1179, %v1243
    %v1249 = vperm.slane %v1158, 0
    %v1251 = vmul.f32 %v1244, %v1249
    %v1252 = vmul.f32 %v1245, %v1249
    %v1253 = vmul.f32 %v1246, %v1249
    %v1254 = vmul.f32 %v1247, %v1249
    %v1256 = vperm.slane %v1159, 0
    %v1258 = vadd.f32 %v1251, %v1256
    %v1259 = vadd.f32 %v1252, %v1256
    %v1260 = vadd.f32 %v1253, %v1256
    %v1261 = vadd.f32 %v1254, %v1256
    %v1262 = vpack.c.bf16 %v1259, %v1258
    %v1263 = vpack.c.bf16 %v1261, %v1260
    %v1264 = vld [vmem:[%s11] sm:$0xf]
    %v1265 = vld [vmem:[%s11 + $0x4] sm:$0xf]
    %v1266 = vld [vmem:[%s11 + $0x8] sm:$0xf]
    %v1267 = vld [vmem:[%s11 + $0xc] sm:$0xf]
    %v1268 = vld [vmem:[%s12] sm:$0x1]
    %v1270 = vperm.slane %v1268, 0
    %v1276 = vunpack.c.l.b16 %v1264
    %v1277 = vunpack.c.l.b16 %v1265
    %v1278 = vunpack.c.l.b16 %v1266
    %v1279 = vunpack.c.l.b16 %v1267
    %v1280 = vpack.c.b16 %v1277, %v1276
    %v1281 = vpack.c.b16 %v1279, %v1278
    %v1285 = vsel %vm121, %v1262, 0
    %v1288 = vsel %vm121, %v1263, 0
    %1290 = vmatpush.bf16.msra.mxu0 0
    %1291 = vmatpush.bf16.msra.mxu0 0
    %1292 = vmatpush.bf16.msra.mxu0 0
    %1293 = vmatpush.bf16.msra.mxu0 0
    %1294 = vmatpush.bf16.msra.mxu0 0
    %1295 = vmatpush.bf16.msra.mxu0 0
    %1296 = vmatpush.bf16.msra.mxu0 %v1281
    %1297 = vmatpush.bf16.msra.mxu0 %v1280
    %1298 = vmatmul.bf16.gmra.mxu0 %v1285
    %v1299 = vpop.f32.mrf.mxu0
    %v1300 = vadd.f32 %v1270, %v1299
    %v1301 = vpop.f32.mrf.mxu0
    %v1302 = vadd.f32 %v1270, %v1301
    %1303 = vmatmul.bf16.gmra.mxu0 %v1288
    %v1304 = vpop.f32.mrf.mxu0
    %v1305 = vadd.f32 %v1270, %v1304
    %v1306 = vpop.f32.mrf.mxu0
    %v1307 = vadd.f32 %v1270, %v1306
    %1308 = vdwg.mxu0
    %v1309 = vmax.f32 %v1300, 0.0
    %v1310 = vmax.f32 %v1302, 0.0
    %v1311 = vmax.f32 %v1305, 0.0
    %v1312 = vmax.f32 %v1307, 0.0
    %v1313 = vpack.c.bf16 %v1310, %v1309
    %v1314 = vpack.c.bf16 %v1312, %v1311
    %v1315 = vld [vmem:[%s13] sm:$0xf]
    %v1316 = vld [vmem:[%s13 + $0x4] sm:$0xf]
    %v1317 = vld [vmem:[%s13 + $0x8] sm:$0xf]
    %v1318 = vld [vmem:[%s13 + $0xc] sm:$0xf]
    %v1319 = vld [vmem:[%s13 + $0x10] sm:$0xf]
    %v1320 = vld [vmem:[%s13 + $0x14] sm:$0xf]
    %v1321 = vld [vmem:[%s13 + $0x18] sm:$0xf]
    %v1322 = vld [vmem:[%s13 + $0x1c] sm:$0xf]
    %v1331 = vunpack.c.l.b16 %v1315
    %v1332 = vunpack.c.l.b16 %v1316
    %v1333 = vunpack.c.l.b16 %v1317
    %v1334 = vunpack.c.l.b16 %v1318
    %v1335 = vunpack.c.l.b16 %v1319
    %v1336 = vunpack.c.l.b16 %v1320
    %v1337 = vunpack.c.l.b16 %v1321
    %v1338 = vunpack.c.l.b16 %v1322
    %v1339 = vpack.c.b16 %v1332, %v1331
    %v1340 = vpack.c.b16 %v1334, %v1333
    %v1341 = vpack.c.b16 %v1336, %v1335
    %v1342 = vpack.c.b16 %v1338, %v1337
    %vm1347 = vcmask 523264
    %v1349 = vsel %vm1347, %v1313, 0
    %v1352 = vsel %vm1347, %v1314, 0
    %1354 = vmatpush.bf16.msra.mxu0 0
    %1355 = vmatpush.bf16.msra.mxu0 0
    %1356 = vmatpush.bf16.msra.mxu0 0
    %1357 = vmatpush.bf16.msra.mxu0 0
    %1358 = vmatpush.bf16.msra.mxu0 %v1342
    %1359 = vmatpush.bf16.msra.mxu0 %v1341
    %1360 = vmatpush.bf16.msra.mxu0 %v1340
    %1361 = vmatpush.bf16.msra.mxu0 %v1339
    %1362 = vmatmul.bf16.gmra.mxu0 %v1349
    %v1363 = vpop.f32.mrf.mxu0
    %v1364 = vadd.f32 0.0, %v1363
    %v1365 = vpop.f32.mrf.mxu0
    %v1366 = vadd.f32 0.0, %v1365
    %1367 = vmatmul.bf16.gmra.mxu0 %v1352
    %v1368 = vpop.f32.mrf.mxu0
    %v1369 = vadd.f32 0.0, %v1368
    %v1370 = vpop.f32.mrf.mxu0
    %v1371 = vadd.f32 0.0, %v1370
    %1372 = vdwg.mxu0
    %v1373 = vadd.f32 %v1154, %v1364
    %v1374 = vadd.f32 %v1155, %v1366
    %v1375 = vadd.f32 %v1156, %v1369
    %v1376 = vadd.f32 %v1157, %v1371
    %v1377 = vld [vmem:[#allocation7] sm:$0x1]
    %v1379 = vperm.slane %v1377, 0
    %v1381 = vadd.f32 %v1373, %v1379
    %v1382 = vadd.f32 %v1374, %v1379
    %v1383 = vadd.f32 %v1375, %v1379
    %v1384 = vadd.f32 %v1376, %v1379
    %s1385 = scalar_lea.vmem %s4, 1
    %v1386 = vld [vmem:[%s1385] sm:$0x1]
    %s1387 = scalar_lea.vmem %s5, 1
    %v1388 = vld [vmem:[%s1387] sm:$0x1]
    %v1389 = vsel %vm121, %v1381, 0.0
    %1390 = vadd.xlane.f32.xlu0 %v1389
    %v1391 = vpop.xlane.xlu0 %1390
    %v1392 = vsel %vm121, %v1382, 0.0
    %1393 = vadd.xlane.f32.xlu0 %v1392
    %v1394 = vpop.xlane.xlu0 %1393
    %v1395 = vsel %vm121, %v1383, 0.0
    %1396 = vadd.xlane.f32.xlu0 %v1395
    %v1397 = vpop.xlane.xlu0 %1396
    %v1398 = vsel %vm121, %v1384, 0.0
    %1399 = vadd.xlane.f32.xlu0 %v1398
    %v1400 = vpop.xlane.xlu0 %1399
    %v1401 = vmul.f32 %v1391, %v187
    %v1402 = vmul.f32 %v1394, %v187
    %v1403 = vmul.f32 %v1397, %v187
    %v1404 = vmul.f32 %v1400, %v187
    %v1405 = vsub.f32 %v1381, %v1401
    %v1406 = vsub.f32 %v1382, %v1402
    %v1407 = vsub.f32 %v1383, %v1403
    %v1408 = vsub.f32 %v1384, %v1404
    %v1409 = vmul.f32 %v1405, %v1405
    %v1410 = vmul.f32 %v1406, %v1406
    %v1411 = vmul.f32 %v1407, %v1407
    %v1412 = vmul.f32 %v1408, %v1408
    %v1413 = vsel %vm121, %v1409, 0.0
    %1414 = vadd.xlane.f32.xlu0 %v1413
    %v1415 = vpop.xlane.xlu0 %1414
    %v1416 = vsel %vm121, %v1410, 0.0
    %1417 = vadd.xlane.f32.xlu0 %v1416
    %v1418 = vpop.xlane.xlu0 %1417
    %v1419 = vsel %vm121, %v1411, 0.0
    %1420 = vadd.xlane.f32.xlu0 %v1419
    %v1421 = vpop.xlane.xlu0 %1420
    %v1422 = vsel %vm121, %v1412, 0.0
    %1423 = vadd.xlane.f32.xlu0 %v1422
    %v1424 = vpop.xlane.xlu0 %1423
    %v1425 = vmul.f32 %v1415, %v187
    %v1426 = vmul.f32 %v1418, %v187
    %v1427 = vmul.f32 %v1421, %v187
    %v1428 = vmul.f32 %v1424, %v187
    %v1429 = vadd.f32 %v1425, 1e-05
    %v1430 = vadd.f32 %v1426, 1e-05
    %v1431 = vadd.f32 %v1427, 1e-05
    %v1432 = vadd.f32 %v1428, 1e-05
    %v1433 = vrsqrt.pop %v1429
    %v1434 = vmul.f32 %v1433, %v1429
    %v1435 = vmul.f32 %v1434, %v1433
    %v1436 = vmul.f32 0.5, %v1435
    %v1437 = vsub.f32 1.5, %v1436
    %v1438 = vmul.f32 %v1433, %v1437
    %vm1439 = vweird.f32 %v1429
    %vm1440 = vweird.f32 %v1433
    %vm1441 = vmor %vm1439, %vm1440
    %v1442 = vsel %vm1441, %v1433, %v1438
    %v1443 = vrsqrt.pop %v1430
    %v1444 = vmul.f32 %v1443, %v1430
    %v1445 = vmul.f32 %v1444, %v1443
    %v1446 = vmul.f32 0.5, %v1445
    %v1447 = vsub.f32 1.5, %v1446
    %v1448 = vmul.f32 %v1443, %v1447
    %vm1449 = vweird.f32 %v1430
    %vm1450 = vweird.f32 %v1443
    %vm1451 = vmor %vm1449, %vm1450
    %v1452 = vsel %vm1451, %v1443, %v1448
    %v1453 = vrsqrt.pop %v1431
    %v1454 = vmul.f32 %v1453, %v1431
    %v1455 = vmul.f32 %v1454, %v1453
    %v1456 = vmul.f32 0.5, %v1455
    %v1457 = vsub.f32 1.5, %v1456
    %v1458 = vmul.f32 %v1453, %v1457
    %vm1459 = vweird.f32 %v1431
    %vm1460 = vweird.f32 %v1453
    %vm1461 = vmor %vm1459, %vm1460
    %v1462 = vsel %vm1461, %v1453, %v1458
    %v1463 = vrsqrt.pop %v1432
    %v1464 = vmul.f32 %v1463, %v1432
    %v1465 = vmul.f32 %v1464, %v1463
    %v1466 = vmul.f32 0.5, %v1465
    %v1467 = vsub.f32 1.5, %v1466
    %v1468 = vmul.f32 %v1463, %v1467
    %vm1469 = vweird.f32 %v1432
    %vm1470 = vweird.f32 %v1463
    %vm1471 = vmor %vm1469, %vm1470
    %v1472 = vsel %vm1471, %v1463, %v1468
    %v1473 = vmul.f32 %v1405, %v1442
    %v1474 = vmul.f32 %v1406, %v1452
    %v1475 = vmul.f32 %v1407, %v1462
    %v1476 = vmul.f32 %v1408, %v1472
    %v1478 = vperm.slane %v1386, 0
    %v1480 = vmul.f32 %v1473, %v1478
    %v1481 = vmul.f32 %v1474, %v1478
    %v1482 = vmul.f32 %v1475, %v1478
    %v1483 = vmul.f32 %v1476, %v1478
    %v1485 = vperm.slane %v1388, 0
    %v1487 = vadd.f32 %v1480, %v1485
    %v1488 = vadd.f32 %v1481, %v1485
    %v1489 = vadd.f32 %v1482, %v1485
    %v1490 = vadd.f32 %v1483, %v1485
    %v1491 = vpack.c.bf16 %v1488, %v1487
    %v1492 = vpack.c.bf16 %v1490, %v1489
    %s1493 = scalar_lea.vmem %s6, 16
    %v1494 = vld [vmem:[%s1493] sm:$0xf]
    %v1495 = vld [vmem:[%s1493 + $0x4] sm:$0xf]
    %v1496 = vld [vmem:[%s1493 + $0x8] sm:$0xf]
    %v1497 = vld [vmem:[%s1493 + $0xc] sm:$0xf]
    %v1502 = vunpack.c.l.b16 %v1494
    %v1503 = vunpack.c.l.b16 %v1495
    %v1504 = vunpack.c.l.b16 %v1496
    %v1505 = vunpack.c.l.b16 %v1497
    %v1506 = vpack.c.b16 %v1503, %v1502
    %v1507 = vpack.c.b16 %v1505, %v1504
    %v1511 = vsel %vm121, %v1491, 0
    %v1514 = vsel %vm121, %v1492, 0
    %1516 = vmatpush.bf16.msra.mxu0 0
    %1517 = vmatpush.bf16.msra.mxu0 0
    %1518 = vmatpush.bf16.msra.mxu0 0
    %1519 = vmatpush.bf16.msra.mxu0 0
    %1520 = vmatpush.bf16.msra.mxu0 0
    %1521 = vmatpush.bf16.msra.mxu0 0
    %1522 = vmatpush.bf16.msra.mxu0 %v1507
    %1523 = vmatpush.bf16.msra.mxu0 %v1506
    %1524 = vmatmul.bf16.gmra.mxu0 %v1511
    %v1525 = vpop.f32.mrf.mxu0
    %v1526 = vadd.f32 0.0, %v1525
    %v1527 = vpop.f32.mrf.mxu0
    %v1528 = vadd.f32 0.0, %v1527
    %1529 = vmatmul.bf16.gmra.mxu0 %v1514
    %v1530 = vpop.f32.mrf.mxu0
    %v1531 = vadd.f32 0.0, %v1530
    %v1532 = vpop.f32.mrf.mxu0
    %v1533 = vadd.f32 0.0, %v1532
    %1534 = vdwg.mxu0
    %v1535 = vpack.c.bf16 %v1526, %v1526
    %v1536 = vpack.c.bf16 %v1528, %v1528
    %v1537 = vpack.c.bf16 %v1531, %v1531
    %v1538 = vpack.c.bf16 %v1533, %v1533
    %1543 = vrot.lane.b32.xlu0 %v1535, 120
    %v1544 = vpop.permute.xlu0 %1543
    %1545 = vrot.lane.b32.xlu0 %v1536, 120
    %v1546 = vpop.permute.xlu0 %1545
    %1547 = vrot.lane.b32.xlu0 %v1537, 120
    %v1548 = vpop.permute.xlu0 %1547
    %1549 = vrot.lane.b32.xlu0 %v1538, 120
    %v1550 = vpop.permute.xlu0 %1549
    %1551 = vrot.lane.b32.xlu0 %v1535, 112
    %v1552 = vpop.permute.xlu0 %1551
    %1553 = vrot.lane.b32.xlu0 %v1536, 112
    %v1554 = vpop.permute.xlu0 %1553
    %1555 = vrot.lane.b32.xlu0 %v1537, 112
    %v1556 = vpop.permute.xlu0 %1555
    %1557 = vrot.lane.b32.xlu0 %v1538, 112
    %v1558 = vpop.permute.xlu0 %1557
    %1559 = vrot.lane.b32.xlu0 %v1535, 104
    %v1560 = vpop.permute.xlu0 %1559
    %1561 = vrot.lane.b32.xlu0 %v1536, 104
    %v1562 = vpop.permute.xlu0 %1561
    %1563 = vrot.lane.b32.xlu0 %v1537, 104
    %v1564 = vpop.permute.xlu0 %1563
    %1565 = vrot.lane.b32.xlu0 %v1538, 104
    %v1566 = vpop.permute.xlu0 %1565
    %v1567 = vunpack.c.l.b16 %v1535
    %v1568 = vunpack.c.l.b16 %v1536
    %v1569 = vpack.c.b16 %v1568, %v1567
    %1570 = vrot.lane.b32.xlu0 %v1569, 96
    %v1571 = vpop.permute.xlu0 %1570
    %v1573 = vsel %vm358, %v1569, 0
    %v1576 = vsel %vm358, %v1571, 0
    %1578 = vmatpush.bf16.xpose.msra.mxu0 0
    %1579 = vmatpush.bf16.xpose.msra.mxu0 0
    %1580 = vmatpush.bf16.xpose.msra.mxu0 0
    %1581 = vmatpush.bf16.xpose.msra.mxu0 0
    %1582 = vmatpush.bf16.xpose.msra.mxu0 0
    %1583 = vmatpush.bf16.xpose.msra.mxu0 0
    %1584 = vmatpush.bf16.xpose.msra.mxu0 0
    %1585 = vmatpush.bf16.xpose.msra.mxu0 %v1576
    %1586 = vmatmul.bf16.gmra.mxu0 %v1573
    %v1587 = vpop.f32.mrf.mxu0
    %v1588 = vadd.f32 0.0, %v1587
    %v1589 = vpop.f32.mrf.mxu0
    %v1590 = vadd.f32 0.0, %v1589
    %1591 = vdwg.mxu0
    %v1592 = vunpack.c.l.b16 %v1537
    %v1593 = vunpack.c.l.b16 %v1538
    %v1594 = vpack.c.b16 %v1593, %v1592
    %1595 = vrot.lane.b32.xlu0 %v1594, 96
    %v1596 = vpop.permute.xlu0 %1595
    %v1598 = vsel %vm358, %v1594, 0
    %v1601 = vsel %vm358, %v1596, 0
    %1603 = vmatpush.bf16.xpose.msra.mxu0 0
    %1604 = vmatpush.bf16.xpose.msra.mxu0 0
    %1605 = vmatpush.bf16.xpose.msra.mxu0 0
    %1606 = vmatpush.bf16.xpose.msra.mxu0 0
    %1607 = vmatpush.bf16.xpose.msra.mxu0 0
    %1608 = vmatpush.bf16.xpose.msra.mxu0 0
    %1609 = vmatpush.bf16.xpose.msra.mxu0 0
    %1610 = vmatpush.bf16.xpose.msra.mxu0 %v1601
    %1611 = vmatmul.bf16.gmra.mxu0 %v1598
    %v1612 = vpop.f32.mrf.mxu0
    %v1613 = vadd.f32 0.0, %v1612
    %v1614 = vpop.f32.mrf.mxu0
    %v1615 = vadd.f32 0.0, %v1614
    %1616 = vdwg.mxu0
    %v1617 = vunpack.c.l.b16 %v1544
    %v1618 = vunpack.c.l.b16 %v1546
    %v1619 = vpack.c.b16 %v1618, %v1617
    %1620 = vrot.lane.b32.xlu0 %v1619, 96
    %v1621 = vpop.permute.xlu0 %1620
    %v1623 = vsel %vm358, %v1619, 0
    %v1626 = vsel %vm358, %v1621, 0
    %1628 = vmatpush.bf16.xpose.msra.mxu0 0
    %1629 = vmatpush.bf16.xpose.msra.mxu0 0
    %1630 = vmatpush.bf16.xpose.msra.mxu0 0
    %1631 = vmatpush.bf16.xpose.msra.mxu0 0
    %1632 = vmatpush.bf16.xpose.msra.mxu0 0
    %1633 = vmatpush.bf16.xpose.msra.mxu0 0
    %1634 = vmatpush.bf16.xpose.msra.mxu0 0
    %1635 = vmatpush.bf16.xpose.msra.mxu0 %v1626
    %1636 = vmatmul.bf16.gmra.mxu0 %v1623
    %v1637 = vpop.f32.mrf.mxu0
    %v1638 = vadd.f32 0.0, %v1637
    %v1639 = vpop.f32.mrf.mxu0
    %v1640 = vadd.f32 0.0, %v1639
    %1641 = vdwg.mxu0
    %v1642 = vunpack.c.l.b16 %v1548
    %v1643 = vunpack.c.l.b16 %v1550
    %v1644 = vpack.c.b16 %v1643, %v1642
    %1645 = vrot.lane.b32.xlu0 %v1644, 96
    %v1646 = vpop.permute.xlu0 %1645
    %v1648 = vsel %vm358, %v1644, 0
    %v1651 = vsel %vm358, %v1646, 0
    %1653 = vmatpush.bf16.xpose.msra.mxu0 0
    %1654 = vmatpush.bf16.xpose.msra.mxu0 0
    %1655 = vmatpush.bf16.xpose.msra.mxu0 0
    %1656 = vmatpush.bf16.xpose.msra.mxu0 0
    %1657 = vmatpush.bf16.xpose.msra.mxu0 0
    %1658 = vmatpush.bf16.xpose.msra.mxu0 0
    %1659 = vmatpush.bf16.xpose.msra.mxu0 0
    %1660 = vmatpush.bf16.xpose.msra.mxu0 %v1651
    %1661 = vmatmul.bf16.gmra.mxu0 %v1648
    %v1662 = vpop.f32.mrf.mxu0
    %v1663 = vadd.f32 0.0, %v1662
    %v1664 = vpop.f32.mrf.mxu0
    %v1665 = vadd.f32 0.0, %v1664
    %1666 = vdwg.mxu0
    %v1667 = vunpack.c.l.b16 %v1552
    %v1668 = vunpack.c.l.b16 %v1554
    %v1669 = vpack.c.b16 %v1668, %v1667
    %1670 = vrot.lane.b32.xlu0 %v1669, 96
    %v1671 = vpop.permute.xlu0 %1670
    %v1673 = vsel %vm358, %v1669, 0
    %v1676 = vsel %vm358, %v1671, 0
    %1678 = vmatpush.bf16.xpose.msra.mxu0 0
    %1679 = vmatpush.bf16.xpose.msra.mxu0 0
    %1680 = vmatpush.bf16.xpose.msra.mxu0 0
    %1681 = vmatpush.bf16.xpose.msra.mxu0 0
    %1682 = vmatpush.bf16.xpose.msra.mxu0 0
    %1683 = vmatpush.bf16.xpose.msra.mxu0 0
    %1684 = vmatpush.bf16.xpose.msra.mxu0 0
    %1685 = vmatpush.bf16.xpose.msra.mxu0 %v1676
    %1686 = vmatmul.bf16.gmra.mxu0 %v1673
    %v1687 = vpop.f32.mrf.mxu0
    %v1688 = vadd.f32 0.0, %v1687
    %v1689 = vpop.f32.mrf.mxu0
    %v1690 = vadd.f32 0.0, %v1689
    %1691 = vdwg.mxu0
    %v1692 = vunpack.c.l.b16 %v1556
    %v1693 = vunpack.c.l.b16 %v1558
    %v1694 = vpack.c.b16 %v1693, %v1692
    %1695 = vrot.lane.b32.xlu0 %v1694, 96
    %v1696 = vpop.permute.xlu0 %1695
    %v1698 = vsel %vm358, %v1694, 0
    %v1701 = vsel %vm358, %v1696, 0
    %1703 = vmatpush.bf16.xpose.msra.mxu0 0
    %1704 = vmatpush.bf16.xpose.msra.mxu0 0
    %1705 = vmatpush.bf16.xpose.msra.mxu0 0
    %1706 = vmatpush.bf16.xpose.msra.mxu0 0
    %1707 = vmatpush.bf16.xpose.msra.mxu0 0
    %1708 = vmatpush.bf16.xpose.msra.mxu0 0
    %1709 = vmatpush.bf16.xpose.msra.mxu0 0
    %1710 = vmatpush.bf16.xpose.msra.mxu0 %v1701
    %1711 = vmatmul.bf16.gmra.mxu0 %v1698
    %v1712 = vpop.f32.mrf.mxu0
    %v1713 = vadd.f32 0.0, %v1712
    %v1714 = vpop.f32.mrf.mxu0
    %v1715 = vadd.f32 0.0, %v1714
    %1716 = vdwg.mxu0
    %v1717 = vunpack.c.l.b16 %v1560
    %v1718 = vunpack.c.l.b16 %v1562
    %v1719 = vpack.c.b16 %v1718, %v1717
    %1720 = vrot.lane.b32.xlu0 %v1719, 96
    %v1721 = vpop.permute.xlu0 %1720
    %v1723 = vsel %vm358, %v1719, 0
    %v1726 = vsel %vm358, %v1721, 0
    %1728 = vmatpush.bf16.xpose.msra.mxu0 0
    %1729 = vmatpush.bf16.xpose.msra.mxu0 0
    %1730 = vmatpush.bf16.xpose.msra.mxu0 0
    %1731 = vmatpush.bf16.xpose.msra.mxu0 0
    %1732 = vmatpush.bf16.xpose.msra.mxu0 0
    %1733 = vmatpush.bf16.xpose.msra.mxu0 0
    %1734 = vmatpush.bf16.xpose.msra.mxu0 0
    %1735 = vmatpush.bf16.xpose.msra.mxu0 %v1726
    %1736 = vmatmul.bf16.gmra.mxu0 %v1723
    %v1737 = vpop.f32.mrf.mxu0
    %v1738 = vadd.f32 0.0, %v1737
    %v1739 = vpop.f32.mrf.mxu0
    %v1740 = vadd.f32 0.0, %v1739
    %1741 = vdwg.mxu0
    %v1742 = vunpack.c.l.b16 %v1564
    %v1743 = vunpack.c.l.b16 %v1566
    %v1744 = vpack.c.b16 %v1743, %v1742
    %1745 = vrot.lane.b32.xlu0 %v1744, 96
    %v1746 = vpop.permute.xlu0 %1745
    %v1748 = vsel %vm358, %v1744, 0
    %v1751 = vsel %vm358, %v1746, 0
    %1753 = vmatpush.bf16.xpose.msra.mxu0 0
    %1754 = vmatpush.bf16.xpose.msra.mxu0 0
    %1755 = vmatpush.bf16.xpose.msra.mxu0 0
    %1756 = vmatpush.bf16.xpose.msra.mxu0 0
    %1757 = vmatpush.bf16.xpose.msra.mxu0 0
    %1758 = vmatpush.bf16.xpose.msra.mxu0 0
    %1759 = vmatpush.bf16.xpose.msra.mxu0 0
    %1760 = vmatpush.bf16.xpose.msra.mxu0 %v1751
    %1761 = vmatmul.bf16.gmra.mxu0 %v1748
    %v1762 = vpop.f32.mrf.mxu0
    %v1763 = vadd.f32 0.0, %v1762
    %v1764 = vpop.f32.mrf.mxu0
    %v1765 = vadd.f32 0.0, %v1764
    %1766 = vdwg.mxu0
    %v1767 = vsel %vm555, %v1588, -1e+30
    %v1768 = vsel %vm555, %v1590, -1e+30
    %v1769 = vsel %vm555, %v1613, -1e+30
    %v1770 = vsel %vm555, %v1615, -1e+30
    %v1771 = vsel %vm555, %v1638, -1e+30
    %v1772 = vsel %vm555, %v1640, -1e+30
    %v1773 = vsel %vm555, %v1663, -1e+30
    %v1774 = vsel %vm555, %v1665, -1e+30
    %v1775 = vsel %vm555, %v1688, -1e+30
    %v1776 = vsel %vm555, %v1690, -1e+30
    %v1777 = vsel %vm555, %v1713, -1e+30
    %v1778 = vsel %vm555, %v1715, -1e+30
    %v1779 = vsel %vm555, %v1738, -1e+30
    %v1780 = vsel %vm555, %v1740, -1e+30
    %v1781 = vsel %vm555, %v1763, -1e+30
    %v1782 = vsel %vm555, %v1765, -1e+30
    %v1783 = vsel %vm572, %v1767, -inf
    %1784 = vmax.xlane.f32.xlu0 %v1783
    %v1785 = vpop.xlane.xlu0 %1784
    %v1786 = vsel %vm572, %v1768, -inf
    %1787 = vmax.xlane.f32.xlu0 %v1786
    %v1788 = vpop.xlane.xlu0 %1787
    %v1789 = vsel %vm572, %v1769, -inf
    %1790 = vmax.xlane.f32.xlu0 %v1789
    %v1791 = vpop.xlane.xlu0 %1790
    %v1792 = vsel %vm572, %v1770, -inf
    %1793 = vmax.xlane.f32.xlu0 %v1792
    %v1794 = vpop.xlane.xlu0 %1793
    %v1795 = vsel %vm572, %v1771, -inf
    %1796 = vmax.xlane.f32.xlu0 %v1795
    %v1797 = vpop.xlane.xlu0 %1796
    %v1798 = vsel %vm572, %v1772, -inf
    %1799 = vmax.xlane.f32.xlu0 %v1798
    %v1800 = vpop.xlane.xlu0 %1799
    %v1801 = vsel %vm572, %v1773, -inf
    %1802 = vmax.xlane.f32.xlu0 %v1801
    %v1803 = vpop.xlane.xlu0 %1802
    %v1804 = vsel %vm572, %v1774, -inf
    %1805 = vmax.xlane.f32.xlu0 %v1804
    %v1806 = vpop.xlane.xlu0 %1805
    %v1807 = vsel %vm572, %v1775, -inf
    %1808 = vmax.xlane.f32.xlu0 %v1807
    %v1809 = vpop.xlane.xlu0 %1808
    %v1810 = vsel %vm572, %v1776, -inf
    %1811 = vmax.xlane.f32.xlu0 %v1810
    %v1812 = vpop.xlane.xlu0 %1811
    %v1813 = vsel %vm572, %v1777, -inf
    %1814 = vmax.xlane.f32.xlu0 %v1813
    %v1815 = vpop.xlane.xlu0 %1814
    %v1816 = vsel %vm572, %v1778, -inf
    %1817 = vmax.xlane.f32.xlu0 %v1816
    %v1818 = vpop.xlane.xlu0 %1817
    %v1819 = vsel %vm572, %v1779, -inf
    %1820 = vmax.xlane.f32.xlu0 %v1819
    %v1821 = vpop.xlane.xlu0 %1820
    %v1822 = vsel %vm572, %v1780, -inf
    %1823 = vmax.xlane.f32.xlu0 %v1822
    %v1824 = vpop.xlane.xlu0 %1823
    %v1825 = vsel %vm572, %v1781, -inf
    %1826 = vmax.xlane.f32.xlu0 %v1825
    %v1827 = vpop.xlane.xlu0 %1826
    %v1828 = vsel %vm572, %v1782, -inf
    %1829 = vmax.xlane.f32.xlu0 %v1828
    %v1830 = vpop.xlane.xlu0 %1829
    %v1831 = vsub.f32 %v1767, %v1785
    %v1832 = vsub.f32 %v1768, %v1788
    %v1833 = vsub.f32 %v1769, %v1791
    %v1834 = vsub.f32 %v1770, %v1794
    %v1835 = vsub.f32 %v1771, %v1797
    %v1836 = vsub.f32 %v1772, %v1800
    %v1837 = vsub.f32 %v1773, %v1803
    %v1838 = vsub.f32 %v1774, %v1806
    %v1839 = vsub.f32 %v1775, %v1809
    %v1840 = vsub.f32 %v1776, %v1812
    %v1841 = vsub.f32 %v1777, %v1815
    %v1842 = vsub.f32 %v1778, %v1818
    %v1843 = vsub.f32 %v1779, %v1821
    %v1844 = vsub.f32 %v1780, %v1824
    %v1845 = vsub.f32 %v1781, %v1827
    %v1846 = vsub.f32 %v1782, %v1830
    %v1847 = vmul.f32 %v1831, 1.442695
    %v1848 = vpow.pop %v1847
    %v1849 = vmul.f32 %v1832, 1.442695
    %v1850 = vpow.pop %v1849
    %v1851 = vmul.f32 %v1833, 1.442695
    %v1852 = vpow.pop %v1851
    %v1853 = vmul.f32 %v1834, 1.442695
    %v1854 = vpow.pop %v1853
    %v1855 = vmul.f32 %v1835, 1.442695
    %v1856 = vpow.pop %v1855
    %v1857 = vmul.f32 %v1836, 1.442695
    %v1858 = vpow.pop %v1857
    %v1859 = vmul.f32 %v1837, 1.442695
    %v1860 = vpow.pop %v1859
    %v1861 = vmul.f32 %v1838, 1.442695
    %v1862 = vpow.pop %v1861
    %v1863 = vmul.f32 %v1839, 1.442695
    %v1864 = vpow.pop %v1863
    %v1865 = vmul.f32 %v1840, 1.442695
    %v1866 = vpow.pop %v1865
    %v1867 = vmul.f32 %v1841, 1.442695
    %v1868 = vpow.pop %v1867
    %v1869 = vmul.f32 %v1842, 1.442695
    %v1870 = vpow.pop %v1869
    %v1871 = vmul.f32 %v1843, 1.442695
    %v1872 = vpow.pop %v1871
    %v1873 = vmul.f32 %v1844, 1.442695
    %v1874 = vpow.pop %v1873
    %v1875 = vmul.f32 %v1845, 1.442695
    %v1876 = vpow.pop %v1875
    %v1877 = vmul.f32 %v1846, 1.442695
    %v1878 = vpow.pop %v1877
    %v1879 = vsel %vm572, %v1848, 0.0
    %1880 = vadd.xlane.f32.xlu0 %v1879
    %v1881 = vpop.xlane.xlu0 %1880
    %v1882 = vsel %vm572, %v1850, 0.0
    %1883 = vadd.xlane.f32.xlu0 %v1882
    %v1884 = vpop.xlane.xlu0 %1883
    %v1885 = vsel %vm572, %v1852, 0.0
    %1886 = vadd.xlane.f32.xlu0 %v1885
    %v1887 = vpop.xlane.xlu0 %1886
    %v1888 = vsel %vm572, %v1854, 0.0
    %1889 = vadd.xlane.f32.xlu0 %v1888
    %v1890 = vpop.xlane.xlu0 %1889
    %v1891 = vsel %vm572, %v1856, 0.0
    %1892 = vadd.xlane.f32.xlu0 %v1891
    %v1893 = vpop.xlane.xlu0 %1892
    %v1894 = vsel %vm572, %v1858, 0.0
    %1895 = vadd.xlane.f32.xlu0 %v1894
    %v1896 = vpop.xlane.xlu0 %1895
    %v1897 = vsel %vm572, %v1860, 0.0
    %1898 = vadd.xlane.f32.xlu0 %v1897
    %v1899 = vpop.xlane.xlu0 %1898
    %v1900 = vsel %vm572, %v1862, 0.0
    %1901 = vadd.xlane.f32.xlu0 %v1900
    %v1902 = vpop.xlane.xlu0 %1901
    %v1903 = vsel %vm572, %v1864, 0.0
    %1904 = vadd.xlane.f32.xlu0 %v1903
    %v1905 = vpop.xlane.xlu0 %1904
    %v1906 = vsel %vm572, %v1866, 0.0
    %1907 = vadd.xlane.f32.xlu0 %v1906
    %v1908 = vpop.xlane.xlu0 %1907
    %v1909 = vsel %vm572, %v1868, 0.0
    %1910 = vadd.xlane.f32.xlu0 %v1909
    %v1911 = vpop.xlane.xlu0 %1910
    %v1912 = vsel %vm572, %v1870, 0.0
    %1913 = vadd.xlane.f32.xlu0 %v1912
    %v1914 = vpop.xlane.xlu0 %1913
    %v1915 = vsel %vm572, %v1872, 0.0
    %1916 = vadd.xlane.f32.xlu0 %v1915
    %v1917 = vpop.xlane.xlu0 %1916
    %v1918 = vsel %vm572, %v1874, 0.0
    %1919 = vadd.xlane.f32.xlu0 %v1918
    %v1920 = vpop.xlane.xlu0 %1919
    %v1921 = vsel %vm572, %v1876, 0.0
    %1922 = vadd.xlane.f32.xlu0 %v1921
    %v1923 = vpop.xlane.xlu0 %1922
    %v1924 = vsel %vm572, %v1878, 0.0
    %1925 = vadd.xlane.f32.xlu0 %v1924
    %v1926 = vpop.xlane.xlu0 %1925
    %v1927 = vrcp.pop %v1881
    %v1928 = vrcp.pop %v1884
    %v1929 = vrcp.pop %v1887
    %v1930 = vrcp.pop %v1890
    %v1931 = vrcp.pop %v1893
    %v1932 = vrcp.pop %v1896
    %v1933 = vrcp.pop %v1899
    %v1934 = vrcp.pop %v1902
    %v1935 = vrcp.pop %v1905
    %v1936 = vrcp.pop %v1908
    %v1937 = vrcp.pop %v1911
    %v1938 = vrcp.pop %v1914
    %v1939 = vrcp.pop %v1917
    %v1940 = vrcp.pop %v1920
    %v1941 = vrcp.pop %v1923
    %v1942 = vrcp.pop %v1926
    %v1943 = vmul.f32 %v1848, %v1927
    %v1944 = vmul.f32 %v1850, %v1928
    %v1945 = vmul.f32 %v1852, %v1929
    %v1946 = vmul.f32 %v1854, %v1930
    %v1947 = vmul.f32 %v1856, %v1931
    %v1948 = vmul.f32 %v1858, %v1932
    %v1949 = vmul.f32 %v1860, %v1933
    %v1950 = vmul.f32 %v1862, %v1934
    %v1951 = vmul.f32 %v1864, %v1935
    %v1952 = vmul.f32 %v1866, %v1936
    %v1953 = vmul.f32 %v1868, %v1937
    %v1954 = vmul.f32 %v1870, %v1938
    %v1955 = vmul.f32 %v1872, %v1939
    %v1956 = vmul.f32 %v1874, %v1940
    %v1957 = vmul.f32 %v1876, %v1941
    %v1958 = vmul.f32 %v1878, %v1942
    %v1959 = vpack.c.bf16 %v1943, %v1943
    %v1960 = vpack.c.bf16 %v1944, %v1944
    %v1961 = vpack.c.bf16 %v1945, %v1945
    %v1962 = vpack.c.bf16 %v1946, %v1946
    %v1963 = vpack.c.bf16 %v1947, %v1947
    %v1964 = vpack.c.bf16 %v1948, %v1948
    %v1965 = vpack.c.bf16 %v1949, %v1949
    %v1966 = vpack.c.bf16 %v1950, %v1950
    %v1967 = vpack.c.bf16 %v1951, %v1951
    %v1968 = vpack.c.bf16 %v1952, %v1952
    %v1969 = vpack.c.bf16 %v1953, %v1953
    %v1970 = vpack.c.bf16 %v1954, %v1954
    %v1971 = vpack.c.bf16 %v1955, %v1955
    %v1972 = vpack.c.bf16 %v1956, %v1956
    %v1973 = vpack.c.bf16 %v1957, %v1957
    %v1974 = vpack.c.bf16 %v1958, %v1958
    %v1977 = vunpack.c.l.b16 %v1959
    %v1978 = vunpack.c.l.b16 %v1960
    %v1979 = vpack.c.b16 %v1978, %v1977
    %1980 = vrot.lane.b32.xlu0 %v1569, 64
    %v1981 = vpop.permute.xlu0 %1980
    %v1984 = vsel %vm572, %v1979, 0
    %1986 = vmatpush.bf16.msra.mxu0 0
    %1987 = vmatpush.bf16.msra.mxu0 0
    %1988 = vmatpush.bf16.msra.mxu0 0
    %1989 = vmatpush.bf16.msra.mxu0 0
    %1990 = vmatpush.bf16.msra.mxu0 0
    %1991 = vmatpush.bf16.msra.mxu0 0
    %1992 = vmatpush.bf16.msra.mxu0 0
    %1993 = vmatpush.bf16.msra.mxu0 %v1981
    %1994 = vmatmul.bf16.gmra.mxu0 %v1984
    %v1995 = vpop.f32.mrf.mxu0
    %v1996 = vadd.f32 0.0, %v1995
    %v1997 = vpop.f32.mrf.mxu0
    %v1998 = vadd.f32 0.0, %v1997
    %1999 = vdwg.mxu0
    %v2002 = vunpack.c.l.b16 %v1961
    %v2003 = vunpack.c.l.b16 %v1962
    %v2004 = vpack.c.b16 %v2003, %v2002
    %2005 = vrot.lane.b32.xlu0 %v1594, 64
    %v2006 = vpop.permute.xlu0 %2005
    %v2009 = vsel %vm572, %v2004, 0
    %2011 = vmatpush.bf16.msra.mxu0 0
    %2012 = vmatpush.bf16.msra.mxu0 0
    %2013 = vmatpush.bf16.msra.mxu0 0
    %2014 = vmatpush.bf16.msra.mxu0 0
    %2015 = vmatpush.bf16.msra.mxu0 0
    %2016 = vmatpush.bf16.msra.mxu0 0
    %2017 = vmatpush.bf16.msra.mxu0 0
    %2018 = vmatpush.bf16.msra.mxu0 %v2006
    %2019 = vmatmul.bf16.gmra.mxu0 %v2009
    %v2020 = vpop.f32.mrf.mxu0
    %v2021 = vadd.f32 0.0, %v2020
    %v2022 = vpop.f32.mrf.mxu0
    %v2023 = vadd.f32 0.0, %v2022
    %2024 = vdwg.mxu0
    %v2027 = vunpack.c.l.b16 %v1963
    %v2028 = vunpack.c.l.b16 %v1964
    %v2029 = vpack.c.b16 %v2028, %v2027
    %2030 = vrot.lane.b32.xlu0 %v1619, 64
    %v2031 = vpop.permute.xlu0 %2030
    %v2034 = vsel %vm572, %v2029, 0
    %2036 = vmatpush.bf16.msra.mxu0 0
    %2037 = vmatpush.bf16.msra.mxu0 0
    %2038 = vmatpush.bf16.msra.mxu0 0
    %2039 = vmatpush.bf16.msra.mxu0 0
    %2040 = vmatpush.bf16.msra.mxu0 0
    %2041 = vmatpush.bf16.msra.mxu0 0
    %2042 = vmatpush.bf16.msra.mxu0 0
    %2043 = vmatpush.bf16.msra.mxu0 %v2031
    %2044 = vmatmul.bf16.gmra.mxu0 %v2034
    %v2045 = vpop.f32.mrf.mxu0
    %v2046 = vadd.f32 0.0, %v2045
    %v2047 = vpop.f32.mrf.mxu0
    %v2048 = vadd.f32 0.0, %v2047
    %2049 = vdwg.mxu0
    %v2052 = vunpack.c.l.b16 %v1965
    %v2053 = vunpack.c.l.b16 %v1966
    %v2054 = vpack.c.b16 %v2053, %v2052
    %2055 = vrot.lane.b32.xlu0 %v1644, 64
    %v2056 = vpop.permute.xlu0 %2055
    %v2059 = vsel %vm572, %v2054, 0
    %2061 = vmatpush.bf16.msra.mxu0 0
    %2062 = vmatpush.bf16.msra.mxu0 0
    %2063 = vmatpush.bf16.msra.mxu0 0
    %2064 = vmatpush.bf16.msra.mxu0 0
    %2065 = vmatpush.bf16.msra.mxu0 0
    %2066 = vmatpush.bf16.msra.mxu0 0
    %2067 = vmatpush.bf16.msra.mxu0 0
    %2068 = vmatpush.bf16.msra.mxu0 %v2056
    %2069 = vmatmul.bf16.gmra.mxu0 %v2059
    %v2070 = vpop.f32.mrf.mxu0
    %v2071 = vadd.f32 0.0, %v2070
    %v2072 = vpop.f32.mrf.mxu0
    %v2073 = vadd.f32 0.0, %v2072
    %2074 = vdwg.mxu0
    %v2077 = vunpack.c.l.b16 %v1967
    %v2078 = vunpack.c.l.b16 %v1968
    %v2079 = vpack.c.b16 %v2078, %v2077
    %2080 = vrot.lane.b32.xlu0 %v1669, 64
    %v2081 = vpop.permute.xlu0 %2080
    %v2084 = vsel %vm572, %v2079, 0
    %2086 = vmatpush.bf16.msra.mxu0 0
    %2087 = vmatpush.bf16.msra.mxu0 0
    %2088 = vmatpush.bf16.msra.mxu0 0
    %2089 = vmatpush.bf16.msra.mxu0 0
    %2090 = vmatpush.bf16.msra.mxu0 0
    %2091 = vmatpush.bf16.msra.mxu0 0
    %2092 = vmatpush.bf16.msra.mxu0 0
    %2093 = vmatpush.bf16.msra.mxu0 %v2081
    %2094 = vmatmul.bf16.gmra.mxu0 %v2084
    %v2095 = vpop.f32.mrf.mxu0
    %v2096 = vadd.f32 0.0, %v2095
    %v2097 = vpop.f32.mrf.mxu0
    %v2098 = vadd.f32 0.0, %v2097
    %2099 = vdwg.mxu0
    %v2102 = vunpack.c.l.b16 %v1969
    %v2103 = vunpack.c.l.b16 %v1970
    %v2104 = vpack.c.b16 %v2103, %v2102
    %2105 = vrot.lane.b32.xlu0 %v1694, 64
    %v2106 = vpop.permute.xlu0 %2105
    %v2109 = vsel %vm572, %v2104, 0
    %2111 = vmatpush.bf16.msra.mxu0 0
    %2112 = vmatpush.bf16.msra.mxu0 0
    %2113 = vmatpush.bf16.msra.mxu0 0
    %2114 = vmatpush.bf16.msra.mxu0 0
    %2115 = vmatpush.bf16.msra.mxu0 0
    %2116 = vmatpush.bf16.msra.mxu0 0
    %2117 = vmatpush.bf16.msra.mxu0 0
    %2118 = vmatpush.bf16.msra.mxu0 %v2106
    %2119 = vmatmul.bf16.gmra.mxu0 %v2109
    %v2120 = vpop.f32.mrf.mxu0
    %v2121 = vadd.f32 0.0, %v2120
    %v2122 = vpop.f32.mrf.mxu0
    %v2123 = vadd.f32 0.0, %v2122
    %2124 = vdwg.mxu0
    %v2127 = vunpack.c.l.b16 %v1971
    %v2128 = vunpack.c.l.b16 %v1972
    %v2129 = vpack.c.b16 %v2128, %v2127
    %2130 = vrot.lane.b32.xlu0 %v1719, 64
    %v2131 = vpop.permute.xlu0 %2130
    %v2134 = vsel %vm572, %v2129, 0
    %2136 = vmatpush.bf16.msra.mxu0 0
    %2137 = vmatpush.bf16.msra.mxu0 0
    %2138 = vmatpush.bf16.msra.mxu0 0
    %2139 = vmatpush.bf16.msra.mxu0 0
    %2140 = vmatpush.bf16.msra.mxu0 0
    %2141 = vmatpush.bf16.msra.mxu0 0
    %2142 = vmatpush.bf16.msra.mxu0 0
    %2143 = vmatpush.bf16.msra.mxu0 %v2131
    %2144 = vmatmul.bf16.gmra.mxu0 %v2134
    %v2145 = vpop.f32.mrf.mxu0
    %v2146 = vadd.f32 0.0, %v2145
    %v2147 = vpop.f32.mrf.mxu0
    %v2148 = vadd.f32 0.0, %v2147
    %2149 = vdwg.mxu0
    %v2152 = vunpack.c.l.b16 %v1973
    %v2153 = vunpack.c.l.b16 %v1974
    %v2154 = vpack.c.b16 %v2153, %v2152
    %2155 = vrot.lane.b32.xlu0 %v1744, 64
    %v2156 = vpop.permute.xlu0 %2155
    %v2159 = vsel %vm572, %v2154, 0
    %2161 = vmatpush.bf16.msra.mxu0 0
    %2162 = vmatpush.bf16.msra.mxu0 0
    %2163 = vmatpush.bf16.msra.mxu0 0
    %2164 = vmatpush.bf16.msra.mxu0 0
    %2165 = vmatpush.bf16.msra.mxu0 0
    %2166 = vmatpush.bf16.msra.mxu0 0
    %2167 = vmatpush.bf16.msra.mxu0 0
    %2168 = vmatpush.bf16.msra.mxu0 %v2156
    %2169 = vmatmul.bf16.gmra.mxu0 %v2159
    %v2170 = vpop.f32.mrf.mxu0
    %v2171 = vadd.f32 0.0, %v2170
    %v2172 = vpop.f32.mrf.mxu0
    %v2173 = vadd.f32 0.0, %v2172
    %2174 = vdwg.mxu0
    %v2175 = vpack.c.bf16 %v1996, %v1996
    %v2176 = vpack.c.bf16 %v1998, %v1998
    %v2177 = vpack.c.bf16 %v2021, %v2021
    %v2178 = vpack.c.bf16 %v2023, %v2023
    %v2179 = vpack.c.bf16 %v2046, %v2046
    %v2180 = vpack.c.bf16 %v2048, %v2048
    %v2181 = vpack.c.bf16 %v2071, %v2071
    %v2182 = vpack.c.bf16 %v2073, %v2073
    %v2183 = vpack.c.bf16 %v2096, %v2096
    %v2184 = vpack.c.bf16 %v2098, %v2098
    %v2185 = vpack.c.bf16 %v2121, %v2121
    %v2186 = vpack.c.bf16 %v2123, %v2123
    %v2187 = vpack.c.bf16 %v2146, %v2146
    %v2188 = vpack.c.bf16 %v2148, %v2148
    %v2189 = vpack.c.bf16 %v2171, %v2171
    %v2190 = vpack.c.bf16 %v2173, %v2173
    %s2191 = scalar_lea.vmem %s7, 16
    %v2192 = vld [vmem:[%s2191] sm:$0xf]
    %v2193 = vld [vmem:[%s2191 + $0x4] sm:$0xf]
    %v2194 = vld [vmem:[%s2191 + $0x8] sm:$0xf]
    %v2195 = vld [vmem:[%s2191 + $0xc] sm:$0xf]
    %v2200 = vunpack.c.l.b16 %v2179
    %v2201 = vunpack.c.l.b16 %v2180
    %v2202 = vunpack.c.l.b16 %v2181
    %v2203 = vunpack.c.l.b16 %v2182
    %v2204 = vpack.c.b16 %v2201, %v2200
    %v2205 = vpack.c.b16 %v2203, %v2202
    %v2207 = vsel %vm358, %v2204, 0
    %v2210 = vsel %vm358, %v2205, 0
    %v2213 = vsel %vm1001, %v2193, 0
    %2215 = vmatpush.bf16.msra.mxu0 0
    %2216 = vmatpush.bf16.msra.mxu0 0
    %2217 = vmatpush.bf16.msra.mxu0 0
    %2218 = vmatpush.bf16.msra.mxu0 0
    %2219 = vmatpush.bf16.msra.mxu0 0
    %2220 = vmatpush.bf16.msra.mxu0 0
    %2221 = vmatpush.bf16.msra.mxu0 0
    %2222 = vmatpush.bf16.msra.mxu0 %v2213
    %2223 = vmatmul.bf16.gmra.mxu0 %v2207
    %v2224 = vpop.f32.mrf.mxu0
    %v2225 = vadd.f32 0.0, %v2224
    %v2226 = vpop.f32.mrf.mxu0
    %v2227 = vadd.f32 0.0, %v2226
    %2228 = vmatmul.bf16.gmra.mxu0 %v2210
    %v2229 = vpop.f32.mrf.mxu0
    %v2230 = vadd.f32 0.0, %v2229
    %v2231 = vpop.f32.mrf.mxu0
    %v2232 = vadd.f32 0.0, %v2231
    %2233 = vdwg.mxu0
    %v2238 = vunpack.c.l.b16 %v2175
    %v2239 = vunpack.c.l.b16 %v2176
    %v2240 = vunpack.c.l.b16 %v2177
    %v2241 = vunpack.c.l.b16 %v2178
    %v2242 = vpack.c.b16 %v2239, %v2238
    %v2243 = vpack.c.b16 %v2241, %v2240
    %v2245 = vsel %vm358, %v2242, 0
    %v2248 = vsel %vm358, %v2243, 0
    %v2251 = vsel %vm1001, %v2192, 0
    %2253 = vmatpush.bf16.msra.mxu0 0
    %2254 = vmatpush.bf16.msra.mxu0 0
    %2255 = vmatpush.bf16.msra.mxu0 0
    %2256 = vmatpush.bf16.msra.mxu0 0
    %2257 = vmatpush.bf16.msra.mxu0 0
    %2258 = vmatpush.bf16.msra.mxu0 0
    %2259 = vmatpush.bf16.msra.mxu0 0
    %2260 = vmatpush.bf16.msra.mxu0 %v2251
    %2261 = vmatmul.bf16.gmra.mxu0 %v2245
    %v2262 = vpop.f32.mrf.mxu0
    %v2263 = vadd.f32 %v2225, %v2262
    %v2264 = vpop.f32.mrf.mxu0
    %v2265 = vadd.f32 %v2227, %v2264
    %2266 = vmatmul.bf16.gmra.mxu0 %v2248
    %v2267 = vpop.f32.mrf.mxu0
    %v2268 = vadd.f32 %v2230, %v2267
    %v2269 = vpop.f32.mrf.mxu0
    %v2270 = vadd.f32 %v2232, %v2269
    %2271 = vdwg.mxu0
    %v2276 = vunpack.c.l.b16 %v2183
    %v2277 = vunpack.c.l.b16 %v2184
    %v2278 = vunpack.c.l.b16 %v2185
    %v2279 = vunpack.c.l.b16 %v2186
    %v2280 = vpack.c.b16 %v2277, %v2276
    %v2281 = vpack.c.b16 %v2279, %v2278
    %v2283 = vsel %vm358, %v2280, 0
    %v2286 = vsel %vm358, %v2281, 0
    %v2289 = vsel %vm1001, %v2194, 0
    %2291 = vmatpush.bf16.msra.mxu0 0
    %2292 = vmatpush.bf16.msra.mxu0 0
    %2293 = vmatpush.bf16.msra.mxu0 0
    %2294 = vmatpush.bf16.msra.mxu0 0
    %2295 = vmatpush.bf16.msra.mxu0 0
    %2296 = vmatpush.bf16.msra.mxu0 0
    %2297 = vmatpush.bf16.msra.mxu0 0
    %2298 = vmatpush.bf16.msra.mxu0 %v2289
    %2299 = vmatmul.bf16.gmra.mxu0 %v2283
    %v2300 = vpop.f32.mrf.mxu0
    %v2301 = vadd.f32 0.0, %v2300
    %v2302 = vpop.f32.mrf.mxu0
    %v2303 = vadd.f32 0.0, %v2302
    %2304 = vmatmul.bf16.gmra.mxu0 %v2286
    %v2305 = vpop.f32.mrf.mxu0
    %v2306 = vadd.f32 0.0, %v2305
    %v2307 = vpop.f32.mrf.mxu0
    %v2308 = vadd.f32 0.0, %v2307
    %2309 = vdwg.mxu0
    %v2310 = vadd.f32 %v2263, %v2301
    %v2311 = vadd.f32 %v2265, %v2303
    %v2312 = vadd.f32 %v2268, %v2306
    %v2313 = vadd.f32 %v2270, %v2308
    %v2318 = vunpack.c.l.b16 %v2187
    %v2319 = vunpack.c.l.b16 %v2188
    %v2320 = vunpack.c.l.b16 %v2189
    %v2321 = vunpack.c.l.b16 %v2190
    %v2322 = vpack.c.b16 %v2319, %v2318
    %v2323 = vpack.c.b16 %v2321, %v2320
    %v2325 = vsel %vm358, %v2322, 0
    %v2328 = vsel %vm358, %v2323, 0
    %v2331 = vsel %vm1001, %v2195, 0
    %2333 = vmatpush.bf16.msra.mxu0 0
    %2334 = vmatpush.bf16.msra.mxu0 0
    %2335 = vmatpush.bf16.msra.mxu0 0
    %2336 = vmatpush.bf16.msra.mxu0 0
    %2337 = vmatpush.bf16.msra.mxu0 0
    %2338 = vmatpush.bf16.msra.mxu0 0
    %2339 = vmatpush.bf16.msra.mxu0 0
    %2340 = vmatpush.bf16.msra.mxu0 %v2331
    %2341 = vmatmul.bf16.gmra.mxu0 %v2325
    %v2342 = vpop.f32.mrf.mxu0
    %v2343 = vadd.f32 0.0, %v2342
    %v2344 = vpop.f32.mrf.mxu0
    %v2345 = vadd.f32 0.0, %v2344
    %2346 = vmatmul.bf16.gmra.mxu0 %v2328
    %v2347 = vpop.f32.mrf.mxu0
    %v2348 = vadd.f32 0.0, %v2347
    %v2349 = vpop.f32.mrf.mxu0
    %v2350 = vadd.f32 0.0, %v2349
    %2351 = vdwg.mxu0
    %v2352 = vadd.f32 %v2310, %v2343
    %v2353 = vadd.f32 %v2311, %v2345
    %v2354 = vadd.f32 %v2312, %v2348
    %v2355 = vadd.f32 %v2313, %v2350
    %v2356 = vadd.f32 %v1381, %v2352
    %v2357 = vadd.f32 %v1382, %v2353
    %v2358 = vadd.f32 %v1383, %v2354
    %v2359 = vadd.f32 %v1384, %v2355
    %s2360 = scalar_lea.vmem %s8, 1
    %v2361 = vld [vmem:[%s2360] sm:$0x1]
    %v2363 = vperm.slane %v2361, 0
    %v2365 = vadd.f32 %v2356, %v2363
    %v2366 = vadd.f32 %v2357, %v2363
    %v2367 = vadd.f32 %v2358, %v2363
    %v2368 = vadd.f32 %v2359, %v2363
    %s2369 = scalar_lea.vmem %s9, 1
    %v2370 = vld [vmem:[%s2369] sm:$0x1]
    %s2371 = scalar_lea.vmem %s10, 1
    %v2372 = vld [vmem:[%s2371] sm:$0x1]
    %v2373 = vsel %vm121, %v2365, 0.0
    %2374 = vadd.xlane.f32.xlu0 %v2373
    %v2375 = vpop.xlane.xlu0 %2374
    %v2376 = vsel %vm121, %v2366, 0.0
    %2377 = vadd.xlane.f32.xlu0 %v2376
    %v2378 = vpop.xlane.xlu0 %2377
    %v2379 = vsel %vm121, %v2367, 0.0
    %2380 = vadd.xlane.f32.xlu0 %v2379
    %v2381 = vpop.xlane.xlu0 %2380
    %v2382 = vsel %vm121, %v2368, 0.0
    %2383 = vadd.xlane.f32.xlu0 %v2382
    %v2384 = vpop.xlane.xlu0 %2383
    %v2385 = vmul.f32 %v2375, %v187
    %v2386 = vmul.f32 %v2378, %v187
    %v2387 = vmul.f32 %v2381, %v187
    %v2388 = vmul.f32 %v2384, %v187
    %v2389 = vsub.f32 %v2365, %v2385
    %v2390 = vsub.f32 %v2366, %v2386
    %v2391 = vsub.f32 %v2367, %v2387
    %v2392 = vsub.f32 %v2368, %v2388
    %v2393 = vmul.f32 %v2389, %v2389
    %v2394 = vmul.f32 %v2390, %v2390
    %v2395 = vmul.f32 %v2391, %v2391
    %v2396 = vmul.f32 %v2392, %v2392
    %v2397 = vsel %vm121, %v2393, 0.0
    %2398 = vadd.xlane.f32.xlu0 %v2397
    %v2399 = vpop.xlane.xlu0 %2398
    %v2400 = vsel %vm121, %v2394, 0.0
    %2401 = vadd.xlane.f32.xlu0 %v2400
    %v2402 = vpop.xlane.xlu0 %2401
    %v2403 = vsel %vm121, %v2395, 0.0
    %2404 = vadd.xlane.f32.xlu0 %v2403
    %v2405 = vpop.xlane.xlu0 %2404
    %v2406 = vsel %vm121, %v2396, 0.0
    %2407 = vadd.xlane.f32.xlu0 %v2406
    %v2408 = vpop.xlane.xlu0 %2407
    %v2409 = vmul.f32 %v2399, %v187
    %v2410 = vmul.f32 %v2402, %v187
    %v2411 = vmul.f32 %v2405, %v187
    %v2412 = vmul.f32 %v2408, %v187
    %v2413 = vadd.f32 %v2409, 1e-05
    %v2414 = vadd.f32 %v2410, 1e-05
    %v2415 = vadd.f32 %v2411, 1e-05
    %v2416 = vadd.f32 %v2412, 1e-05
    %v2417 = vrsqrt.pop %v2413
    %v2418 = vmul.f32 %v2417, %v2413
    %v2419 = vmul.f32 %v2418, %v2417
    %v2420 = vmul.f32 0.5, %v2419
    %v2421 = vsub.f32 1.5, %v2420
    %v2422 = vmul.f32 %v2417, %v2421
    %vm2423 = vweird.f32 %v2413
    %vm2424 = vweird.f32 %v2417
    %vm2425 = vmor %vm2423, %vm2424
    %v2426 = vsel %vm2425, %v2417, %v2422
    %v2427 = vrsqrt.pop %v2414
    %v2428 = vmul.f32 %v2427, %v2414
    %v2429 = vmul.f32 %v2428, %v2427
    %v2430 = vmul.f32 0.5, %v2429
    %v2431 = vsub.f32 1.5, %v2430
    %v2432 = vmul.f32 %v2427, %v2431
    %vm2433 = vweird.f32 %v2414
    %vm2434 = vweird.f32 %v2427
    %vm2435 = vmor %vm2433, %vm2434
    %v2436 = vsel %vm2435, %v2427, %v2432
    %v2437 = vrsqrt.pop %v2415
    %v2438 = vmul.f32 %v2437, %v2415
    %v2439 = vmul.f32 %v2438, %v2437
    %v2440 = vmul.f32 0.5, %v2439
    %v2441 = vsub.f32 1.5, %v2440
    %v2442 = vmul.f32 %v2437, %v2441
    %vm2443 = vweird.f32 %v2415
    %vm2444 = vweird.f32 %v2437
    %vm2445 = vmor %vm2443, %vm2444
    %v2446 = vsel %vm2445, %v2437, %v2442
    %v2447 = vrsqrt.pop %v2416
    %v2448 = vmul.f32 %v2447, %v2416
    %v2449 = vmul.f32 %v2448, %v2447
    %v2450 = vmul.f32 0.5, %v2449
    %v2451 = vsub.f32 1.5, %v2450
    %v2452 = vmul.f32 %v2447, %v2451
    %vm2453 = vweird.f32 %v2416
    %vm2454 = vweird.f32 %v2447
    %vm2455 = vmor %vm2453, %vm2454
    %v2456 = vsel %vm2455, %v2447, %v2452
    %v2457 = vmul.f32 %v2389, %v2426
    %v2458 = vmul.f32 %v2390, %v2436
    %v2459 = vmul.f32 %v2391, %v2446
    %v2460 = vmul.f32 %v2392, %v2456
    %v2462 = vperm.slane %v2370, 0
    %v2464 = vmul.f32 %v2457, %v2462
    %v2465 = vmul.f32 %v2458, %v2462
    %v2466 = vmul.f32 %v2459, %v2462
    %v2467 = vmul.f32 %v2460, %v2462
    %v2469 = vperm.slane %v2372, 0
    %v2471 = vadd.f32 %v2464, %v2469
    %v2472 = vadd.f32 %v2465, %v2469
    %v2473 = vadd.f32 %v2466, %v2469
    %v2474 = vadd.f32 %v2467, %v2469
    %v2475 = vpack.c.bf16 %v2472, %v2471
    %v2476 = vpack.c.bf16 %v2474, %v2473
    %s2477 = scalar_lea.vmem %s11, 16
    %v2478 = vld [vmem:[%s2477] sm:$0xf]
    %v2479 = vld [vmem:[%s2477 + $0x4] sm:$0xf]
    %v2480 = vld [vmem:[%s2477 + $0x8] sm:$0xf]
    %v2481 = vld [vmem:[%s2477 + $0xc] sm:$0xf]
    %s2482 = scalar_lea.vmem %s12, 1
    %v2483 = vld [vmem:[%s2482] sm:$0x1]
    %v2485 = vperm.slane %v2483, 0
    %v2491 = vunpack.c.l.b16 %v2478
    %v2492 = vunpack.c.l.b16 %v2479
    %v2493 = vunpack.c.l.b16 %v2480
    %v2494 = vunpack.c.l.b16 %v2481
    %v2495 = vpack.c.b16 %v2492, %v2491
    %v2496 = vpack.c.b16 %v2494, %v2493
    %v2500 = vsel %vm121, %v2475, 0
    %v2503 = vsel %vm121, %v2476, 0
    %2505 = vmatpush.bf16.msra.mxu0 0
    %2506 = vmatpush.bf16.msra.mxu0 0
    %2507 = vmatpush.bf16.msra.mxu0 0
    %2508 = vmatpush.bf16.msra.mxu0 0
    %2509 = vmatpush.bf16.msra.mxu0 0
    %2510 = vmatpush.bf16.msra.mxu0 0
    %2511 = vmatpush.bf16.msra.mxu0 %v2496
    %2512 = vmatpush.bf16.msra.mxu0 %v2495
    %2513 = vmatmul.bf16.gmra.mxu0 %v2500
    %v2514 = vpop.f32.mrf.mxu0
    %v2515 = vadd.f32 %v2485, %v2514
    %v2516 = vpop.f32.mrf.mxu0
    %v2517 = vadd.f32 %v2485, %v2516
    %2518 = vmatmul.bf16.gmra.mxu0 %v2503
    %v2519 = vpop.f32.mrf.mxu0
    %v2520 = vadd.f32 %v2485, %v2519
    %v2521 = vpop.f32.mrf.mxu0
    %v2522 = vadd.f32 %v2485, %v2521
    %2523 = vdwg.mxu0
    %v2524 = vmax.f32 %v2515, 0.0
    %v2525 = vmax.f32 %v2517, 0.0
    %v2526 = vmax.f32 %v2520, 0.0
    %v2527 = vmax.f32 %v2522, 0.0
    %v2528 = vpack.c.bf16 %v2525, %v2524
    %v2529 = vpack.c.bf16 %v2527, %v2526
    %s2530 = scalar_lea.vmem %s13, 32
    %v2531 = vld [vmem:[%s2530] sm:$0xf]
    %v2532 = vld [vmem:[%s2530 + $0x4] sm:$0xf]
    %v2533 = vld [vmem:[%s2530 + $0x8] sm:$0xf]
    %v2534 = vld [vmem:[%s2530 + $0xc] sm:$0xf]
    %v2535 = vld [vmem:[%s2530 + $0x10] sm:$0xf]
    %v2536 = vld [vmem:[%s2530 + $0x14] sm:$0xf]
    %v2537 = vld [vmem:[%s2530 + $0x18] sm:$0xf]
    %v2538 = vld [vmem:[%s2530 + $0x1c] sm:$0xf]
    %v2547 = vunpack.c.l.b16 %v2531
    %v2548 = vunpack.c.l.b16 %v2532
    %v2549 = vunpack.c.l.b16 %v2533
    %v2550 = vunpack.c.l.b16 %v2534
    %v2551 = vunpack.c.l.b16 %v2535
    %v2552 = vunpack.c.l.b16 %v2536
    %v2553 = vunpack.c.l.b16 %v2537
    %v2554 = vunpack.c.l.b16 %v2538
    %v2555 = vpack.c.b16 %v2548, %v2547
    %v2556 = vpack.c.b16 %v2550, %v2549
    %v2557 = vpack.c.b16 %v2552, %v2551
    %v2558 = vpack.c.b16 %v2554, %v2553
    %v2564 = vsel %vm1347, %v2528, 0
    %v2567 = vsel %vm1347, %v2529, 0
    %2569 = vmatpush.bf16.msra.mxu0 0
    %2570 = vmatpush.bf16.msra.mxu0 0
    %2571 = vmatpush.bf16.msra.mxu0 0
    %2572 = vmatpush.bf16.msra.mxu0 0
    %2573 = vmatpush.bf16.msra.mxu0 %v2558
    %2574 = vmatpush.bf16.msra.mxu0 %v2557
    %2575 = vmatpush.bf16.msra.mxu0 %v2556
    %2576 = vmatpush.bf16.msra.mxu0 %v2555
    %2577 = vmatmul.bf16.gmra.mxu0 %v2564
    %v2578 = vpop.f32.mrf.mxu0
    %v2579 = vadd.f32 0.0, %v2578
    %v2580 = vpop.f32.mrf.mxu0
    %2581 = vmatmul.bf16.gmra.mxu0 %v2567
    %v2582 = vpop.f32.mrf.mxu0
    %v2583 = vadd.f32 0.0, %v2582
    %v2584 = vpop.f32.mrf.mxu0
    %2585 = vdwg.mxu0
    %v2586 = vadd.f32 %v2365, %v2579
    %v2587 = vadd.f32 %v2367, %v2583
    %s2588 = scalar_lea.vmem [#allocation7], 1
    %v2589 = vld [vmem:[%s2588] sm:$0x1]
    %v2591 = vperm.slane %v2589, 0
    %v2593 = vadd.f32 %v2586, %v2591
    %v2594 = vadd.f32 %v2587, %v2591
    %v2596 = vrot.slane %v2594, 7
    %vm2598 = vcmask 1040384
    %v2599 = vsel %vm2598, %v2593, %v2596
    %vm2600 = vcmask 254976
    %2601 = vst.msk [vmem:[#allocation8] sm:$0x3] %vm2600, %v2599
    // Predicated region
    $region74: #{seq_transformer_forward.1} parent=1 // pred_check
      _
    $region75: #{seq_transformer_forward.1} parent=1 // pred_check_branch
      %2603 = sbr.rel (0) target = $region77
    $region76: #{seq_transformer_forward.1} parent=1 // pred_region
      %2605 = vsyncadd [#allocation4], 0
      %s2607 = sshll.u32 [#allocation8], 4
      %s2608 = int_to_ptr.vmem [resolvable:$true] %s2607
      %s2609 = sshll.u32 %s15, 4
      %s2610 = int_to_ptr.hbm [resolvable:$true] %s2609
      %2612 = dma.vmem_to_hbm [thread:$0]  %s2608, 32, %s2610, [#allocation4]
    $region77: #{seq_transformer_forward.1} parent=1 // pred_fallthru
      _
    // Predicated region
    $region78: #{seq_transformer_forward.1} parent=1 // pred_check
      _
    $region79: #{seq_transformer_forward.1} parent=1 // pred_check_branch
      %2614 = sbr.rel (0) target = $region81
    $region80: #{seq_transformer_forward.1} parent=1 // pred_region
      %2616 = dma.done [#allocation4], 32
    $region81: #{seq_transformer_forward.1} parent=1 // pred_fallthru
      _
    %2617 = vsyncpa [#allocation3], 1
    %2618 = vsyncpa [#allocation6], 1
    %2619 = vsyncpa [#allocation4], 1

</llo_original>
